<compile_context>
chip_gen: v7x
topology: tpu7x:2x2x1
jax: 0.10.0
libtpu: 0.0.40
codegen_flags: <defaults>
</compile_context>

<pallas_src>
import math

import jax
import jax.numpy as jnp
from jax.experimental import pallas as pl
from jax.experimental.pallas import tpu as pltpu

# ---- small synthetic DistilBERT config -------------------------------------
B = 2            # batch
S = 8            # sequence length
H = 32           # hidden size (== h1 of the classifier head)
N_HEADS = 4
HEAD_DIM = H // N_HEADS
FFN = 64         # intermediate FFN size
N_LAYERS = 2     # (real distilbert has 6; kept small for the synthetic kernel)
VOCAB = 100
MAX_POS = 16
H2 = 16          # h2
CLASS_NUM = 3
LN_EPS = 1e-12

MM_DTYPE = jnp.bfloat16   # MXU input dtype; accumulation stays f32


# ---- helpers used inside the kernel -----------------------------------------
def _layernorm(x, g, b):
    mu = jnp.mean(x, axis=-1, keepdims=True)
    var = jnp.mean((x - mu) ** 2, axis=-1, keepdims=True)
    return (x - mu) * jax.lax.rsqrt(var + LN_EPS) * g + b


def _gelu(x):
    # TODO(synk): HF DistilBERT uses exact (erf) GELU; tanh approximation used here.
    c = math.sqrt(2.0 / math.pi)
    return 0.5 * x * (1.0 + jnp.tanh(c * (x + 0.044715 * x * x * x)))


def _mm(a, w):
    # bf16 x bf16 matmul on the MXU, f32 accumulation.
    return jnp.dot(a.astype(MM_DTYPE), w.astype(MM_DTYPE),
                   preferred_element_type=jnp.float32)


# ---- single fused Pallas kernel (one grid step == one batch element) ---------
def fused_forward_kernel(emb_ref, bias_ref,
                         emb_g_ref, emb_b_ref,
                         wq_ref, bq_ref, wk_ref, bk_ref, wv_ref, bv_ref,
                         wo_ref, bo_ref, g1_ref, b1_ref,
                         wf1_ref, bf1_ref, wf2_ref, bf2_ref, g2_ref, b2_ref,
                         w1_ref, b1h_ref, w2_ref, b2h_ref,
                         o_ref):
    # Embedding LayerNorm (dropout = identity).
    x = _layernorm(emb_ref[0], emb_g_ref[...], emb_b_ref[...])      # (S, H) f32
    neg = bias_ref[0]                                               # (1, S) additive key mask
    scale = 1.0 / math.sqrt(HEAD_DIM)

    def layer(l, x):
        # --- multi-head self-attention -------------------------------------
        q = _mm(x, wq_ref[l]) + bq_ref[l]                           # (S, H)
        k = _mm(x, wk_ref[l]) + bk_ref[l]
        v = _mm(x, wv_ref[l]) + bv_ref[l]

        kT = k.T                                                    # one transpose per layer
        qb = q.astype(MM_DTYPE)
        kTb = kT.astype(MM_DTYPE)
        vb = v.astype(MM_DTYPE)

        # Per-head score blocks stacked on the sublane axis -> one softmax for all heads.
        s_blocks = []
        for h in range(N_HEADS):                                    # static, tiny
            lo = h * HEAD_DIM
            s_blocks.append(jnp.dot(qb[:, lo:lo + HEAD_DIM], kTb[lo:lo + HEAD_DIM, :],
                                    preferred_element_type=jnp.float32))
        s = jnp.concatenate(s_blocks, axis=0) * scale + neg         # (N_HEADS*S, S)
        s = s - jnp.max(s, axis=-1, keepdims=True)
        p = jnp.exp(s)
        p = p / jnp.sum(p, axis=-1, keepdims=True)
        pb = p.astype(MM_DTYPE)

        # Contexts concatenated back along lanes -> single output projection.
        ctx_blocks = []
        for h in range(N_HEADS):
            lo = h * HEAD_DIM
            ctx_blocks.append(jnp.dot(pb[h * S:(h + 1) * S, :], vb[:, lo:lo + HEAD_DIM],
                                      preferred_element_type=jnp.float32))
        ctx = jnp.concatenate(ctx_blocks, axis=1)                   # (S, H) f32
        attn_out = _mm(ctx, wo_ref[l]) + bo_ref[l]

        h1 = _layernorm(x + attn_out, g1_ref[l], b1_ref[l])         # sa_layer_norm

        # --- feed-forward ----------------------------------------------------
        ff = _gelu(_mm(h1, wf1_ref[l]) + bf1_ref[l])
        ff = _mm(ff, wf2_ref[l]) + bf2_ref[l]
        return _layernorm(h1 + ff, g2_ref[l], b2_ref[l])            # output_layer_norm

    x = jax.lax.fori_loop(0, N_LAYERS, layer, x, unroll=True)

    # --- classifier head on the CLS token (dropout = identity) ---------------
    pooled = x[0:1, :]                                              # (1, H)
    hcls = jnp.maximum(_mm(pooled, w1_ref[...]) + b1h_ref[...], 0.0)
    logits = _mm(hcls, w2_ref[...]) + b2h_ref[...]                  # (1, CLASS_NUM)
    o_ref[0] = 1.0 / (1.0 + jnp.exp(-logits))


# ---- pallas_call wrapper ------------------------------------------------------
def _fused_forward(emb, attn_bias, params):
    L = params['layers']
    w_hh = pl.BlockSpec((N_LAYERS, H, H), lambda b: (0, 0, 0))
    b_h = pl.BlockSpec((N_LAYERS, 1, H), lambda b: (0, 0, 0))
    in_specs = [
        pl.BlockSpec((1, S, H), lambda b: (b, 0, 0)),               # emb
        pl.BlockSpec((1, 1, S), lambda b: (b, 0, 0)),               # additive attn bias
        pl.BlockSpec((1, H), lambda b: (0, 0)),                     # emb LN gamma
        pl.BlockSpec((1, H), lambda b: (0, 0)),                     # emb LN beta
        w_hh, b_h,                                                  # Wq, bq
        w_hh, b_h,                                                  # Wk, bk
        w_hh, b_h,                                                  # Wv, bv
        w_hh, b_h,                                                  # Wo, bo
        b_h, b_h,                                                   # sa_layer_norm gamma, beta
        pl.BlockSpec((N_LAYERS, H, FFN), lambda b: (0, 0, 0)),      # W_ff1
        pl.BlockSpec((N_LAYERS, 1, FFN), lambda b: (0, 0, 0)),      # b_ff1
        pl.BlockSpec((N_LAYERS, FFN, H), lambda b: (0, 0, 0)),      # W_ff2
        b_h,                                                        # b_ff2
        b_h, b_h,                                                   # output_layer_norm gamma, beta
        pl.BlockSpec((H, H2), lambda b: (0, 0)),                    # head W1
        pl.BlockSpec((1, H2), lambda b: (0, 0)),                    # head b1
        pl.BlockSpec((H2, CLASS_NUM), lambda b: (0, 0)),            # head W2
        pl.BlockSpec((1, CLASS_NUM), lambda b: (0, 0)),             # head b2
    ]
    out = pl.pallas_call(
        fused_forward_kernel,
        grid=(B,),
        in_specs=in_specs,
        out_specs=pl.BlockSpec((1, 1, CLASS_NUM), lambda b: (b, 0, 0)),
        out_shape=jax.ShapeDtypeStruct((B, 1, CLASS_NUM), jnp.float32),
        compiler_params=pltpu.CompilerParams(dimension_semantics=("parallel",)),
    )(emb, attn_bias, params['emb_g'], params['emb_b'],
      L['wq'], L['bq'], L['wk'], L['bk'], L['wv'], L['bv'],
      L['wo'], L['bo'], L['g1'], L['b1'],
      L['wf1'], L['bf1'], L['wf2'], L['bf2'], L['g2'], L['b2'],
      params['w1'], params['b1'], params['w2'], params['b2'])
    return out[:, 0, :]                                             # (B, CLASS_NUM)


# ---- parameter init (deterministic, synthetic; weights stacked per layer) -----
def init_params(key):
    def nrm(k, shape, scale=0.02, dtype=jnp.float32):
        return (scale * jax.random.normal(k, shape)).astype(dtype)

    keys = iter(jax.random.split(key, 16))
    params = {
        'word_emb': nrm(next(keys), (VOCAB, H)),
        'pos_emb': nrm(next(keys), (MAX_POS, H)),
        'emb_g': jnp.ones((1, H), jnp.float32),
        'emb_b': jnp.zeros((1, H), jnp.float32),
        'w1': nrm(next(keys), (H, H2), dtype=MM_DTYPE),
        'b1': jnp.zeros((1, H2), jnp.float32),
        'w2': nrm(next(keys), (H2, CLASS_NUM), dtype=MM_DTYPE),
        'b2': jnp.zeros((1, CLASS_NUM), jnp.float32),
        'layers': {
            'wq': nrm(next(keys), (N_LAYERS, H, H), dtype=MM_DTYPE),
            'bq': jnp.zeros((N_LAYERS, 1, H), jnp.float32),
            'wk': nrm(next(keys), (N_LAYERS, H, H), dtype=MM_DTYPE),
            'bk': jnp.zeros((N_LAYERS, 1, H), jnp.float32),
            'wv': nrm(next(keys), (N_LAYERS, H, H), dtype=MM_DTYPE),
            'bv': jnp.zeros((N_LAYERS, 1, H), jnp.float32),
            'wo': nrm(next(keys), (N_LAYERS, H, H), dtype=MM_DTYPE),
            'bo': jnp.zeros((N_LAYERS, 1, H), jnp.float32),
            'g1': jnp.ones((N_LAYERS, 1, H), jnp.float32),
            'b1': jnp.zeros((N_LAYERS, 1, H), jnp.float32),
            'wf1': nrm(next(keys), (N_LAYERS, H, FFN), dtype=MM_DTYPE),
            'bf1': jnp.zeros((N_LAYERS, 1, FFN), jnp.float32),
            'wf2': nrm(next(keys), (N_LAYERS, FFN, H), dtype=MM_DTYPE),
            'bf2': jnp.zeros((N_LAYERS, 1, H), jnp.float32),
            'g2': jnp.ones((N_LAYERS, 1, H), jnp.float32),
            'b2': jnp.zeros((N_LAYERS, 1, H), jnp.float32),
        },
    }
    return params


# ---- forward pass --------------------------------------------------------------
@jax.jit
def forward(tokens, masks, params):
    # DistilBert embeddings: word + position (gather is plain-JAX glue).
    pos_ids = jnp.arange(S)
    emb = params['word_emb'][tokens] + params['pos_emb'][pos_ids][None, :, :]
    emb = emb.astype(jnp.float32)                                   # (B, S, H)
    # Additive attention bias: 0 for kept keys, -1e9 for padded keys.
    attn_bias = ((1.0 - masks.astype(jnp.float32)) * (-1e9))[:, None, :]   # (B, 1, S)
    return _fused_forward(emb, attn_bias, params)


if __name__ == "__main__":
    root = jax.random.PRNGKey(0)
    k_tok, k_param = jax.random.split(root)

    tokens = jax.random.randint(k_tok, (B, S), 0, VOCAB, dtype=jnp.int32)
    masks = jnp.ones((B, S), jnp.int32).at[1, 6:].set(0)            # pad last 2 tokens of item 1

    params = init_params(k_param)
    proba = forward(tokens, masks, params)
    proba = jax.block_until_ready(proba)

    assert proba.shape == (B, CLASS_NUM)
    assert bool(jnp.all(jnp.isfinite(proba)))
    print("KERNEL_OK")
</pallas_src>

<mosaic_0001>
module attributes {stable_mosaic.version = 11 : i64} {
  func.func @fused_forward_kernel(%arg0: i32, %arg1: memref<1x8x32xf32, #tpu.memory_space<vmem>>, %arg2: memref<1x1x8xf32, #tpu.memory_space<vmem>>, %arg3: memref<1x32xf32, #tpu.memory_space<vmem>>, %arg4: memref<1x32xf32, #tpu.memory_space<vmem>>, %arg5: memref<2x32x32xbf16, #tpu.memory_space<vmem>>, %arg6: memref<2x1x32xf32, #tpu.memory_space<vmem>>, %arg7: memref<2x32x32xbf16, #tpu.memory_space<vmem>>, %arg8: memref<2x1x32xf32, #tpu.memory_space<vmem>>, %arg9: memref<2x32x32xbf16, #tpu.memory_space<vmem>>, %arg10: memref<2x1x32xf32, #tpu.memory_space<vmem>>, %arg11: memref<2x32x32xbf16, #tpu.memory_space<vmem>>, %arg12: memref<2x1x32xf32, #tpu.memory_space<vmem>>, %arg13: memref<2x1x32xf32, #tpu.memory_space<vmem>>, %arg14: memref<2x1x32xf32, #tpu.memory_space<vmem>>, %arg15: memref<2x32x64xbf16, #tpu.memory_space<vmem>>, %arg16: memref<2x1x64xf32, #tpu.memory_space<vmem>>, %arg17: memref<2x64x32xbf16, #tpu.memory_space<vmem>>, %arg18: memref<2x1x32xf32, #tpu.memory_space<vmem>>, %arg19: memref<2x1x32xf32, #tpu.memory_space<vmem>>, %arg20: memref<2x1x32xf32, #tpu.memory_space<vmem>>, %arg21: memref<32x16xbf16, #tpu.memory_space<vmem>>, %arg22: memref<1x16xf32, #tpu.memory_space<vmem>>, %arg23: memref<16x3xbf16, #tpu.memory_space<vmem>>, %arg24: memref<1x3xf32, #tpu.memory_space<vmem>>, %arg25: memref<1x1x3xf32, #tpu.memory_space<vmem>>) attributes {dimension_semantics = [#tpu.dimension_semantics<parallel>], iteration_bounds = array<i64: 2>, scalar_prefetch = 0 : i64, scratch_operands = 0 : i64, tpu.core_type = #tpu.core_type<tc>, window_params = [{transform_indices = @transform_0, window_bounds = array<i64: 1, 8, 32>}, {transform_indices = @transform_1, window_bounds = array<i64: 1, 1, 8>}, {pipeline_mode = #tpu.pipeline_mode<synchronous>, transform_indices = @transform_2, window_bounds = array<i64: 1, 32>}, {pipeline_mode = #tpu.pipeline_mode<synchronous>, transform_indices = @transform_3, window_bounds = array<i64: 1, 32>}, {pipeline_mode = #tpu.pipeline_mode<synchronous>, transform_indices = @transform_4, window_bounds = array<i64: 2, 32, 32>}, {pipeline_mode = #tpu.pipeline_mode<synchronous>, transform_indices = @transform_5, window_bounds = array<i64: 2, 1, 32>}, {pipeline_mode = #tpu.pipeline_mode<synchronous>, transform_indices = @transform_6, window_bounds = array<i64: 2, 32, 32>}, {pipeline_mode = #tpu.pipeline_mode<synchronous>, transform_indices = @transform_7, window_bounds = array<i64: 2, 1, 32>}, {pipeline_mode = #tpu.pipeline_mode<synchronous>, transform_indices = @transform_8, window_bounds = array<i64: 2, 32, 32>}, {pipeline_mode = #tpu.pipeline_mode<synchronous>, transform_indices = @transform_9, window_bounds = array<i64: 2, 1, 32>}, {pipeline_mode = #tpu.pipeline_mode<synchronous>, transform_indices = @transform_10, window_bounds = array<i64: 2, 32, 32>}, {pipeline_mode = #tpu.pipeline_mode<synchronous>, transform_indices = @transform_11, window_bounds = array<i64: 2, 1, 32>}, {pipeline_mode = #tpu.pipeline_mode<synchronous>, transform_indices = @transform_12, window_bounds = array<i64: 2, 1, 32>}, {pipeline_mode = #tpu.pipeline_mode<synchronous>, transform_indices = @transform_13, window_bounds = array<i64: 2, 1, 32>}, {pipeline_mode = #tpu.pipeline_mode<synchronous>, transform_indices = @transform_14, window_bounds = array<i64: 2, 32, 64>}, {pipeline_mode = #tpu.pipeline_mode<synchronous>, transform_indices = @transform_15, window_bounds = array<i64: 2, 1, 64>}, {pipeline_mode = #tpu.pipeline_mode<synchronous>, transform_indices = @transform_16, window_bounds = array<i64: 2, 64, 32>}, {pipeline_mode = #tpu.pipeline_mode<synchronous>, transform_indices = @transform_17, window_bounds = array<i64: 2, 1, 32>}, {pipeline_mode = #tpu.pipeline_mode<synchronous>, transform_indices = @transform_18, window_bounds = array<i64: 2, 1, 32>}, {pipeline_mode = #tpu.pipeline_mode<synchronous>, transform_indices = @transform_19, window_bounds = array<i64: 2, 1, 32>}, {pipeline_mode = #tpu.pipeline_mode<synchronous>, transform_indices = @transform_20, window_bounds = array<i64: 32, 16>}, {pipeline_mode = #tpu.pipeline_mode<synchronous>, transform_indices = @transform_21, window_bounds = array<i64: 1, 16>}, {pipeline_mode = #tpu.pipeline_mode<synchronous>, transform_indices = @transform_22, window_bounds = array<i64: 16, 3>}, {pipeline_mode = #tpu.pipeline_mode<synchronous>, transform_indices = @transform_23, window_bounds = array<i64: 1, 3>}, {transform_indices = @transform_24, window_bounds = array<i64: 1, 1, 3>}]} {
    %c0 = arith.constant 0 : index
    %c0_0 = arith.constant 0 : index
    %c0_1 = arith.constant 0 : index
    %0 = vector.load %arg1[%c0, %c0_0, %c0_1] : memref<1x8x32xf32, #tpu.memory_space<vmem>>, vector<1x8x32xf32>
    %1 = vector.shape_cast %0 : vector<1x8x32xf32> to vector<8x32xf32>
    %c0_2 = arith.constant 0 : index
    %c0_3 = arith.constant 0 : index
    %2 = vector.load %arg3[%c0_2, %c0_3] : memref<1x32xf32, #tpu.memory_space<vmem>>, vector<1x32xf32>
    %c0_4 = arith.constant 0 : index
    %c0_5 = arith.constant 0 : index
    %3 = vector.load %arg4[%c0_4, %c0_5] : memref<1x32xf32, #tpu.memory_space<vmem>>, vector<1x32xf32>
    %cst = arith.constant dense<0.000000e+00> : vector<8xf32>
    %4 = vector.multi_reduction <add>, %1, %cst [1] : vector<8x32xf32> to vector<8xf32>
    %5 = vector.shape_cast %4 : vector<8xf32> to vector<8x1xf32>
    %cst_6 = arith.constant 3.200000e+01 : f32
    %6 = vector.broadcast %cst_6 : f32 to vector<8x1xf32>
    %7 = arith.divf %5, %6 : vector<8x1xf32>
    %8 = vector.broadcast %7 : vector<8x1xf32> to vector<8x32xf32>
    %9 = arith.subf %1, %8 : vector<8x32xf32>
    %10 = arith.mulf %9, %9 : vector<8x32xf32>
    %cst_7 = arith.constant dense<0.000000e+00> : vector<8xf32>
    %11 = vector.multi_reduction <add>, %10, %cst_7 [1] : vector<8x32xf32> to vector<8xf32>
    %12 = vector.shape_cast %11 : vector<8xf32> to vector<8x1xf32>
    %cst_8 = arith.constant 3.200000e+01 : f32
    %13 = vector.broadcast %cst_8 : f32 to vector<8x1xf32>
    %14 = arith.divf %12, %13 : vector<8x1xf32>
    %15 = vector.broadcast %7 : vector<8x1xf32> to vector<8x32xf32>
    %16 = arith.subf %1, %15 : vector<8x32xf32>
    %cst_9 = arith.constant 9.99999996E-13 : f32
    %17 = vector.broadcast %cst_9 : f32 to vector<8x1xf32>
    %18 = arith.addf %14, %17 : vector<8x1xf32>
    %19 = math.rsqrt %18 : vector<8x1xf32>
    %20 = vector.broadcast %19 : vector<8x1xf32> to vector<8x32xf32>
    %21 = arith.mulf %16, %20 : vector<8x32xf32>
    %22 = vector.broadcast %2 : vector<1x32xf32> to vector<8x32xf32>
    %23 = arith.mulf %21, %22 : vector<8x32xf32>
    %24 = vector.broadcast %3 : vector<1x32xf32> to vector<8x32xf32>
    %25 = arith.addf %23, %24 : vector<8x32xf32>
    %c0_10 = arith.constant 0 : index
    %c0_11 = arith.constant 0 : index
    %c0_12 = arith.constant 0 : index
    %26 = vector.load %arg2[%c0_10, %c0_11, %c0_12] : memref<1x1x8xf32, #tpu.memory_space<vmem>>, vector<1x1x8xf32>
    %27 = vector.shape_cast %26 : vector<1x1x8xf32> to vector<1x8xf32>
    %c0_i32 = arith.constant 0 : i32
    %28 = arith.index_cast %c0_i32 : i32 to index
    %c0_13 = arith.constant 0 : index
    %c0_14 = arith.constant 0 : index
    %29 = vector.load %arg5[%28, %c0_13, %c0_14] : memref<2x32x32xbf16, #tpu.memory_space<vmem>>, vector<1x32x32xbf16>
    %30 = vector.shape_cast %29 : vector<1x32x32xbf16> to vector<32x32xbf16>
    %31 = arith.truncf %25 : vector<8x32xf32> to vector<8x32xbf16>
    %cst_15 = arith.constant dense<0.000000e+00> : vector<8x32xf32>
    %32 = tpu.matmul %31, %30, %cst_15 {dimension_numbers = #tpu.dot_dimension_numbers<[1], [0], [0], [1], [0, 0, 1, 1], [], []>} : vector<8x32xbf16>, vector<32x32xbf16>, vector<8x32xf32> -> vector<8x32xf32>
    %33 = arith.index_cast %c0_i32 : i32 to index
    %c0_16 = arith.constant 0 : index
    %c0_17 = arith.constant 0 : index
    %34 = vector.load %arg6[%33, %c0_16, %c0_17] : memref<2x1x32xf32, #tpu.memory_space<vmem>>, vector<1x1x32xf32>
    %35 = vector.shape_cast %34 : vector<1x1x32xf32> to vector<1x32xf32>
    %36 = vector.broadcast %35 : vector<1x32xf32> to vector<8x32xf32>
    %37 = arith.addf %32, %36 : vector<8x32xf32>
    %38 = arith.index_cast %c0_i32 : i32 to index
    %c0_18 = arith.constant 0 : index
    %c0_19 = arith.constant 0 : index
    %39 = vector.load %arg7[%38, %c0_18, %c0_19] : memref<2x32x32xbf16, #tpu.memory_space<vmem>>, vector<1x32x32xbf16>
    %40 = vector.shape_cast %39 : vector<1x32x32xbf16> to vector<32x32xbf16>
    %41 = arith.truncf %25 : vector<8x32xf32> to vector<8x32xbf16>
    %cst_20 = arith.constant dense<0.000000e+00> : vector<8x32xf32>
    %42 = tpu.matmul %41, %40, %cst_20 {dimension_numbers = #tpu.dot_dimension_numbers<[1], [0], [0], [1], [0, 0, 1, 1], [], []>} : vector<8x32xbf16>, vector<32x32xbf16>, vector<8x32xf32> -> vector<8x32xf32>
    %43 = arith.index_cast %c0_i32 : i32 to index
    %c0_21 = arith.constant 0 : index
    %c0_22 = arith.constant 0 : index
    %44 = vector.load %arg8[%43, %c0_21, %c0_22] : memref<2x1x32xf32, #tpu.memory_space<vmem>>, vector<1x1x32xf32>
    %45 = vector.shape_cast %44 : vector<1x1x32xf32> to vector<1x32xf32>
    %46 = vector.broadcast %45 : vector<1x32xf32> to vector<8x32xf32>
    %47 = arith.addf %42, %46 : vector<8x32xf32>
    %48 = arith.index_cast %c0_i32 : i32 to index
    %c0_23 = arith.constant 0 : index
    %c0_24 = arith.constant 0 : index
    %49 = vector.load %arg9[%48, %c0_23, %c0_24] : memref<2x32x32xbf16, #tpu.memory_space<vmem>>, vector<1x32x32xbf16>
    %50 = vector.shape_cast %49 : vector<1x32x32xbf16> to vector<32x32xbf16>
    %51 = arith.truncf %25 : vector<8x32xf32> to vector<8x32xbf16>
    %cst_25 = arith.constant dense<0.000000e+00> : vector<8x32xf32>
    %52 = tpu.matmul %51, %50, %cst_25 {dimension_numbers = #tpu.dot_dimension_numbers<[1], [0], [0], [1], [0, 0, 1, 1], [], []>} : vector<8x32xbf16>, vector<32x32xbf16>, vector<8x32xf32> -> vector<8x32xf32>
    %53 = arith.index_cast %c0_i32 : i32 to index
    %c0_26 = arith.constant 0 : index
    %c0_27 = arith.constant 0 : index
    %54 = vector.load %arg10[%53, %c0_26, %c0_27] : memref<2x1x32xf32, #tpu.memory_space<vmem>>, vector<1x1x32xf32>
    %55 = vector.shape_cast %54 : vector<1x1x32xf32> to vector<1x32xf32>
    %56 = vector.broadcast %55 : vector<1x32xf32> to vector<8x32xf32>
    %57 = arith.addf %52, %56 : vector<8x32xf32>
    %58 = tpu.transpose %47, [1, 0] : vector<8x32xf32> -> vector<32x8xf32>
    %59 = arith.truncf %37 : vector<8x32xf32> to vector<8x32xbf16>
    %60 = arith.truncf %58 : vector<32x8xf32> to vector<32x8xbf16>
    %61 = arith.truncf %57 : vector<8x32xf32> to vector<8x32xbf16>
    %62 = vector.extract_strided_slice %59 {offsets = [0, 0], sizes = [8, 8], strides = [1, 1]} : vector<8x32xbf16> to vector<8x8xbf16>
    %63 = vector.extract_strided_slice %60 {offsets = [0, 0], sizes = [8, 8], strides = [1, 1]} : vector<32x8xbf16> to vector<8x8xbf16>
    %cst_28 = arith.constant dense<0.000000e+00> : vector<8x8xf32>
    %64 = tpu.matmul %62, %63, %cst_28 {dimension_numbers = #tpu.dot_dimension_numbers<[1], [0], [0], [1], [0, 0, 1, 1], [], []>} : vector<8x8xbf16>, vector<8x8xbf16>, vector<8x8xf32> -> vector<8x8xf32>
    %65 = vector.extract_strided_slice %59 {offsets = [0, 8], sizes = [8, 8], strides = [1, 1]} : vector<8x32xbf16> to vector<8x8xbf16>
    %66 = vector.extract_strided_slice %60 {offsets = [8, 0], sizes = [8, 8], strides = [1, 1]} : vector<32x8xbf16> to vector<8x8xbf16>
    %cst_29 = arith.constant dense<0.000000e+00> : vector<8x8xf32>
    %67 = tpu.matmul %65, %66, %cst_29 {dimension_numbers = #tpu.dot_dimension_numbers<[1], [0], [0], [1], [0, 0, 1, 1], [], []>} : vector<8x8xbf16>, vector<8x8xbf16>, vector<8x8xf32> -> vector<8x8xf32>
    %68 = vector.extract_strided_slice %59 {offsets = [0, 16], sizes = [8, 8], strides = [1, 1]} : vector<8x32xbf16> to vector<8x8xbf16>
    %69 = vector.extract_strided_slice %60 {offsets = [16, 0], sizes = [8, 8], strides = [1, 1]} : vector<32x8xbf16> to vector<8x8xbf16>
    %cst_30 = arith.constant dense<0.000000e+00> : vector<8x8xf32>
    %70 = tpu.matmul %68, %69, %cst_30 {dimension_numbers = #tpu.dot_dimension_numbers<[1], [0], [0], [1], [0, 0, 1, 1], [], []>} : vector<8x8xbf16>, vector<8x8xbf16>, vector<8x8xf32> -> vector<8x8xf32>
    %71 = vector.extract_strided_slice %59 {offsets = [0, 24], sizes = [8, 8], strides = [1, 1]} : vector<8x32xbf16> to vector<8x8xbf16>
    %72 = vector.extract_strided_slice %60 {offsets = [24, 0], sizes = [8, 8], strides = [1, 1]} : vector<32x8xbf16> to vector<8x8xbf16>
    %cst_31 = arith.constant dense<0.000000e+00> : vector<8x8xf32>
    %73 = tpu.matmul %71, %72, %cst_31 {dimension_numbers = #tpu.dot_dimension_numbers<[1], [0], [0], [1], [0, 0, 1, 1], [], []>} : vector<8x8xbf16>, vector<8x8xbf16>, vector<8x8xf32> -> vector<8x8xf32>
    %74 = tpu.concatenate %64, %67, %70, %73 in 0 : vector<8x8xf32>, vector<8x8xf32>, vector<8x8xf32>, vector<8x8xf32> -> vector<32x8xf32>
    %cst_32 = arith.constant 0.353553385 : f32
    %75 = vector.broadcast %cst_32 : f32 to vector<32x8xf32>
    %76 = arith.mulf %74, %75 : vector<32x8xf32>
    %77 = vector.broadcast %27 : vector<1x8xf32> to vector<32x8xf32>
    %78 = arith.addf %76, %77 : vector<32x8xf32>
    %cst_33 = arith.constant dense<0xFF800000> : vector<32xf32>
    %79 = vector.multi_reduction <maximumf>, %78, %cst_33 [1] : vector<32x8xf32> to vector<32xf32>
    %80 = vector.shape_cast %79 : vector<32xf32> to vector<32x1xf32>
    %81 = vector.broadcast %80 : vector<32x1xf32> to vector<32x8xf32>
    %82 = arith.subf %78, %81 : vector<32x8xf32>
    %83 = math.exp %82 : vector<32x8xf32>
    %cst_34 = arith.constant dense<0.000000e+00> : vector<32xf32>
    %84 = vector.multi_reduction <add>, %83, %cst_34 [1] : vector<32x8xf32> to vector<32xf32>
    %85 = vector.shape_cast %84 : vector<32xf32> to vector<32x1xf32>
    %86 = vector.broadcast %85 : vector<32x1xf32> to vector<32x8xf32>
    %87 = arith.divf %83, %86 : vector<32x8xf32>
    %88 = arith.truncf %87 : vector<32x8xf32> to vector<32x8xbf16>
    %89 = vector.extract_strided_slice %88 {offsets = [0, 0], sizes = [8, 8], strides = [1, 1]} : vector<32x8xbf16> to vector<8x8xbf16>
    %90 = vector.extract_strided_slice %61 {offsets = [0, 0], sizes = [8, 8], strides = [1, 1]} : vector<8x32xbf16> to vector<8x8xbf16>
    %cst_35 = arith.constant dense<0.000000e+00> : vector<8x8xf32>
    %91 = tpu.matmul %89, %90, %cst_35 {dimension_numbers = #tpu.dot_dimension_numbers<[1], [0], [0], [1], [0, 0, 1, 1], [], []>} : vector<8x8xbf16>, vector<8x8xbf16>, vector<8x8xf32> -> vector<8x8xf32>
    %92 = vector.extract_strided_slice %88 {offsets = [8, 0], sizes = [8, 8], strides = [1, 1]} : vector<32x8xbf16> to vector<8x8xbf16>
    %93 = vector.extract_strided_slice %61 {offsets = [0, 8], sizes = [8, 8], strides = [1, 1]} : vector<8x32xbf16> to vector<8x8xbf16>
    %cst_36 = arith.constant dense<0.000000e+00> : vector<8x8xf32>
    %94 = tpu.matmul %92, %93, %cst_36 {dimension_numbers = #tpu.dot_dimension_numbers<[1], [0], [0], [1], [0, 0, 1, 1], [], []>} : vector<8x8xbf16>, vector<8x8xbf16>, vector<8x8xf32> -> vector<8x8xf32>
    %95 = vector.extract_strided_slice %88 {offsets = [16, 0], sizes = [8, 8], strides = [1, 1]} : vector<32x8xbf16> to vector<8x8xbf16>
    %96 = vector.extract_strided_slice %61 {offsets = [0, 16], sizes = [8, 8], strides = [1, 1]} : vector<8x32xbf16> to vector<8x8xbf16>
    %cst_37 = arith.constant dense<0.000000e+00> : vector<8x8xf32>
    %97 = tpu.matmul %95, %96, %cst_37 {dimension_numbers = #tpu.dot_dimension_numbers<[1], [0], [0], [1], [0, 0, 1, 1], [], []>} : vector<8x8xbf16>, vector<8x8xbf16>, vector<8x8xf32> -> vector<8x8xf32>
    %98 = vector.extract_strided_slice %88 {offsets = [24, 0], sizes = [8, 8], strides = [1, 1]} : vector<32x8xbf16> to vector<8x8xbf16>
    %99 = vector.extract_strided_slice %61 {offsets = [0, 24], sizes = [8, 8], strides = [1, 1]} : vector<8x32xbf16> to vector<8x8xbf16>
    %cst_38 = arith.constant dense<0.000000e+00> : vector<8x8xf32>
    %100 = tpu.matmul %98, %99, %cst_38 {dimension_numbers = #tpu.dot_dimension_numbers<[1], [0], [0], [1], [0, 0, 1, 1], [], []>} : vector<8x8xbf16>, vector<8x8xbf16>, vector<8x8xf32> -> vector<8x8xf32>
    %101 = tpu.concatenate %91, %94, %97, %100 in 1 : vector<8x8xf32>, vector<8x8xf32>, vector<8x8xf32>, vector<8x8xf32> -> vector<8x32xf32>
    %102 = arith.index_cast %c0_i32 : i32 to index
    %c0_39 = arith.constant 0 : index
    %c0_40 = arith.constant 0 : index
    %103 = vector.load %arg11[%102, %c0_39, %c0_40] : memref<2x32x32xbf16, #tpu.memory_space<vmem>>, vector<1x32x32xbf16>
    %104 = vector.shape_cast %103 : vector<1x32x32xbf16> to vector<32x32xbf16>
    %105 = arith.truncf %101 : vector<8x32xf32> to vector<8x32xbf16>
    %cst_41 = arith.constant dense<0.000000e+00> : vector<8x32xf32>
    %106 = tpu.matmul %105, %104, %cst_41 {dimension_numbers = #tpu.dot_dimension_numbers<[1], [0], [0], [1], [0, 0, 1, 1], [], []>} : vector<8x32xbf16>, vector<32x32xbf16>, vector<8x32xf32> -> vector<8x32xf32>
    %107 = arith.index_cast %c0_i32 : i32 to index
    %c0_42 = arith.constant 0 : index
    %c0_43 = arith.constant 0 : index
    %108 = vector.load %arg12[%107, %c0_42, %c0_43] : memref<2x1x32xf32, #tpu.memory_space<vmem>>, vector<1x1x32xf32>
    %109 = vector.shape_cast %108 : vector<1x1x32xf32> to vector<1x32xf32>
    %110 = vector.broadcast %109 : vector<1x32xf32> to vector<8x32xf32>
    %111 = arith.addf %106, %110 : vector<8x32xf32>
    %112 = arith.addf %25, %111 : vector<8x32xf32>
    %113 = arith.index_cast %c0_i32 : i32 to index
    %c0_44 = arith.constant 0 : index
    %c0_45 = arith.constant 0 : index
    %114 = vector.load %arg13[%113, %c0_44, %c0_45] : memref<2x1x32xf32, #tpu.memory_space<vmem>>, vector<1x1x32xf32>
    %115 = vector.shape_cast %114 : vector<1x1x32xf32> to vector<1x32xf32>
    %116 = arith.index_cast %c0_i32 : i32 to index
    %c0_46 = arith.constant 0 : index
    %c0_47 = arith.constant 0 : index
    %117 = vector.load %arg14[%116, %c0_46, %c0_47] : memref<2x1x32xf32, #tpu.memory_space<vmem>>, vector<1x1x32xf32>
    %118 = vector.shape_cast %117 : vector<1x1x32xf32> to vector<1x32xf32>
    %cst_48 = arith.constant dense<0.000000e+00> : vector<8xf32>
    %119 = vector.multi_reduction <add>, %112, %cst_48 [1] : vector<8x32xf32> to vector<8xf32>
    %120 = vector.shape_cast %119 : vector<8xf32> to vector<8x1xf32>
    %cst_49 = arith.constant 3.200000e+01 : f32
    %121 = vector.broadcast %cst_49 : f32 to vector<8x1xf32>
    %122 = arith.divf %120, %121 : vector<8x1xf32>
    %123 = vector.broadcast %122 : vector<8x1xf32> to vector<8x32xf32>
    %124 = arith.subf %112, %123 : vector<8x32xf32>
    %125 = arith.mulf %124, %124 : vector<8x32xf32>
    %cst_50 = arith.constant dense<0.000000e+00> : vector<8xf32>
    %126 = vector.multi_reduction <add>, %125, %cst_50 [1] : vector<8x32xf32> to vector<8xf32>
    %127 = vector.shape_cast %126 : vector<8xf32> to vector<8x1xf32>
    %cst_51 = arith.constant 3.200000e+01 : f32
    %128 = vector.broadcast %cst_51 : f32 to vector<8x1xf32>
    %129 = arith.divf %127, %128 : vector<8x1xf32>
    %130 = vector.broadcast %122 : vector<8x1xf32> to vector<8x32xf32>
    %131 = arith.subf %112, %130 : vector<8x32xf32>
    %cst_52 = arith.constant 9.99999996E-13 : f32
    %132 = vector.broadcast %cst_52 : f32 to vector<8x1xf32>
    %133 = arith.addf %129, %132 : vector<8x1xf32>
    %134 = math.rsqrt %133 : vector<8x1xf32>
    %135 = vector.broadcast %134 : vector<8x1xf32> to vector<8x32xf32>
    %136 = arith.mulf %131, %135 : vector<8x32xf32>
    %137 = vector.broadcast %115 : vector<1x32xf32> to vector<8x32xf32>
    %138 = arith.mulf %136, %137 : vector<8x32xf32>
    %139 = vector.broadcast %118 : vector<1x32xf32> to vector<8x32xf32>
    %140 = arith.addf %138, %139 : vector<8x32xf32>
    %141 = arith.index_cast %c0_i32 : i32 to index
    %c0_53 = arith.constant 0 : index
    %c0_54 = arith.constant 0 : index
    %142 = vector.load %arg15[%141, %c0_53, %c0_54] : memref<2x32x64xbf16, #tpu.memory_space<vmem>>, vector<1x32x64xbf16>
    %143 = vector.shape_cast %142 : vector<1x32x64xbf16> to vector<32x64xbf16>
    %144 = arith.truncf %140 : vector<8x32xf32> to vector<8x32xbf16>
    %cst_55 = arith.constant dense<0.000000e+00> : vector<8x64xf32>
    %145 = tpu.matmul %144, %143, %cst_55 {dimension_numbers = #tpu.dot_dimension_numbers<[1], [0], [0], [1], [0, 0, 1, 1], [], []>} : vector<8x32xbf16>, vector<32x64xbf16>, vector<8x64xf32> -> vector<8x64xf32>
    %146 = arith.index_cast %c0_i32 : i32 to index
    %c0_56 = arith.constant 0 : index
    %c0_57 = arith.constant 0 : index
    %147 = vector.load %arg16[%146, %c0_56, %c0_57] : memref<2x1x64xf32, #tpu.memory_space<vmem>>, vector<1x1x64xf32>
    %148 = vector.shape_cast %147 : vector<1x1x64xf32> to vector<1x64xf32>
    %149 = vector.broadcast %148 : vector<1x64xf32> to vector<8x64xf32>
    %150 = arith.addf %145, %149 : vector<8x64xf32>
    %cst_58 = arith.constant 5.000000e-01 : f32
    %151 = vector.broadcast %cst_58 : f32 to vector<8x64xf32>
    %152 = arith.mulf %151, %150 : vector<8x64xf32>
    %cst_59 = arith.constant 4.471500e-02 : f32
    %153 = vector.broadcast %cst_59 : f32 to vector<8x64xf32>
    %154 = arith.mulf %153, %150 : vector<8x64xf32>
    %155 = arith.mulf %154, %150 : vector<8x64xf32>
    %156 = arith.mulf %155, %150 : vector<8x64xf32>
    %157 = arith.addf %150, %156 : vector<8x64xf32>
    %cst_60 = arith.constant 0.797884583 : f32
    %158 = vector.broadcast %cst_60 : f32 to vector<8x64xf32>
    %159 = arith.mulf %158, %157 : vector<8x64xf32>
    %160 = math.tanh %159 : vector<8x64xf32>
    %cst_61 = arith.constant 1.000000e+00 : f32
    %161 = vector.broadcast %cst_61 : f32 to vector<8x64xf32>
    %162 = arith.addf %161, %160 : vector<8x64xf32>
    %163 = arith.mulf %152, %162 : vector<8x64xf32>
    %164 = arith.index_cast %c0_i32 : i32 to index
    %c0_62 = arith.constant 0 : index
    %c0_63 = arith.constant 0 : index
    %165 = vector.load %arg17[%164, %c0_62, %c0_63] : memref<2x64x32xbf16, #tpu.memory_space<vmem>>, vector<1x64x32xbf16>
    %166 = vector.shape_cast %165 : vector<1x64x32xbf16> to vector<64x32xbf16>
    %167 = arith.truncf %163 : vector<8x64xf32> to vector<8x64xbf16>
    %cst_64 = arith.constant dense<0.000000e+00> : vector<8x32xf32>
    %168 = tpu.matmul %167, %166, %cst_64 {dimension_numbers = #tpu.dot_dimension_numbers<[1], [0], [0], [1], [0, 0, 1, 1], [], []>} : vector<8x64xbf16>, vector<64x32xbf16>, vector<8x32xf32> -> vector<8x32xf32>
    %169 = arith.index_cast %c0_i32 : i32 to index
    %c0_65 = arith.constant 0 : index
    %c0_66 = arith.constant 0 : index
    %170 = vector.load %arg18[%169, %c0_65, %c0_66] : memref<2x1x32xf32, #tpu.memory_space<vmem>>, vector<1x1x32xf32>
    %171 = vector.shape_cast %170 : vector<1x1x32xf32> to vector<1x32xf32>
    %172 = vector.broadcast %171 : vector<1x32xf32> to vector<8x32xf32>
    %173 = arith.addf %168, %172 : vector<8x32xf32>
    %174 = arith.addf %140, %173 : vector<8x32xf32>
    %175 = arith.index_cast %c0_i32 : i32 to index
    %c0_67 = arith.constant 0 : index
    %c0_68 = arith.constant 0 : index
    %176 = vector.load %arg19[%175, %c0_67, %c0_68] : memref<2x1x32xf32, #tpu.memory_space<vmem>>, vector<1x1x32xf32>
    %177 = vector.shape_cast %176 : vector<1x1x32xf32> to vector<1x32xf32>
    %178 = arith.index_cast %c0_i32 : i32 to index
    %c0_69 = arith.constant 0 : index
    %c0_70 = arith.constant 0 : index
    %179 = vector.load %arg20[%178, %c0_69, %c0_70] : memref<2x1x32xf32, #tpu.memory_space<vmem>>, vector<1x1x32xf32>
    %180 = vector.shape_cast %179 : vector<1x1x32xf32> to vector<1x32xf32>
    %cst_71 = arith.constant dense<0.000000e+00> : vector<8xf32>
    %181 = vector.multi_reduction <add>, %174, %cst_71 [1] : vector<8x32xf32> to vector<8xf32>
    %182 = vector.shape_cast %181 : vector<8xf32> to vector<8x1xf32>
    %cst_72 = arith.constant 3.200000e+01 : f32
    %183 = vector.broadcast %cst_72 : f32 to vector<8x1xf32>
    %184 = arith.divf %182, %183 : vector<8x1xf32>
    %185 = vector.broadcast %184 : vector<8x1xf32> to vector<8x32xf32>
    %186 = arith.subf %174, %185 : vector<8x32xf32>
    %187 = arith.mulf %186, %186 : vector<8x32xf32>
    %cst_73 = arith.constant dense<0.000000e+00> : vector<8xf32>
    %188 = vector.multi_reduction <add>, %187, %cst_73 [1] : vector<8x32xf32> to vector<8xf32>
    %189 = vector.shape_cast %188 : vector<8xf32> to vector<8x1xf32>
    %cst_74 = arith.constant 3.200000e+01 : f32
    %190 = vector.broadcast %cst_74 : f32 to vector<8x1xf32>
    %191 = arith.divf %189, %190 : vector<8x1xf32>
    %192 = vector.broadcast %184 : vector<8x1xf32> to vector<8x32xf32>
    %193 = arith.subf %174, %192 : vector<8x32xf32>
    %cst_75 = arith.constant 9.99999996E-13 : f32
    %194 = vector.broadcast %cst_75 : f32 to vector<8x1xf32>
    %195 = arith.addf %191, %194 : vector<8x1xf32>
    %196 = math.rsqrt %195 : vector<8x1xf32>
    %197 = vector.broadcast %196 : vector<8x1xf32> to vector<8x32xf32>
    %198 = arith.mulf %193, %197 : vector<8x32xf32>
    %199 = vector.broadcast %177 : vector<1x32xf32> to vector<8x32xf32>
    %200 = arith.mulf %198, %199 : vector<8x32xf32>
    %201 = vector.broadcast %180 : vector<1x32xf32> to vector<8x32xf32>
    %202 = arith.addf %200, %201 : vector<8x32xf32>
    %c1_i32 = arith.constant 1 : i32
    %203 = arith.index_cast %c1_i32 : i32 to index
    %c0_76 = arith.constant 0 : index
    %c0_77 = arith.constant 0 : index
    %204 = vector.load %arg5[%203, %c0_76, %c0_77] : memref<2x32x32xbf16, #tpu.memory_space<vmem>>, vector<1x32x32xbf16>
    %205 = vector.shape_cast %204 : vector<1x32x32xbf16> to vector<32x32xbf16>
    %206 = arith.truncf %202 : vector<8x32xf32> to vector<8x32xbf16>
    %cst_78 = arith.constant dense<0.000000e+00> : vector<8x32xf32>
    %207 = tpu.matmul %206, %205, %cst_78 {dimension_numbers = #tpu.dot_dimension_numbers<[1], [0], [0], [1], [0, 0, 1, 1], [], []>} : vector<8x32xbf16>, vector<32x32xbf16>, vector<8x32xf32> -> vector<8x32xf32>
    %208 = arith.index_cast %c1_i32 : i32 to index
    %c0_79 = arith.constant 0 : index
    %c0_80 = arith.constant 0 : index
    %209 = vector.load %arg6[%208, %c0_79, %c0_80] : memref<2x1x32xf32, #tpu.memory_space<vmem>>, vector<1x1x32xf32>
    %210 = vector.shape_cast %209 : vector<1x1x32xf32> to vector<1x32xf32>
    %211 = vector.broadcast %210 : vector<1x32xf32> to vector<8x32xf32>
    %212 = arith.addf %207, %211 : vector<8x32xf32>
    %213 = arith.index_cast %c1_i32 : i32 to index
    %c0_81 = arith.constant 0 : index
    %c0_82 = arith.constant 0 : index
    %214 = vector.load %arg7[%213, %c0_81, %c0_82] : memref<2x32x32xbf16, #tpu.memory_space<vmem>>, vector<1x32x32xbf16>
    %215 = vector.shape_cast %214 : vector<1x32x32xbf16> to vector<32x32xbf16>
    %216 = arith.truncf %202 : vector<8x32xf32> to vector<8x32xbf16>
    %cst_83 = arith.constant dense<0.000000e+00> : vector<8x32xf32>
    %217 = tpu.matmul %216, %215, %cst_83 {dimension_numbers = #tpu.dot_dimension_numbers<[1], [0], [0], [1], [0, 0, 1, 1], [], []>} : vector<8x32xbf16>, vector<32x32xbf16>, vector<8x32xf32> -> vector<8x32xf32>
    %218 = arith.index_cast %c1_i32 : i32 to index
    %c0_84 = arith.constant 0 : index
    %c0_85 = arith.constant 0 : index
    %219 = vector.load %arg8[%218, %c0_84, %c0_85] : memref<2x1x32xf32, #tpu.memory_space<vmem>>, vector<1x1x32xf32>
    %220 = vector.shape_cast %219 : vector<1x1x32xf32> to vector<1x32xf32>
    %221 = vector.broadcast %220 : vector<1x32xf32> to vector<8x32xf32>
    %222 = arith.addf %217, %221 : vector<8x32xf32>
    %223 = arith.index_cast %c1_i32 : i32 to index
    %c0_86 = arith.constant 0 : index
    %c0_87 = arith.constant 0 : index
    %224 = vector.load %arg9[%223, %c0_86, %c0_87] : memref<2x32x32xbf16, #tpu.memory_space<vmem>>, vector<1x32x32xbf16>
    %225 = vector.shape_cast %224 : vector<1x32x32xbf16> to vector<32x32xbf16>
    %226 = arith.truncf %202 : vector<8x32xf32> to vector<8x32xbf16>
    %cst_88 = arith.constant dense<0.000000e+00> : vector<8x32xf32>
    %227 = tpu.matmul %226, %225, %cst_88 {dimension_numbers = #tpu.dot_dimension_numbers<[1], [0], [0], [1], [0, 0, 1, 1], [], []>} : vector<8x32xbf16>, vector<32x32xbf16>, vector<8x32xf32> -> vector<8x32xf32>
    %228 = arith.index_cast %c1_i32 : i32 to index
    %c0_89 = arith.constant 0 : index
    %c0_90 = arith.constant 0 : index
    %229 = vector.load %arg10[%228, %c0_89, %c0_90] : memref<2x1x32xf32, #tpu.memory_space<vmem>>, vector<1x1x32xf32>
    %230 = vector.shape_cast %229 : vector<1x1x32xf32> to vector<1x32xf32>
    %231 = vector.broadcast %230 : vector<1x32xf32> to vector<8x32xf32>
    %232 = arith.addf %227, %231 : vector<8x32xf32>
    %233 = tpu.transpose %222, [1, 0] : vector<8x32xf32> -> vector<32x8xf32>
    %234 = arith.truncf %212 : vector<8x32xf32> to vector<8x32xbf16>
    %235 = arith.truncf %233 : vector<32x8xf32> to vector<32x8xbf16>
    %236 = arith.truncf %232 : vector<8x32xf32> to vector<8x32xbf16>
    %237 = vector.extract_strided_slice %234 {offsets = [0, 0], sizes = [8, 8], strides = [1, 1]} : vector<8x32xbf16> to vector<8x8xbf16>
    %238 = vector.extract_strided_slice %235 {offsets = [0, 0], sizes = [8, 8], strides = [1, 1]} : vector<32x8xbf16> to vector<8x8xbf16>
    %cst_91 = arith.constant dense<0.000000e+00> : vector<8x8xf32>
    %239 = tpu.matmul %237, %238, %cst_91 {dimension_numbers = #tpu.dot_dimension_numbers<[1], [0], [0], [1], [0, 0, 1, 1], [], []>} : vector<8x8xbf16>, vector<8x8xbf16>, vector<8x8xf32> -> vector<8x8xf32>
    %240 = vector.extract_strided_slice %234 {offsets = [0, 8], sizes = [8, 8], strides = [1, 1]} : vector<8x32xbf16> to vector<8x8xbf16>
    %241 = vector.extract_strided_slice %235 {offsets = [8, 0], sizes = [8, 8], strides = [1, 1]} : vector<32x8xbf16> to vector<8x8xbf16>
    %cst_92 = arith.constant dense<0.000000e+00> : vector<8x8xf32>
    %242 = tpu.matmul %240, %241, %cst_92 {dimension_numbers = #tpu.dot_dimension_numbers<[1], [0], [0], [1], [0, 0, 1, 1], [], []>} : vector<8x8xbf16>, vector<8x8xbf16>, vector<8x8xf32> -> vector<8x8xf32>
    %243 = vector.extract_strided_slice %234 {offsets = [0, 16], sizes = [8, 8], strides = [1, 1]} : vector<8x32xbf16> to vector<8x8xbf16>
    %244 = vector.extract_strided_slice %235 {offsets = [16, 0], sizes = [8, 8], strides = [1, 1]} : vector<32x8xbf16> to vector<8x8xbf16>
    %cst_93 = arith.constant dense<0.000000e+00> : vector<8x8xf32>
    %245 = tpu.matmul %243, %244, %cst_93 {dimension_numbers = #tpu.dot_dimension_numbers<[1], [0], [0], [1], [0, 0, 1, 1], [], []>} : vector<8x8xbf16>, vector<8x8xbf16>, vector<8x8xf32> -> vector<8x8xf32>
    %246 = vector.extract_strided_slice %234 {offsets = [0, 24], sizes = [8, 8], strides = [1, 1]} : vector<8x32xbf16> to vector<8x8xbf16>
    %247 = vector.extract_strided_slice %235 {offsets = [24, 0], sizes = [8, 8], strides = [1, 1]} : vector<32x8xbf16> to vector<8x8xbf16>
    %cst_94 = arith.constant dense<0.000000e+00> : vector<8x8xf32>
    %248 = tpu.matmul %246, %247, %cst_94 {dimension_numbers = #tpu.dot_dimension_numbers<[1], [0], [0], [1], [0, 0, 1, 1], [], []>} : vector<8x8xbf16>, vector<8x8xbf16>, vector<8x8xf32> -> vector<8x8xf32>
    %249 = tpu.concatenate %239, %242, %245, %248 in 0 : vector<8x8xf32>, vector<8x8xf32>, vector<8x8xf32>, vector<8x8xf32> -> vector<32x8xf32>
    %cst_95 = arith.constant 0.353553385 : f32
    %250 = vector.broadcast %cst_95 : f32 to vector<32x8xf32>
    %251 = arith.mulf %249, %250 : vector<32x8xf32>
    %252 = vector.broadcast %27 : vector<1x8xf32> to vector<32x8xf32>
    %253 = arith.addf %251, %252 : vector<32x8xf32>
    %cst_96 = arith.constant dense<0xFF800000> : vector<32xf32>
    %254 = vector.multi_reduction <maximumf>, %253, %cst_96 [1] : vector<32x8xf32> to vector<32xf32>
    %255 = vector.shape_cast %254 : vector<32xf32> to vector<32x1xf32>
    %256 = vector.broadcast %255 : vector<32x1xf32> to vector<32x8xf32>
    %257 = arith.subf %253, %256 : vector<32x8xf32>
    %258 = math.exp %257 : vector<32x8xf32>
    %cst_97 = arith.constant dense<0.000000e+00> : vector<32xf32>
    %259 = vector.multi_reduction <add>, %258, %cst_97 [1] : vector<32x8xf32> to vector<32xf32>
    %260 = vector.shape_cast %259 : vector<32xf32> to vector<32x1xf32>
    %261 = vector.broadcast %260 : vector<32x1xf32> to vector<32x8xf32>
    %262 = arith.divf %258, %261 : vector<32x8xf32>
    %263 = arith.truncf %262 : vector<32x8xf32> to vector<32x8xbf16>
    %264 = vector.extract_strided_slice %263 {offsets = [0, 0], sizes = [8, 8], strides = [1, 1]} : vector<32x8xbf16> to vector<8x8xbf16>
    %265 = vector.extract_strided_slice %236 {offsets = [0, 0], sizes = [8, 8], strides = [1, 1]} : vector<8x32xbf16> to vector<8x8xbf16>
    %cst_98 = arith.constant dense<0.000000e+00> : vector<8x8xf32>
    %266 = tpu.matmul %264, %265, %cst_98 {dimension_numbers = #tpu.dot_dimension_numbers<[1], [0], [0], [1], [0, 0, 1, 1], [], []>} : vector<8x8xbf16>, vector<8x8xbf16>, vector<8x8xf32> -> vector<8x8xf32>
    %267 = vector.extract_strided_slice %263 {offsets = [8, 0], sizes = [8, 8], strides = [1, 1]} : vector<32x8xbf16> to vector<8x8xbf16>
    %268 = vector.extract_strided_slice %236 {offsets = [0, 8], sizes = [8, 8], strides = [1, 1]} : vector<8x32xbf16> to vector<8x8xbf16>
    %cst_99 = arith.constant dense<0.000000e+00> : vector<8x8xf32>
    %269 = tpu.matmul %267, %268, %cst_99 {dimension_numbers = #tpu.dot_dimension_numbers<[1], [0], [0], [1], [0, 0, 1, 1], [], []>} : vector<8x8xbf16>, vector<8x8xbf16>, vector<8x8xf32> -> vector<8x8xf32>
    %270 = vector.extract_strided_slice %263 {offsets = [16, 0], sizes = [8, 8], strides = [1, 1]} : vector<32x8xbf16> to vector<8x8xbf16>
    %271 = vector.extract_strided_slice %236 {offsets = [0, 16], sizes = [8, 8], strides = [1, 1]} : vector<8x32xbf16> to vector<8x8xbf16>
    %cst_100 = arith.constant dense<0.000000e+00> : vector<8x8xf32>
    %272 = tpu.matmul %270, %271, %cst_100 {dimension_numbers = #tpu.dot_dimension_numbers<[1], [0], [0], [1], [0, 0, 1, 1], [], []>} : vector<8x8xbf16>, vector<8x8xbf16>, vector<8x8xf32> -> vector<8x8xf32>
    %273 = vector.extract_strided_slice %263 {offsets = [24, 0], sizes = [8, 8], strides = [1, 1]} : vector<32x8xbf16> to vector<8x8xbf16>
    %274 = vector.extract_strided_slice %236 {offsets = [0, 24], sizes = [8, 8], strides = [1, 1]} : vector<8x32xbf16> to vector<8x8xbf16>
    %cst_101 = arith.constant dense<0.000000e+00> : vector<8x8xf32>
    %275 = tpu.matmul %273, %274, %cst_101 {dimension_numbers = #tpu.dot_dimension_numbers<[1], [0], [0], [1], [0, 0, 1, 1], [], []>} : vector<8x8xbf16>, vector<8x8xbf16>, vector<8x8xf32> -> vector<8x8xf32>
    %276 = tpu.concatenate %266, %269, %272, %275 in 1 : vector<8x8xf32>, vector<8x8xf32>, vector<8x8xf32>, vector<8x8xf32> -> vector<8x32xf32>
    %277 = arith.index_cast %c1_i32 : i32 to index
    %c0_102 = arith.constant 0 : index
    %c0_103 = arith.constant 0 : index
    %278 = vector.load %arg11[%277, %c0_102, %c0_103] : memref<2x32x32xbf16, #tpu.memory_space<vmem>>, vector<1x32x32xbf16>
    %279 = vector.shape_cast %278 : vector<1x32x32xbf16> to vector<32x32xbf16>
    %280 = arith.truncf %276 : vector<8x32xf32> to vector<8x32xbf16>
    %cst_104 = arith.constant dense<0.000000e+00> : vector<8x32xf32>
    %281 = tpu.matmul %280, %279, %cst_104 {dimension_numbers = #tpu.dot_dimension_numbers<[1], [0], [0], [1], [0, 0, 1, 1], [], []>} : vector<8x32xbf16>, vector<32x32xbf16>, vector<8x32xf32> -> vector<8x32xf32>
    %282 = arith.index_cast %c1_i32 : i32 to index
    %c0_105 = arith.constant 0 : index
    %c0_106 = arith.constant 0 : index
    %283 = vector.load %arg12[%282, %c0_105, %c0_106] : memref<2x1x32xf32, #tpu.memory_space<vmem>>, vector<1x1x32xf32>
    %284 = vector.shape_cast %283 : vector<1x1x32xf32> to vector<1x32xf32>
    %285 = vector.broadcast %284 : vector<1x32xf32> to vector<8x32xf32>
    %286 = arith.addf %281, %285 : vector<8x32xf32>
    %287 = arith.addf %202, %286 : vector<8x32xf32>
    %288 = arith.index_cast %c1_i32 : i32 to index
    %c0_107 = arith.constant 0 : index
    %c0_108 = arith.constant 0 : index
    %289 = vector.load %arg13[%288, %c0_107, %c0_108] : memref<2x1x32xf32, #tpu.memory_space<vmem>>, vector<1x1x32xf32>
    %290 = vector.shape_cast %289 : vector<1x1x32xf32> to vector<1x32xf32>
    %291 = arith.index_cast %c1_i32 : i32 to index
    %c0_109 = arith.constant 0 : index
    %c0_110 = arith.constant 0 : index
    %292 = vector.load %arg14[%291, %c0_109, %c0_110] : memref<2x1x32xf32, #tpu.memory_space<vmem>>, vector<1x1x32xf32>
    %293 = vector.shape_cast %292 : vector<1x1x32xf32> to vector<1x32xf32>
    %cst_111 = arith.constant dense<0.000000e+00> : vector<8xf32>
    %294 = vector.multi_reduction <add>, %287, %cst_111 [1] : vector<8x32xf32> to vector<8xf32>
    %295 = vector.shape_cast %294 : vector<8xf32> to vector<8x1xf32>
    %cst_112 = arith.constant 3.200000e+01 : f32
    %296 = vector.broadcast %cst_112 : f32 to vector<8x1xf32>
    %297 = arith.divf %295, %296 : vector<8x1xf32>
    %298 = vector.broadcast %297 : vector<8x1xf32> to vector<8x32xf32>
    %299 = arith.subf %287, %298 : vector<8x32xf32>
    %300 = arith.mulf %299, %299 : vector<8x32xf32>
    %cst_113 = arith.constant dense<0.000000e+00> : vector<8xf32>
    %301 = vector.multi_reduction <add>, %300, %cst_113 [1] : vector<8x32xf32> to vector<8xf32>
    %302 = vector.shape_cast %301 : vector<8xf32> to vector<8x1xf32>
    %cst_114 = arith.constant 3.200000e+01 : f32
    %303 = vector.broadcast %cst_114 : f32 to vector<8x1xf32>
    %304 = arith.divf %302, %303 : vector<8x1xf32>
    %305 = vector.broadcast %297 : vector<8x1xf32> to vector<8x32xf32>
    %306 = arith.subf %287, %305 : vector<8x32xf32>
    %cst_115 = arith.constant 9.99999996E-13 : f32
    %307 = vector.broadcast %cst_115 : f32 to vector<8x1xf32>
    %308 = arith.addf %304, %307 : vector<8x1xf32>
    %309 = math.rsqrt %308 : vector<8x1xf32>
    %310 = vector.broadcast %309 : vector<8x1xf32> to vector<8x32xf32>
    %311 = arith.mulf %306, %310 : vector<8x32xf32>
    %312 = vector.broadcast %290 : vector<1x32xf32> to vector<8x32xf32>
    %313 = arith.mulf %311, %312 : vector<8x32xf32>
    %314 = vector.broadcast %293 : vector<1x32xf32> to vector<8x32xf32>
    %315 = arith.addf %313, %314 : vector<8x32xf32>
    %316 = arith.index_cast %c1_i32 : i32 to index
    %c0_116 = arith.constant 0 : index
    %c0_117 = arith.constant 0 : index
    %317 = vector.load %arg15[%316, %c0_116, %c0_117] : memref<2x32x64xbf16, #tpu.memory_space<vmem>>, vector<1x32x64xbf16>
    %318 = vector.shape_cast %317 : vector<1x32x64xbf16> to vector<32x64xbf16>
    %319 = arith.truncf %315 : vector<8x32xf32> to vector<8x32xbf16>
    %cst_118 = arith.constant dense<0.000000e+00> : vector<8x64xf32>
    %320 = tpu.matmul %319, %318, %cst_118 {dimension_numbers = #tpu.dot_dimension_numbers<[1], [0], [0], [1], [0, 0, 1, 1], [], []>} : vector<8x32xbf16>, vector<32x64xbf16>, vector<8x64xf32> -> vector<8x64xf32>
    %321 = arith.index_cast %c1_i32 : i32 to index
    %c0_119 = arith.constant 0 : index
    %c0_120 = arith.constant 0 : index
    %322 = vector.load %arg16[%321, %c0_119, %c0_120] : memref<2x1x64xf32, #tpu.memory_space<vmem>>, vector<1x1x64xf32>
    %323 = vector.shape_cast %322 : vector<1x1x64xf32> to vector<1x64xf32>
    %324 = vector.broadcast %323 : vector<1x64xf32> to vector<8x64xf32>
    %325 = arith.addf %320, %324 : vector<8x64xf32>
    %cst_121 = arith.constant 5.000000e-01 : f32
    %326 = vector.broadcast %cst_121 : f32 to vector<8x64xf32>
    %327 = arith.mulf %326, %325 : vector<8x64xf32>
    %cst_122 = arith.constant 4.471500e-02 : f32
    %328 = vector.broadcast %cst_122 : f32 to vector<8x64xf32>
    %329 = arith.mulf %328, %325 : vector<8x64xf32>
    %330 = arith.mulf %329, %325 : vector<8x64xf32>
    %331 = arith.mulf %330, %325 : vector<8x64xf32>
    %332 = arith.addf %325, %331 : vector<8x64xf32>
    %cst_123 = arith.constant 0.797884583 : f32
    %333 = vector.broadcast %cst_123 : f32 to vector<8x64xf32>
    %334 = arith.mulf %333, %332 : vector<8x64xf32>
    %335 = math.tanh %334 : vector<8x64xf32>
    %cst_124 = arith.constant 1.000000e+00 : f32
    %336 = vector.broadcast %cst_124 : f32 to vector<8x64xf32>
    %337 = arith.addf %336, %335 : vector<8x64xf32>
    %338 = arith.mulf %327, %337 : vector<8x64xf32>
    %339 = arith.index_cast %c1_i32 : i32 to index
    %c0_125 = arith.constant 0 : index
    %c0_126 = arith.constant 0 : index
    %340 = vector.load %arg17[%339, %c0_125, %c0_126] : memref<2x64x32xbf16, #tpu.memory_space<vmem>>, vector<1x64x32xbf16>
    %341 = vector.shape_cast %340 : vector<1x64x32xbf16> to vector<64x32xbf16>
    %342 = arith.truncf %338 : vector<8x64xf32> to vector<8x64xbf16>
    %cst_127 = arith.constant dense<0.000000e+00> : vector<8x32xf32>
    %343 = tpu.matmul %342, %341, %cst_127 {dimension_numbers = #tpu.dot_dimension_numbers<[1], [0], [0], [1], [0, 0, 1, 1], [], []>} : vector<8x64xbf16>, vector<64x32xbf16>, vector<8x32xf32> -> vector<8x32xf32>
    %344 = arith.index_cast %c1_i32 : i32 to index
    %c0_128 = arith.constant 0 : index
    %c0_129 = arith.constant 0 : index
    %345 = vector.load %arg18[%344, %c0_128, %c0_129] : memref<2x1x32xf32, #tpu.memory_space<vmem>>, vector<1x1x32xf32>
    %346 = vector.shape_cast %345 : vector<1x1x32xf32> to vector<1x32xf32>
    %347 = vector.broadcast %346 : vector<1x32xf32> to vector<8x32xf32>
    %348 = arith.addf %343, %347 : vector<8x32xf32>
    %349 = arith.addf %315, %348 : vector<8x32xf32>
    %350 = arith.index_cast %c1_i32 : i32 to index
    %c0_130 = arith.constant 0 : index
    %c0_131 = arith.constant 0 : index
    %351 = vector.load %arg19[%350, %c0_130, %c0_131] : memref<2x1x32xf32, #tpu.memory_space<vmem>>, vector<1x1x32xf32>
    %352 = vector.shape_cast %351 : vector<1x1x32xf32> to vector<1x32xf32>
    %353 = arith.index_cast %c1_i32 : i32 to index
    %c0_132 = arith.constant 0 : index
    %c0_133 = arith.constant 0 : index
    %354 = vector.load %arg20[%353, %c0_132, %c0_133] : memref<2x1x32xf32, #tpu.memory_space<vmem>>, vector<1x1x32xf32>
    %355 = vector.shape_cast %354 : vector<1x1x32xf32> to vector<1x32xf32>
    %cst_134 = arith.constant dense<0.000000e+00> : vector<8xf32>
    %356 = vector.multi_reduction <add>, %349, %cst_134 [1] : vector<8x32xf32> to vector<8xf32>
    %357 = vector.shape_cast %356 : vector<8xf32> to vector<8x1xf32>
    %cst_135 = arith.constant 3.200000e+01 : f32
    %358 = vector.broadcast %cst_135 : f32 to vector<8x1xf32>
    %359 = arith.divf %357, %358 : vector<8x1xf32>
    %360 = vector.broadcast %359 : vector<8x1xf32> to vector<8x32xf32>
    %361 = arith.subf %349, %360 : vector<8x32xf32>
    %362 = arith.mulf %361, %361 : vector<8x32xf32>
    %cst_136 = arith.constant dense<0.000000e+00> : vector<8xf32>
    %363 = vector.multi_reduction <add>, %362, %cst_136 [1] : vector<8x32xf32> to vector<8xf32>
    %364 = vector.shape_cast %363 : vector<8xf32> to vector<8x1xf32>
    %cst_137 = arith.constant 3.200000e+01 : f32
    %365 = vector.broadcast %cst_137 : f32 to vector<8x1xf32>
    %366 = arith.divf %364, %365 : vector<8x1xf32>
    %367 = vector.broadcast %359 : vector<8x1xf32> to vector<8x32xf32>
    %368 = arith.subf %349, %367 : vector<8x32xf32>
    %cst_138 = arith.constant 9.99999996E-13 : f32
    %369 = vector.broadcast %cst_138 : f32 to vector<8x1xf32>
    %370 = arith.addf %366, %369 : vector<8x1xf32>
    %371 = math.rsqrt %370 : vector<8x1xf32>
    %372 = vector.broadcast %371 : vector<8x1xf32> to vector<8x32xf32>
    %373 = arith.mulf %368, %372 : vector<8x32xf32>
    %374 = vector.broadcast %352 : vector<1x32xf32> to vector<8x32xf32>
    %375 = arith.mulf %373, %374 : vector<8x32xf32>
    %376 = vector.broadcast %355 : vector<1x32xf32> to vector<8x32xf32>
    %377 = arith.addf %375, %376 : vector<8x32xf32>
    %c2_i32 = arith.constant 2 : i32
    %378 = vector.extract_strided_slice %377 {offsets = [0, 0], sizes = [1, 32], strides = [1, 1]} : vector<8x32xf32> to vector<1x32xf32>
    %c0_139 = arith.constant 0 : index
    %c0_140 = arith.constant 0 : index
    %379 = vector.load %arg21[%c0_139, %c0_140] : memref<32x16xbf16, #tpu.memory_space<vmem>>, vector<32x16xbf16>
    %380 = arith.truncf %378 : vector<1x32xf32> to vector<1x32xbf16>
    %cst_141 = arith.constant dense<0.000000e+00> : vector<1x16xf32>
    %381 = tpu.matmul %380, %379, %cst_141 {dimension_numbers = #tpu.dot_dimension_numbers<[1], [0], [0], [1], [0, 0, 1, 1], [], []>} : vector<1x32xbf16>, vector<32x16xbf16>, vector<1x16xf32> -> vector<1x16xf32>
    %c0_142 = arith.constant 0 : index
    %c0_143 = arith.constant 0 : index
    %382 = vector.load %arg22[%c0_142, %c0_143] : memref<1x16xf32, #tpu.memory_space<vmem>>, vector<1x16xf32>
    %383 = arith.addf %381, %382 : vector<1x16xf32>
    %cst_144 = arith.constant 0.000000e+00 : f32
    %384 = vector.broadcast %cst_144 : f32 to vector<1x16xf32>
    %385 = arith.maximumf %383, %384 : vector<1x16xf32>
    %c0_145 = arith.constant 0 : index
    %c0_146 = arith.constant 0 : index
    %386 = vector.load %arg23[%c0_145, %c0_146] : memref<16x3xbf16, #tpu.memory_space<vmem>>, vector<16x3xbf16>
    %387 = arith.truncf %385 : vector<1x16xf32> to vector<1x16xbf16>
    %cst_147 = arith.constant dense<0.000000e+00> : vector<1x3xf32>
    %388 = tpu.matmul %387, %386, %cst_147 {dimension_numbers = #tpu.dot_dimension_numbers<[1], [0], [0], [1], [0, 0, 1, 1], [], []>} : vector<1x16xbf16>, vector<16x3xbf16>, vector<1x3xf32> -> vector<1x3xf32>
    %c0_148 = arith.constant 0 : index
    %c0_149 = arith.constant 0 : index
    %389 = vector.load %arg24[%c0_148, %c0_149] : memref<1x3xf32, #tpu.memory_space<vmem>>, vector<1x3xf32>
    %390 = arith.addf %388, %389 : vector<1x3xf32>
    %cst_150 = arith.constant 0.000000e+00 : f32
    %391 = vector.broadcast %cst_150 : f32 to vector<1x3xf32>
    %392 = arith.subf %391, %390 : vector<1x3xf32>
    %393 = math.exp %392 : vector<1x3xf32>
    %cst_151 = arith.constant 1.000000e+00 : f32
    %394 = vector.broadcast %cst_151 : f32 to vector<1x3xf32>
    %395 = arith.addf %394, %393 : vector<1x3xf32>
    %cst_152 = arith.constant 1.000000e+00 : f32
    %396 = vector.broadcast %cst_152 : f32 to vector<1x3xf32>
    %397 = arith.divf %396, %395 : vector<1x3xf32>
    %c0_153 = arith.constant 0 : index
    %c0_154 = arith.constant 0 : index
    %c0_155 = arith.constant 0 : index
    %398 = vector.load %arg25[%c0_153, %c0_154, %c0_155] : memref<1x1x3xf32, #tpu.memory_space<vmem>>, vector<1x1x3xf32>
    %399 = vector.shape_cast %398 : vector<1x1x3xf32> to vector<1x3xf32>
    %400 = vector.shape_cast %397 : vector<1x3xf32> to vector<1x1x3xf32>
    tpu.vector_store %arg25[%c0_153, %c0_154, %c0_155], %400 {strides = array<i32>} : memref<1x1x3xf32, #tpu.memory_space<vmem>>, vector<1x1x3xf32>,
    return
  }
  func.func @transform_0(%arg0: i32) -> (i32, i32, i32) {
    %c0_i32 = arith.constant 0 : i32
    %c0_i32_0 = arith.constant 0 : i32
    %c0_i32_1 = arith.constant 0 : i32
    return %arg0, %c0_i32, %c0_i32_0 : i32, i32, i32
  }
  func.func @transform_1(%arg0: i32) -> (i32, i32, i32) {
    %c0_i32 = arith.constant 0 : i32
    %c0_i32_0 = arith.constant 0 : i32
    %c0_i32_1 = arith.constant 0 : i32
    return %arg0, %c0_i32, %c0_i32_0 : i32, i32, i32
  }
  func.func @transform_2(%arg0: i32) -> (i32, i32) {
    %c0_i32 = arith.constant 0 : i32
    %c0_i32_0 = arith.constant 0 : i32
    %c0_i32_1 = arith.constant 0 : i32
    return %c0_i32, %c0_i32_0 : i32, i32
  }
  func.func @transform_3(%arg0: i32) -> (i32, i32) {
    %c0_i32 = arith.constant 0 : i32
    %c0_i32_0 = arith.constant 0 : i32
    %c0_i32_1 = arith.constant 0 : i32
    return %c0_i32, %c0_i32_0 : i32, i32
  }
  func.func @transform_4(%arg0: i32) -> (i32, i32, i32) {
    %c0_i32 = arith.constant 0 : i32
    %c0_i32_0 = arith.constant 0 : i32
    %c0_i32_1 = arith.constant 0 : i32
    %c0_i32_2 = arith.constant 0 : i32
    return %c0_i32, %c0_i32_0, %c0_i32_1 : i32, i32, i32
  }
  func.func @transform_5(%arg0: i32) -> (i32, i32, i32) {
    %c0_i32 = arith.constant 0 : i32
    %c0_i32_0 = arith.constant 0 : i32
    %c0_i32_1 = arith.constant 0 : i32
    %c0_i32_2 = arith.constant 0 : i32
    return %c0_i32, %c0_i32_0, %c0_i32_1 : i32, i32, i32
  }
  func.func @transform_6(%arg0: i32) -> (i32, i32, i32) {
    %c0_i32 = arith.constant 0 : i32
    %c0_i32_0 = arith.constant 0 : i32
    %c0_i32_1 = arith.constant 0 : i32
    %c0_i32_2 = arith.constant 0 : i32
    return %c0_i32, %c0_i32_0, %c0_i32_1 : i32, i32, i32
  }
  func.func @transform_7(%arg0: i32) -> (i32, i32, i32) {
    %c0_i32 = arith.constant 0 : i32
    %c0_i32_0 = arith.constant 0 : i32
    %c0_i32_1 = arith.constant 0 : i32
    %c0_i32_2 = arith.constant 0 : i32
    return %c0_i32, %c0_i32_0, %c0_i32_1 : i32, i32, i32
  }
  func.func @transform_8(%arg0: i32) -> (i32, i32, i32) {
    %c0_i32 = arith.constant 0 : i32
    %c0_i32_0 = arith.constant 0 : i32
    %c0_i32_1 = arith.constant 0 : i32
    %c0_i32_2 = arith.constant 0 : i32
    return %c0_i32, %c0_i32_0, %c0_i32_1 : i32, i32, i32
  }
  func.func @transform_9(%arg0: i32) -> (i32, i32, i32) {
    %c0_i32 = arith.constant 0 : i32
    %c0_i32_0 = arith.constant 0 : i32
    %c0_i32_1 = arith.constant 0 : i32
    %c0_i32_2 = arith.constant 0 : i32
    return %c0_i32, %c0_i32_0, %c0_i32_1 : i32, i32, i32
  }
  func.func @transform_10(%arg0: i32) -> (i32, i32, i32) {
    %c0_i32 = arith.constant 0 : i32
    %c0_i32_0 = arith.constant 0 : i32
    %c0_i32_1 = arith.constant 0 : i32
    %c0_i32_2 = arith.constant 0 : i32
    return %c0_i32, %c0_i32_0, %c0_i32_1 : i32, i32, i32
  }
  func.func @transform_11(%arg0: i32) -> (i32, i32, i32) {
    %c0_i32 = arith.constant 0 : i32
    %c0_i32_0 = arith.constant 0 : i32
    %c0_i32_1 = arith.constant 0 : i32
    %c0_i32_2 = arith.constant 0 : i32
    return %c0_i32, %c0_i32_0, %c0_i32_1 : i32, i32, i32
  }
  func.func @transform_12(%arg0: i32) -> (i32, i32, i32) {
    %c0_i32 = arith.constant 0 : i32
    %c0_i32_0 = arith.constant 0 : i32
    %c0_i32_1 = arith.constant 0 : i32
    %c0_i32_2 = arith.constant 0 : i32
    return %c0_i32, %c0_i32_0, %c0_i32_1 : i32, i32, i32
  }
  func.func @transform_13(%arg0: i32) -> (i32, i32, i32) {
    %c0_i32 = arith.constant 0 : i32
    %c0_i32_0 = arith.constant 0 : i32
    %c0_i32_1 = arith.constant 0 : i32
    %c0_i32_2 = arith.constant 0 : i32
    return %c0_i32, %c0_i32_0, %c0_i32_1 : i32, i32, i32
  }
  func.func @transform_14(%arg0: i32) -> (i32, i32, i32) {
    %c0_i32 = arith.constant 0 : i32
    %c0_i32_0 = arith.constant 0 : i32
    %c0_i32_1 = arith.constant 0 : i32
    %c0_i32_2 = arith.constant 0 : i32
    return %c0_i32, %c0_i32_0, %c0_i32_1 : i32, i32, i32
  }
  func.func @transform_15(%arg0: i32) -> (i32, i32, i32) {
    %c0_i32 = arith.constant 0 : i32
    %c0_i32_0 = arith.constant 0 : i32
    %c0_i32_1 = arith.constant 0 : i32
    %c0_i32_2 = arith.constant 0 : i32
    return %c0_i32, %c0_i32_0, %c0_i32_1 : i32, i32, i32
  }
  func.func @transform_16(%arg0: i32) -> (i32, i32, i32) {
    %c0_i32 = arith.constant 0 : i32
    %c0_i32_0 = arith.constant 0 : i32
    %c0_i32_1 = arith.constant 0 : i32
    %c0_i32_2 = arith.constant 0 : i32
    return %c0_i32, %c0_i32_0, %c0_i32_1 : i32, i32, i32
  }
  func.func @transform_17(%arg0: i32) -> (i32, i32, i32) {
    %c0_i32 = arith.constant 0 : i32
    %c0_i32_0 = arith.constant 0 : i32
    %c0_i32_1 = arith.constant 0 : i32
    %c0_i32_2 = arith.constant 0 : i32
    return %c0_i32, %c0_i32_0, %c0_i32_1 : i32, i32, i32
  }
  func.func @transform_18(%arg0: i32) -> (i32, i32, i32) {
    %c0_i32 = arith.constant 0 : i32
    %c0_i32_0 = arith.constant 0 : i32
    %c0_i32_1 = arith.constant 0 : i32
    %c0_i32_2 = arith.constant 0 : i32
    return %c0_i32, %c0_i32_0, %c0_i32_1 : i32, i32, i32
  }
  func.func @transform_19(%arg0: i32) -> (i32, i32, i32) {
    %c0_i32 = arith.constant 0 : i32
    %c0_i32_0 = arith.constant 0 : i32
    %c0_i32_1 = arith.constant 0 : i32
    %c0_i32_2 = arith.constant 0 : i32
    return %c0_i32, %c0_i32_0, %c0_i32_1 : i32, i32, i32
  }
  func.func @transform_20(%arg0: i32) -> (i32, i32) {
    %c0_i32 = arith.constant 0 : i32
    %c0_i32_0 = arith.constant 0 : i32
    %c0_i32_1 = arith.constant 0 : i32
    return %c0_i32, %c0_i32_0 : i32, i32
  }
  func.func @transform_21(%arg0: i32) -> (i32, i32) {
    %c0_i32 = arith.constant 0 : i32
    %c0_i32_0 = arith.constant 0 : i32
    %c0_i32_1 = arith.constant 0 : i32
    return %c0_i32, %c0_i32_0 : i32, i32
  }
  func.func @transform_22(%arg0: i32) -> (i32, i32) {
    %c0_i32 = arith.constant 0 : i32
    %c0_i32_0 = arith.constant 0 : i32
    %c0_i32_1 = arith.constant 0 : i32
    return %c0_i32, %c0_i32_0 : i32, i32
  }
  func.func @transform_23(%arg0: i32) -> (i32, i32) {
    %c0_i32 = arith.constant 0 : i32
    %c0_i32_0 = arith.constant 0 : i32
    %c0_i32_1 = arith.constant 0 : i32
    return %c0_i32, %c0_i32_0 : i32, i32
  }
  func.func @transform_24(%arg0: i32) -> (i32, i32, i32) {
    %c0_i32 = arith.constant 0 : i32
    %c0_i32_0 = arith.constant 0 : i32
    %c0_i32_1 = arith.constant 0 : i32
    return %arg0, %c0_i32, %c0_i32_0 : i32, i32, i32
  }
}

</mosaic_0001>

<llo_original>
// kernel: forward.1
$region0: #{forward.1}
  #allocation0 [shape = 'u32[]', space=smem, size = 0x4, offset = 0x4, fixed_abs, tag = 'smem constant byte address 0x4 - core index']
  #allocation1 [shape = 'u32[144,128]{1,0:T(1,128)}', space=vmem, size = 0x12000, scoped, tag = 'internal scratch']
  %s0 = inlined_call_operand.vmem [shape: f32[2,8,32], index: 0, kind: input, shape index: {}]
  %s1 = inlined_call_operand.vmem [shape: f32[2,1,8], index: 1, kind: input, shape index: {}]
  %s2 = inlined_call_operand.vmem [shape: f32[1,32], index: 2, kind: input, shape index: {}]
  %s3 = inlined_call_operand.vmem [shape: f32[1,32], index: 3, kind: input, shape index: {}]
  %s4 = inlined_call_operand.vmem [shape: bf16[2,32,32], index: 4, kind: input, shape index: {}]
  %s5 = inlined_call_operand.vmem [shape: f32[2,1,32], index: 5, kind: input, shape index: {}]
  %s6 = inlined_call_operand.vmem [shape: bf16[2,32,32], index: 6, kind: input, shape index: {}]
  %s7 = inlined_call_operand.vmem [shape: f32[2,1,32], index: 7, kind: input, shape index: {}]
  %s8 = inlined_call_operand.vmem [shape: bf16[2,32,32], index: 8, kind: input, shape index: {}]
  %s9 = inlined_call_operand.vmem [shape: f32[2,1,32], index: 9, kind: input, shape index: {}]
  %s10 = inlined_call_operand.vmem [shape: bf16[2,32,32], index: 10, kind: input, shape index: {}]
  %s11 = inlined_call_operand.vmem [shape: f32[2,1,32], index: 11, kind: input, shape index: {}]
  %s12 = inlined_call_operand.vmem [shape: f32[2,1,32], index: 12, kind: input, shape index: {}]
  %s13 = inlined_call_operand.vmem [shape: f32[2,1,32], index: 13, kind: input, shape index: {}]
  %s14 = inlined_call_operand.vmem [shape: bf16[2,32,64], index: 14, kind: input, shape index: {}]
  %s15 = inlined_call_operand.vmem [shape: f32[2,1,64], index: 15, kind: input, shape index: {}]
  %s16 = inlined_call_operand.vmem [shape: bf16[2,64,32], index: 16, kind: input, shape index: {}]
  %s17 = inlined_call_operand.vmem [shape: f32[2,1,32], index: 17, kind: input, shape index: {}]
  %s18 = inlined_call_operand.vmem [shape: f32[2,1,32], index: 18, kind: input, shape index: {}]
  %s19 = inlined_call_operand.vmem [shape: f32[2,1,32], index: 19, kind: input, shape index: {}]
  %s20 = inlined_call_operand.vmem [shape: bf16[32,16], index: 20, kind: input, shape index: {}]
  %s21 = inlined_call_operand.vmem [shape: f32[1,16], index: 21, kind: input, shape index: {}]
  %s22 = inlined_call_operand.vmem [shape: bf16[16,3], index: 22, kind: input, shape index: {}]
  %s23 = inlined_call_operand.vmem [shape: f32[1,3], index: 23, kind: input, shape index: {}]
  %s24 = inlined_call_operand.hbm [shape: f32[2,1,3], index: 24, kind: output, shape index: {}]
  %s25 = sld [smem:[#allocation0]]
  $region129: #{forward.1} parent=0
    _
  %s27 = ssub.s32 1, %s25
  %s28 = scalar_select 0, %s27, %s25
  $region1: #{forward.1} parent=0
    #allocation2 [shape = 'u8[1024]{0}', space=vmem, size = 0x400, scoped, tag = 'output window, operand 0']
    #allocation3 [shape = 's32[2]{0}', space=sflag, size = 0x8, scoped, tag = 'scoped memory for forward.1']
    %29 = vsyncpa [#allocation3], 0
    %s30 = scalar_lea.sflag [#allocation3], 1
    %31 = vsyncpa %s30, 0
    loop: start=0, step=1, limit=4
    $region2: #{forward.1} parent=1 // loop_pre_header
      _
    $region3: #{forward.1} parent=1 // loop_header
      %s33 = sphi 0, %s37
      %p34 = scmp.ge.s32.totalorder %s33, 4
      %s43 = sphi 0, %s45
      %s46 = sphi 0, %s43
      %s47 = sphi 0, %s46
      %s63 = sphi 0, %s47
      %s69 = sphi 0, %s71
      %s72 = sphi 0, %s69
      %s73 = sphi 0, %s72
      %s89 = sphi 0, %s73
      %s93 = sphi 0, %s93
      %s95 = sphi 0, %s93
      %s96 = sphi 0, %s95
      %s110 = sphi 0, %s96
      %s114 = sphi 0, %s114
      %s116 = sphi 0, %s114
      %s117 = sphi 0, %s116
      %s131 = sphi 0, %s117
      %s135 = sphi 0, %s135
      %s137 = sphi 0, %s135
      %s138 = sphi 0, %s137
      %s152 = sphi 0, %s138
      %s156 = sphi 0, %s156
      %s158 = sphi 0, %s156
      %s159 = sphi 0, %s158
      %s173 = sphi 0, %s159
      %s177 = sphi 0, %s177
      %s179 = sphi 0, %s177
      %s180 = sphi 0, %s179
      %s194 = sphi 0, %s180
      %s198 = sphi 0, %s198
      %s200 = sphi 0, %s198
      %s201 = sphi 0, %s200
      %s215 = sphi 0, %s201
      %s219 = sphi 0, %s219
      %s221 = sphi 0, %s219
      %s222 = sphi 0, %s221
      %s236 = sphi 0, %s222
      %s240 = sphi 0, %s240
      %s242 = sphi 0, %s240
      %s243 = sphi 0, %s242
      %s257 = sphi 0, %s243
      %s261 = sphi 0, %s261
      %s263 = sphi 0, %s261
      %s264 = sphi 0, %s263
      %s278 = sphi 0, %s264
      %s282 = sphi 0, %s282
      %s284 = sphi 0, %s282
      %s285 = sphi 0, %s284
      %s299 = sphi 0, %s285
      %s303 = sphi 0, %s303
      %s305 = sphi 0, %s303
      %s306 = sphi 0, %s305
      %s320 = sphi 0, %s306
      %s324 = sphi 0, %s324
      %s326 = sphi 0, %s324
      %s327 = sphi 0, %s326
      %s341 = sphi 0, %s327
      %s345 = sphi 0, %s345
      %s347 = sphi 0, %s345
      %s348 = sphi 0, %s347
      %s362 = sphi 0, %s348
      %s366 = sphi 0, %s366
      %s368 = sphi 0, %s366
      %s369 = sphi 0, %s368
      %s383 = sphi 0, %s369
      %s387 = sphi 0, %s387
      %s389 = sphi 0, %s387
      %s390 = sphi 0, %s389
      %s404 = sphi 0, %s390
      %s408 = sphi 0, %s408
      %s410 = sphi 0, %s408
      %s411 = sphi 0, %s410
      %s425 = sphi 0, %s411
      %s429 = sphi 0, %s429
      %s431 = sphi 0, %s429
      %s432 = sphi 0, %s431
      %s446 = sphi 0, %s432
      %s450 = sphi 0, %s450
      %s452 = sphi 0, %s450
      %s453 = sphi 0, %s452
      %s467 = sphi 0, %s453
      %s471 = sphi 0, %s471
      %s473 = sphi 0, %s471
      %s474 = sphi 0, %s473
      %s488 = sphi 0, %s474
      %s492 = sphi 0, %s492
      %s494 = sphi 0, %s492
      %s495 = sphi 0, %s494
      %s509 = sphi 0, %s495
      %s513 = sphi 0, %s513
      %s515 = sphi 0, %s513
      %s516 = sphi 0, %s515
      %s530 = sphi 0, %s516
      %s534 = sphi 0, %s534
      %s536 = sphi 0, %s534
      %s537 = sphi 0, %s536
      %s551 = sphi 0, %s537
      %s557 = sphi 0, %s559
      %s560 = sphi 0, %s557
      %s561 = sphi 0, %s560
      %s577 = sphi 0, %s561
    $region4: #{forward.1} parent=1 // loop_header_branch
      %36 = sbr.rel (%p34) target = $region8
    $region5: #{forward.1} parent=1 // loop_body
      %s38 = ssub.s32 %s33, 1
      %s39 = ssub.s32 %s33, 2
      %s40 = sadd.s32 %s33, 1
      %s41 = ssub.s32 %s33, %s40
      %p42 = scmp.eq.s32.totalorder %s41, 0
      %s44 = sadd.s32 %s43, 1
      %s45 = scalar_select %p42, %s43, %s44
      %p48 = pneg %p42
      %p49 = scmp.eq.s32.totalorder %s33, 1
      %p50 = por %p48, %p49
      %p51 = scmp.ne.s32.totalorder %s43, %s46
      %p52 = scmp.eq.s32.totalorder %s33, 0
      %p53 = por %p51, %p52
      %p54 = scmp.ne.s32.totalorder %s43, %s46
      %p55 = scmp.eq.s32.totalorder %s38, 1
      %p56 = por %p54, %p55
      %p57 = scmp.ne.s32.totalorder %s46, %s47
      %p58 = scmp.eq.s32.totalorder %s38, 0
      %p59 = por %p57, %p58
      %p60 = scmp.ne.s32.totalorder %s46, %s47
      %p61 = scmp.eq.s32.totalorder %s39, 1
      %p62 = por %p60, %p61
      %p64 = scmp.ne.s32.totalorder %s47, %s63
      %p65 = scmp.eq.s32.totalorder %s39, 0
      %p66 = por %p64, %p65
      %s67 = ssub.s32 %s33, %s40
      %p68 = scmp.eq.s32.totalorder %s67, 0
      %s70 = sadd.s32 %s69, 1
      %s71 = scalar_select %p68, %s69, %s70
      %p74 = pneg %p68
      %p75 = scmp.eq.s32.totalorder %s33, 1
      %p76 = por %p74, %p75
      %p77 = scmp.ne.s32.totalorder %s69, %s72
      %p78 = scmp.eq.s32.totalorder %s33, 0
      %p79 = por %p77, %p78
      %p80 = scmp.ne.s32.totalorder %s69, %s72
      %p81 = scmp.eq.s32.totalorder %s38, 1
      %p82 = por %p80, %p81
      %p83 = scmp.ne.s32.totalorder %s72, %s73
      %p84 = scmp.eq.s32.totalorder %s38, 0
      %p85 = por %p83, %p84
      %p86 = scmp.ne.s32.totalorder %s72, %s73
      %p87 = scmp.eq.s32.totalorder %s39, 1
      %p88 = por %p86, %p87
      %p90 = scmp.ne.s32.totalorder %s73, %s89
      %p91 = scmp.eq.s32.totalorder %s39, 0
      %p92 = por %p90, %p91
      %s94 = sadd.s32 %s93, 1
      %p97 = scmp.eq.s32.totalorder %s33, 1
      %p98 = scmp.ne.s32.totalorder %s93, %s95
      %p99 = scmp.eq.s32.totalorder %s33, 0
      %p100 = por %p98, %p99
      %p101 = scmp.ne.s32.totalorder %s93, %s95
      %p102 = scmp.eq.s32.totalorder %s38, 1
      %p103 = por %p101, %p102
      %p104 = scmp.ne.s32.totalorder %s95, %s96
      %p105 = scmp.eq.s32.totalorder %s38, 0
      %p106 = por %p104, %p105
      %p107 = scmp.ne.s32.totalorder %s95, %s96
      %p108 = scmp.eq.s32.totalorder %s39, 1
      %p109 = por %p107, %p108
      %p111 = scmp.ne.s32.totalorder %s96, %s110
      %p112 = scmp.eq.s32.totalorder %s39, 0
      %p113 = por %p111, %p112
      %s115 = sadd.s32 %s114, 1
      %p118 = scmp.eq.s32.totalorder %s33, 1
      %p119 = scmp.ne.s32.totalorder %s114, %s116
      %p120 = scmp.eq.s32.totalorder %s33, 0
      %p121 = por %p119, %p120
      %p122 = scmp.ne.s32.totalorder %s114, %s116
      %p123 = scmp.eq.s32.totalorder %s38, 1
      %p124 = por %p122, %p123
      %p125 = scmp.ne.s32.totalorder %s116, %s117
      %p126 = scmp.eq.s32.totalorder %s38, 0
      %p127 = por %p125, %p126
      %p128 = scmp.ne.s32.totalorder %s116, %s117
      %p129 = scmp.eq.s32.totalorder %s39, 1
      %p130 = por %p128, %p129
      %p132 = scmp.ne.s32.totalorder %s117, %s131
      %p133 = scmp.eq.s32.totalorder %s39, 0
      %p134 = por %p132, %p133
      %s136 = sadd.s32 %s135, 1
      %p139 = scmp.eq.s32.totalorder %s33, 1
      %p140 = scmp.ne.s32.totalorder %s135, %s137
      %p141 = scmp.eq.s32.totalorder %s33, 0
      %p142 = por %p140, %p141
      %p143 = scmp.ne.s32.totalorder %s135, %s137
      %p144 = scmp.eq.s32.totalorder %s38, 1
      %p145 = por %p143, %p144
      %p146 = scmp.ne.s32.totalorder %s137, %s138
      %p147 = scmp.eq.s32.totalorder %s38, 0
      %p148 = por %p146, %p147
      %p149 = scmp.ne.s32.totalorder %s137, %s138
      %p150 = scmp.eq.s32.totalorder %s39, 1
      %p151 = por %p149, %p150
      %p153 = scmp.ne.s32.totalorder %s138, %s152
      %p154 = scmp.eq.s32.totalorder %s39, 0
      %p155 = por %p153, %p154
      %s157 = sadd.s32 %s156, 1
      %p160 = scmp.eq.s32.totalorder %s33, 1
      %p161 = scmp.ne.s32.totalorder %s156, %s158
      %p162 = scmp.eq.s32.totalorder %s33, 0
      %p163 = por %p161, %p162
      %p164 = scmp.ne.s32.totalorder %s156, %s158
      %p165 = scmp.eq.s32.totalorder %s38, 1
      %p166 = por %p164, %p165
      %p167 = scmp.ne.s32.totalorder %s158, %s159
      %p168 = scmp.eq.s32.totalorder %s38, 0
      %p169 = por %p167, %p168
      %p170 = scmp.ne.s32.totalorder %s158, %s159
      %p171 = scmp.eq.s32.totalorder %s39, 1
      %p172 = por %p170, %p171
      %p174 = scmp.ne.s32.totalorder %s159, %s173
      %p175 = scmp.eq.s32.totalorder %s39, 0
      %p176 = por %p174, %p175
      %s178 = sadd.s32 %s177, 1
      %p181 = scmp.eq.s32.totalorder %s33, 1
      %p182 = scmp.ne.s32.totalorder %s177, %s179
      %p183 = scmp.eq.s32.totalorder %s33, 0
      %p184 = por %p182, %p183
      %p185 = scmp.ne.s32.totalorder %s177, %s179
      %p186 = scmp.eq.s32.totalorder %s38, 1
      %p187 = por %p185, %p186
      %p188 = scmp.ne.s32.totalorder %s179, %s180
      %p189 = scmp.eq.s32.totalorder %s38, 0
      %p190 = por %p188, %p189
      %p191 = scmp.ne.s32.totalorder %s179, %s180
      %p192 = scmp.eq.s32.totalorder %s39, 1
      %p193 = por %p191, %p192
      %p195 = scmp.ne.s32.totalorder %s180, %s194
      %p196 = scmp.eq.s32.totalorder %s39, 0
      %p197 = por %p195, %p196
      %s199 = sadd.s32 %s198, 1
      %p202 = scmp.eq.s32.totalorder %s33, 1
      %p203 = scmp.ne.s32.totalorder %s198, %s200
      %p204 = scmp.eq.s32.totalorder %s33, 0
      %p205 = por %p203, %p204
      %p206 = scmp.ne.s32.totalorder %s198, %s200
      %p207 = scmp.eq.s32.totalorder %s38, 1
      %p208 = por %p206, %p207
      %p209 = scmp.ne.s32.totalorder %s200, %s201
      %p210 = scmp.eq.s32.totalorder %s38, 0
      %p211 = por %p209, %p210
      %p212 = scmp.ne.s32.totalorder %s200, %s201
      %p213 = scmp.eq.s32.totalorder %s39, 1
      %p214 = por %p212, %p213
      %p216 = scmp.ne.s32.totalorder %s201, %s215
      %p217 = scmp.eq.s32.totalorder %s39, 0
      %p218 = por %p216, %p217
      %s220 = sadd.s32 %s219, 1
      %p223 = scmp.eq.s32.totalorder %s33, 1
      %p224 = scmp.ne.s32.totalorder %s219, %s221
      %p225 = scmp.eq.s32.totalorder %s33, 0
      %p226 = por %p224, %p225
      %p227 = scmp.ne.s32.totalorder %s219, %s221
      %p228 = scmp.eq.s32.totalorder %s38, 1
      %p229 = por %p227, %p228
      %p230 = scmp.ne.s32.totalorder %s221, %s222
      %p231 = scmp.eq.s32.totalorder %s38, 0
      %p232 = por %p230, %p231
      %p233 = scmp.ne.s32.totalorder %s221, %s222
      %p234 = scmp.eq.s32.totalorder %s39, 1
      %p235 = por %p233, %p234
      %p237 = scmp.ne.s32.totalorder %s222, %s236
      %p238 = scmp.eq.s32.totalorder %s39, 0
      %p239 = por %p237, %p238
      %s241 = sadd.s32 %s240, 1
      %p244 = scmp.eq.s32.totalorder %s33, 1
      %p245 = scmp.ne.s32.totalorder %s240, %s242
      %p246 = scmp.eq.s32.totalorder %s33, 0
      %p247 = por %p245, %p246
      %p248 = scmp.ne.s32.totalorder %s240, %s242
      %p249 = scmp.eq.s32.totalorder %s38, 1
      %p250 = por %p248, %p249
      %p251 = scmp.ne.s32.totalorder %s242, %s243
      %p252 = scmp.eq.s32.totalorder %s38, 0
      %p253 = por %p251, %p252
      %p254 = scmp.ne.s32.totalorder %s242, %s243
      %p255 = scmp.eq.s32.totalorder %s39, 1
      %p256 = por %p254, %p255
      %p258 = scmp.ne.s32.totalorder %s243, %s257
      %p259 = scmp.eq.s32.totalorder %s39, 0
      %p260 = por %p258, %p259
      %s262 = sadd.s32 %s261, 1
      %p265 = scmp.eq.s32.totalorder %s33, 1
      %p266 = scmp.ne.s32.totalorder %s261, %s263
      %p267 = scmp.eq.s32.totalorder %s33, 0
      %p268 = por %p266, %p267
      %p269 = scmp.ne.s32.totalorder %s261, %s263
      %p270 = scmp.eq.s32.totalorder %s38, 1
      %p271 = por %p269, %p270
      %p272 = scmp.ne.s32.totalorder %s263, %s264
      %p273 = scmp.eq.s32.totalorder %s38, 0
      %p274 = por %p272, %p273
      %p275 = scmp.ne.s32.totalorder %s263, %s264
      %p276 = scmp.eq.s32.totalorder %s39, 1
      %p277 = por %p275, %p276
      %p279 = scmp.ne.s32.totalorder %s264, %s278
      %p280 = scmp.eq.s32.totalorder %s39, 0
      %p281 = por %p279, %p280
      %s283 = sadd.s32 %s282, 1
      %p286 = scmp.eq.s32.totalorder %s33, 1
      %p287 = scmp.ne.s32.totalorder %s282, %s284
      %p288 = scmp.eq.s32.totalorder %s33, 0
      %p289 = por %p287, %p288
      %p290 = scmp.ne.s32.totalorder %s282, %s284
      %p291 = scmp.eq.s32.totalorder %s38, 1
      %p292 = por %p290, %p291
      %p293 = scmp.ne.s32.totalorder %s284, %s285
      %p294 = scmp.eq.s32.totalorder %s38, 0
      %p295 = por %p293, %p294
      %p296 = scmp.ne.s32.totalorder %s284, %s285
      %p297 = scmp.eq.s32.totalorder %s39, 1
      %p298 = por %p296, %p297
      %p300 = scmp.ne.s32.totalorder %s285, %s299
      %p301 = scmp.eq.s32.totalorder %s39, 0
      %p302 = por %p300, %p301
      %s304 = sadd.s32 %s303, 1
      %p307 = scmp.eq.s32.totalorder %s33, 1
      %p308 = scmp.ne.s32.totalorder %s303, %s305
      %p309 = scmp.eq.s32.totalorder %s33, 0
      %p310 = por %p308, %p309
      %p311 = scmp.ne.s32.totalorder %s303, %s305
      %p312 = scmp.eq.s32.totalorder %s38, 1
      %p313 = por %p311, %p312
      %p314 = scmp.ne.s32.totalorder %s305, %s306
      %p315 = scmp.eq.s32.totalorder %s38, 0
      %p316 = por %p314, %p315
      %p317 = scmp.ne.s32.totalorder %s305, %s306
      %p318 = scmp.eq.s32.totalorder %s39, 1
      %p319 = por %p317, %p318
      %p321 = scmp.ne.s32.totalorder %s306, %s320
      %p322 = scmp.eq.s32.totalorder %s39, 0
      %p323 = por %p321, %p322
      %s325 = sadd.s32 %s324, 1
      %p328 = scmp.eq.s32.totalorder %s33, 1
      %p329 = scmp.ne.s32.totalorder %s324, %s326
      %p330 = scmp.eq.s32.totalorder %s33, 0
      %p331 = por %p329, %p330
      %p332 = scmp.ne.s32.totalorder %s324, %s326
      %p333 = scmp.eq.s32.totalorder %s38, 1
      %p334 = por %p332, %p333
      %p335 = scmp.ne.s32.totalorder %s326, %s327
      %p336 = scmp.eq.s32.totalorder %s38, 0
      %p337 = por %p335, %p336
      %p338 = scmp.ne.s32.totalorder %s326, %s327
      %p339 = scmp.eq.s32.totalorder %s39, 1
      %p340 = por %p338, %p339
      %p342 = scmp.ne.s32.totalorder %s327, %s341
      %p343 = scmp.eq.s32.totalorder %s39, 0
      %p344 = por %p342, %p343
      %s346 = sadd.s32 %s345, 1
      %p349 = scmp.eq.s32.totalorder %s33, 1
      %p350 = scmp.ne.s32.totalorder %s345, %s347
      %p351 = scmp.eq.s32.totalorder %s33, 0
      %p352 = por %p350, %p351
      %p353 = scmp.ne.s32.totalorder %s345, %s347
      %p354 = scmp.eq.s32.totalorder %s38, 1
      %p355 = por %p353, %p354
      %p356 = scmp.ne.s32.totalorder %s347, %s348
      %p357 = scmp.eq.s32.totalorder %s38, 0
      %p358 = por %p356, %p357
      %p359 = scmp.ne.s32.totalorder %s347, %s348
      %p360 = scmp.eq.s32.totalorder %s39, 1
      %p361 = por %p359, %p360
      %p363 = scmp.ne.s32.totalorder %s348, %s362
      %p364 = scmp.eq.s32.totalorder %s39, 0
      %p365 = por %p363, %p364
      %s367 = sadd.s32 %s366, 1
      %p370 = scmp.eq.s32.totalorder %s33, 1
      %p371 = scmp.ne.s32.totalorder %s366, %s368
      %p372 = scmp.eq.s32.totalorder %s33, 0
      %p373 = por %p371, %p372
      %p374 = scmp.ne.s32.totalorder %s366, %s368
      %p375 = scmp.eq.s32.totalorder %s38, 1
      %p376 = por %p374, %p375
      %p377 = scmp.ne.s32.totalorder %s368, %s369
      %p378 = scmp.eq.s32.totalorder %s38, 0
      %p379 = por %p377, %p378
      %p380 = scmp.ne.s32.totalorder %s368, %s369
      %p381 = scmp.eq.s32.totalorder %s39, 1
      %p382 = por %p380, %p381
      %p384 = scmp.ne.s32.totalorder %s369, %s383
      %p385 = scmp.eq.s32.totalorder %s39, 0
      %p386 = por %p384, %p385
      %s388 = sadd.s32 %s387, 1
      %p391 = scmp.eq.s32.totalorder %s33, 1
      %p392 = scmp.ne.s32.totalorder %s387, %s389
      %p393 = scmp.eq.s32.totalorder %s33, 0
      %p394 = por %p392, %p393
      %p395 = scmp.ne.s32.totalorder %s387, %s389
      %p396 = scmp.eq.s32.totalorder %s38, 1
      %p397 = por %p395, %p396
      %p398 = scmp.ne.s32.totalorder %s389, %s390
      %p399 = scmp.eq.s32.totalorder %s38, 0
      %p400 = por %p398, %p399
      %p401 = scmp.ne.s32.totalorder %s389, %s390
      %p402 = scmp.eq.s32.totalorder %s39, 1
      %p403 = por %p401, %p402
      %p405 = scmp.ne.s32.totalorder %s390, %s404
      %p406 = scmp.eq.s32.totalorder %s39, 0
      %p407 = por %p405, %p406
      %s409 = sadd.s32 %s408, 1
      %p412 = scmp.eq.s32.totalorder %s33, 1
      %p413 = scmp.ne.s32.totalorder %s408, %s410
      %p414 = scmp.eq.s32.totalorder %s33, 0
      %p415 = por %p413, %p414
      %p416 = scmp.ne.s32.totalorder %s408, %s410
      %p417 = scmp.eq.s32.totalorder %s38, 1
      %p418 = por %p416, %p417
      %p419 = scmp.ne.s32.totalorder %s410, %s411
      %p420 = scmp.eq.s32.totalorder %s38, 0
      %p421 = por %p419, %p420
      %p422 = scmp.ne.s32.totalorder %s410, %s411
      %p423 = scmp.eq.s32.totalorder %s39, 1
      %p424 = por %p422, %p423
      %p426 = scmp.ne.s32.totalorder %s411, %s425
      %p427 = scmp.eq.s32.totalorder %s39, 0
      %p428 = por %p426, %p427
      %s430 = sadd.s32 %s429, 1
      %p433 = scmp.eq.s32.totalorder %s33, 1
      %p434 = scmp.ne.s32.totalorder %s429, %s431
      %p435 = scmp.eq.s32.totalorder %s33, 0
      %p436 = por %p434, %p435
      %p437 = scmp.ne.s32.totalorder %s429, %s431
      %p438 = scmp.eq.s32.totalorder %s38, 1
      %p439 = por %p437, %p438
      %p440 = scmp.ne.s32.totalorder %s431, %s432
      %p441 = scmp.eq.s32.totalorder %s38, 0
      %p442 = por %p440, %p441
      %p443 = scmp.ne.s32.totalorder %s431, %s432
      %p444 = scmp.eq.s32.totalorder %s39, 1
      %p445 = por %p443, %p444
      %p447 = scmp.ne.s32.totalorder %s432, %s446
      %p448 = scmp.eq.s32.totalorder %s39, 0
      %p449 = por %p447, %p448
      %s451 = sadd.s32 %s450, 1
      %p454 = scmp.eq.s32.totalorder %s33, 1
      %p455 = scmp.ne.s32.totalorder %s450, %s452
      %p456 = scmp.eq.s32.totalorder %s33, 0
      %p457 = por %p455, %p456
      %p458 = scmp.ne.s32.totalorder %s450, %s452
      %p459 = scmp.eq.s32.totalorder %s38, 1
      %p460 = por %p458, %p459
      %p461 = scmp.ne.s32.totalorder %s452, %s453
      %p462 = scmp.eq.s32.totalorder %s38, 0
      %p463 = por %p461, %p462
      %p464 = scmp.ne.s32.totalorder %s452, %s453
      %p465 = scmp.eq.s32.totalorder %s39, 1
      %p466 = por %p464, %p465
      %p468 = scmp.ne.s32.totalorder %s453, %s467
      %p469 = scmp.eq.s32.totalorder %s39, 0
      %p470 = por %p468, %p469
      %s472 = sadd.s32 %s471, 1
      %p475 = scmp.eq.s32.totalorder %s33, 1
      %p476 = scmp.ne.s32.totalorder %s471, %s473
      %p477 = scmp.eq.s32.totalorder %s33, 0
      %p478 = por %p476, %p477
      %p479 = scmp.ne.s32.totalorder %s471, %s473
      %p480 = scmp.eq.s32.totalorder %s38, 1
      %p481 = por %p479, %p480
      %p482 = scmp.ne.s32.totalorder %s473, %s474
      %p483 = scmp.eq.s32.totalorder %s38, 0
      %p484 = por %p482, %p483
      %p485 = scmp.ne.s32.totalorder %s473, %s474
      %p486 = scmp.eq.s32.totalorder %s39, 1
      %p487 = por %p485, %p486
      %p489 = scmp.ne.s32.totalorder %s474, %s488
      %p490 = scmp.eq.s32.totalorder %s39, 0
      %p491 = por %p489, %p490
      %s493 = sadd.s32 %s492, 1
      %p496 = scmp.eq.s32.totalorder %s33, 1
      %p497 = scmp.ne.s32.totalorder %s492, %s494
      %p498 = scmp.eq.s32.totalorder %s33, 0
      %p499 = por %p497, %p498
      %p500 = scmp.ne.s32.totalorder %s492, %s494
      %p501 = scmp.eq.s32.totalorder %s38, 1
      %p502 = por %p500, %p501
      %p503 = scmp.ne.s32.totalorder %s494, %s495
      %p504 = scmp.eq.s32.totalorder %s38, 0
      %p505 = por %p503, %p504
      %p506 = scmp.ne.s32.totalorder %s494, %s495
      %p507 = scmp.eq.s32.totalorder %s39, 1
      %p508 = por %p506, %p507
      %p510 = scmp.ne.s32.totalorder %s495, %s509
      %p511 = scmp.eq.s32.totalorder %s39, 0
      %p512 = por %p510, %p511
      %s514 = sadd.s32 %s513, 1
      %p517 = scmp.eq.s32.totalorder %s33, 1
      %p518 = scmp.ne.s32.totalorder %s513, %s515
      %p519 = scmp.eq.s32.totalorder %s33, 0
      %p520 = por %p518, %p519
      %p521 = scmp.ne.s32.totalorder %s513, %s515
      %p522 = scmp.eq.s32.totalorder %s38, 1
      %p523 = por %p521, %p522
      %p524 = scmp.ne.s32.totalorder %s515, %s516
      %p525 = scmp.eq.s32.totalorder %s38, 0
      %p526 = por %p524, %p525
      %p527 = scmp.ne.s32.totalorder %s515, %s516
      %p528 = scmp.eq.s32.totalorder %s39, 1
      %p529 = por %p527, %p528
      %p531 = scmp.ne.s32.totalorder %s516, %s530
      %p532 = scmp.eq.s32.totalorder %s39, 0
      %p533 = por %p531, %p532
      %s535 = sadd.s32 %s534, 1
      %p538 = scmp.eq.s32.totalorder %s33, 1
      %p539 = scmp.ne.s32.totalorder %s534, %s536
      %p540 = scmp.eq.s32.totalorder %s33, 0
      %p541 = por %p539, %p540
      %p542 = scmp.ne.s32.totalorder %s534, %s536
      %p543 = scmp.eq.s32.totalorder %s38, 1
      %p544 = por %p542, %p543
      %p545 = scmp.ne.s32.totalorder %s536, %s537
      %p546 = scmp.eq.s32.totalorder %s38, 0
      %p547 = por %p545, %p546
      %p548 = scmp.ne.s32.totalorder %s536, %s537
      %p549 = scmp.eq.s32.totalorder %s39, 1
      %p550 = por %p548, %p549
      %p552 = scmp.ne.s32.totalorder %s537, %s551
      %p553 = scmp.eq.s32.totalorder %s39, 0
      %p554 = por %p552, %p553
      %s555 = ssub.s32 %s33, %s40
      %p556 = scmp.eq.s32.totalorder %s555, 0
      %s558 = sadd.s32 %s557, 1
      %s559 = scalar_select %p556, %s557, %s558
      %p562 = pneg %p556
      %p563 = scmp.eq.s32.totalorder %s33, 1
      %p564 = por %p562, %p563
      %p565 = scmp.ne.s32.totalorder %s557, %s560
      %p566 = scmp.eq.s32.totalorder %s33, 0
      %p567 = por %p565, %p566
      %p568 = scmp.ne.s32.totalorder %s557, %s560
      %p569 = scmp.eq.s32.totalorder %s38, 1
      %p570 = por %p568, %p569
      %p571 = scmp.ne.s32.totalorder %s560, %s561
      %p572 = scmp.eq.s32.totalorder %s38, 0
      %p573 = por %p571, %p572
      %p574 = scmp.ne.s32.totalorder %s560, %s561
      %p575 = scmp.eq.s32.totalorder %s39, 1
      %p576 = por %p574, %p575
      %p578 = scmp.ne.s32.totalorder %s561, %s577
      %p579 = scmp.eq.s32.totalorder %s39, 0
      %p580 = por %p578, %p579
      %p581 = scmp.le.s32.totalorder 1, %s33
      %p582 = scmp.lt.s32.totalorder %s33, 3
      %p583 = pnand %p581, %p582
      %p584 = pneg %p583
      // Predicated region
      $region9: #{forward.1} parent=5 // pred_check
        _
      $region10: #{forward.1} parent=5 // pred_check_branch
        %586 = sbr.rel (%p583) target = $region12
      $region11: #{forward.1} parent=5 // pred_region
        %s587 = ssub.s32 %s33, 1
        // Predicated region
        $region13: #{forward.1} parent=11 // pred_check
          %p588 = pneg %p106
        $region14: #{forward.1} parent=11 // pred_check_branch
          %590 = sbr.rel (%p588) target = $region16
        $region15: #{forward.1} parent=11 // pred_region
          _
        $region16: #{forward.1} parent=11 // pred_fallthru
          _
        // Predicated region
        $region17: #{forward.1} parent=11 // pred_check
          %p591 = pneg %p127
        $region18: #{forward.1} parent=11 // pred_check_branch
          %593 = sbr.rel (%p591) target = $region20
        $region19: #{forward.1} parent=11 // pred_region
          _
        $region20: #{forward.1} parent=11 // pred_fallthru
          _
        // Predicated region
        $region21: #{forward.1} parent=11 // pred_check
          %p594 = pneg %p148
        $region22: #{forward.1} parent=11 // pred_check_branch
          %596 = sbr.rel (%p594) target = $region24
        $region23: #{forward.1} parent=11 // pred_region
          _
        $region24: #{forward.1} parent=11 // pred_fallthru
          _
        // Predicated region
        $region25: #{forward.1} parent=11 // pred_check
          %p597 = pneg %p169
        $region26: #{forward.1} parent=11 // pred_check_branch
          %599 = sbr.rel (%p597) target = $region28
        $region27: #{forward.1} parent=11 // pred_region
          _
        $region28: #{forward.1} parent=11 // pred_fallthru
          _
        // Predicated region
        $region29: #{forward.1} parent=11 // pred_check
          %p600 = pneg %p190
        $region30: #{forward.1} parent=11 // pred_check_branch
          %602 = sbr.rel (%p600) target = $region32
        $region31: #{forward.1} parent=11 // pred_region
          _
        $region32: #{forward.1} parent=11 // pred_fallthru
          _
        // Predicated region
        $region33: #{forward.1} parent=11 // pred_check
          %p603 = pneg %p211
        $region34: #{forward.1} parent=11 // pred_check_branch
          %605 = sbr.rel (%p603) target = $region36
        $region35: #{forward.1} parent=11 // pred_region
          _
        $region36: #{forward.1} parent=11 // pred_fallthru
          _
        // Predicated region
        $region37: #{forward.1} parent=11 // pred_check
          %p606 = pneg %p232
        $region38: #{forward.1} parent=11 // pred_check_branch
          %608 = sbr.rel (%p606) target = $region40
        $region39: #{forward.1} parent=11 // pred_region
          _
        $region40: #{forward.1} parent=11 // pred_fallthru
          _
        // Predicated region
        $region41: #{forward.1} parent=11 // pred_check
          %p609 = pneg %p253
        $region42: #{forward.1} parent=11 // pred_check_branch
          %611 = sbr.rel (%p609) target = $region44
        $region43: #{forward.1} parent=11 // pred_region
          _
        $region44: #{forward.1} parent=11 // pred_fallthru
          _
        // Predicated region
        $region45: #{forward.1} parent=11 // pred_check
          %p612 = pneg %p274
        $region46: #{forward.1} parent=11 // pred_check_branch
          %614 = sbr.rel (%p612) target = $region48
        $region47: #{forward.1} parent=11 // pred_region
          _
        $region48: #{forward.1} parent=11 // pred_fallthru
          _
        // Predicated region
        $region49: #{forward.1} parent=11 // pred_check
          %p615 = pneg %p295
        $region50: #{forward.1} parent=11 // pred_check_branch
          %617 = sbr.rel (%p615) target = $region52
        $region51: #{forward.1} parent=11 // pred_region
          _
        $region52: #{forward.1} parent=11 // pred_fallthru
          _
        // Predicated region
        $region53: #{forward.1} parent=11 // pred_check
          %p618 = pneg %p316
        $region54: #{forward.1} parent=11 // pred_check_branch
          %620 = sbr.rel (%p618) target = $region56
        $region55: #{forward.1} parent=11 // pred_region
          _
        $region56: #{forward.1} parent=11 // pred_fallthru
          _
        // Predicated region
        $region57: #{forward.1} parent=11 // pred_check
          %p621 = pneg %p337
        $region58: #{forward.1} parent=11 // pred_check_branch
          %623 = sbr.rel (%p621) target = $region60
        $region59: #{forward.1} parent=11 // pred_region
          _
        $region60: #{forward.1} parent=11 // pred_fallthru
          _
        // Predicated region
        $region61: #{forward.1} parent=11 // pred_check
          %p624 = pneg %p358
        $region62: #{forward.1} parent=11 // pred_check_branch
          %626 = sbr.rel (%p624) target = $region64
        $region63: #{forward.1} parent=11 // pred_region
          _
        $region64: #{forward.1} parent=11 // pred_fallthru
          _
        // Predicated region
        $region65: #{forward.1} parent=11 // pred_check
          %p627 = pneg %p379
        $region66: #{forward.1} parent=11 // pred_check_branch
          %629 = sbr.rel (%p627) target = $region68
        $region67: #{forward.1} parent=11 // pred_region
          _
        $region68: #{forward.1} parent=11 // pred_fallthru
          _
        // Predicated region
        $region69: #{forward.1} parent=11 // pred_check
          %p630 = pneg %p400
        $region70: #{forward.1} parent=11 // pred_check_branch
          %632 = sbr.rel (%p630) target = $region72
        $region71: #{forward.1} parent=11 // pred_region
          _
        $region72: #{forward.1} parent=11 // pred_fallthru
          _
        // Predicated region
        $region73: #{forward.1} parent=11 // pred_check
          %p633 = pneg %p421
        $region74: #{forward.1} parent=11 // pred_check_branch
          %635 = sbr.rel (%p633) target = $region76
        $region75: #{forward.1} parent=11 // pred_region
          _
        $region76: #{forward.1} parent=11 // pred_fallthru
          _
        // Predicated region
        $region77: #{forward.1} parent=11 // pred_check
          %p636 = pneg %p442
        $region78: #{forward.1} parent=11 // pred_check_branch
          %638 = sbr.rel (%p636) target = $region80
        $region79: #{forward.1} parent=11 // pred_region
          _
        $region80: #{forward.1} parent=11 // pred_fallthru
          _
        // Predicated region
        $region81: #{forward.1} parent=11 // pred_check
          %p639 = pneg %p463
        $region82: #{forward.1} parent=11 // pred_check_branch
          %641 = sbr.rel (%p639) target = $region84
        $region83: #{forward.1} parent=11 // pred_region
          _
        $region84: #{forward.1} parent=11 // pred_fallthru
          _
        // Predicated region
        $region85: #{forward.1} parent=11 // pred_check
          %p642 = pneg %p484
        $region86: #{forward.1} parent=11 // pred_check_branch
          %644 = sbr.rel (%p642) target = $region88
        $region87: #{forward.1} parent=11 // pred_region
          _
        $region88: #{forward.1} parent=11 // pred_fallthru
          _
        // Predicated region
        $region89: #{forward.1} parent=11 // pred_check
          %p645 = pneg %p505
        $region90: #{forward.1} parent=11 // pred_check_branch
          %647 = sbr.rel (%p645) target = $region92
        $region91: #{forward.1} parent=11 // pred_region
          _
        $region92: #{forward.1} parent=11 // pred_fallthru
          _
        // Predicated region
        $region93: #{forward.1} parent=11 // pred_check
          %p648 = pneg %p526
        $region94: #{forward.1} parent=11 // pred_check_branch
          %650 = sbr.rel (%p648) target = $region96
        $region95: #{forward.1} parent=11 // pred_region
          _
        $region96: #{forward.1} parent=11 // pred_fallthru
          _
        // Predicated region
        $region97: #{forward.1} parent=11 // pred_check
          %p651 = pneg %p547
        $region98: #{forward.1} parent=11 // pred_check_branch
          %653 = sbr.rel (%p651) target = $region100
        $region99: #{forward.1} parent=11 // pred_region
          _
        $region100: #{forward.1} parent=11 // pred_fallthru
          _
      $region12: #{forward.1} parent=5 // pred_fallthru
        _
      %p654 = scmp.lt.s32.totalorder %s33, 2
      // Predicated region
      $region101: #{forward.1} parent=5 // pred_check
        %p655 = pneg %p654
      $region102: #{forward.1} parent=5 // pred_check_branch
        %657 = sbr.rel (%p655) target = $region104
      $region103: #{forward.1} parent=5 // pred_region
        // Predicated region
        $region105: #{forward.1} parent=103 // pred_check
          %p658 = pneg %p53
        $region106: #{forward.1} parent=103 // pred_check_branch
          %660 = sbr.rel (%p658) target = $region108
        $region107: #{forward.1} parent=103 // pred_region
          %p661 = scmp.lt.s32.totalorder %s33, 1
          %s662 = scalar_select %p661, %s33, 1
          %s663 = smul.addr %s662, 8
          %s664 = scalar_lea.vmem %s0, %s663
        $region108: #{forward.1} parent=103 // pred_fallthru
          _
        // Predicated region
        $region109: #{forward.1} parent=103 // pred_check
          %p665 = pneg %p79
        $region110: #{forward.1} parent=103 // pred_check_branch
          %667 = sbr.rel (%p665) target = $region112
        $region111: #{forward.1} parent=103 // pred_region
          %p668 = scmp.lt.s32.totalorder %s33, 1
          %s669 = scalar_select %p668, %s33, 1
          %s670 = scalar_lea.vmem %s1, %s669
        $region112: #{forward.1} parent=103 // pred_fallthru
          _
      $region104: #{forward.1} parent=5 // pred_fallthru
        _
      %p671 = scmp.le.s32.totalorder 1, %s33
      %p672 = scmp.lt.s32.totalorder %s33, 3
      %p673 = pnand %p671, %p672
      %p674 = pneg %p673
      // Predicated region
      $region113: #{forward.1} parent=5 // pred_check
        _
      $region114: #{forward.1} parent=5 // pred_check_branch
        %676 = sbr.rel (%p673) target = $region116
      $region115: #{forward.1} parent=5 // pred_region
        %s677 = ssub.s32 %s33, 1
        %p678 = scmp.lt.s32.totalorder %s38, 1
        %s679 = scalar_select %p678, %s38, 1
        %s680 = smul.addr %s679, 8
        %s681 = scalar_lea.vmem %s0, %s680
        %p682 = pneg %p59
        %p683 = pneg %p56
        %p684 = scmp.lt.s32.totalorder %s38, 1
        %s685 = scalar_select %p684, %s38, 1
        %s686 = scalar_lea.vmem %s1, %s685
        %p687 = pneg %p85
        %p688 = pneg %p82
        %p689 = pneg %p106
        %p690 = pneg %p103
        %p691 = pneg %p127
        %p692 = pneg %p124
        %p693 = pneg %p148
        %p694 = pneg %p145
        %p695 = pneg %p169
        %p696 = pneg %p166
        %p697 = pneg %p190
        %p698 = pneg %p187
        %p699 = pneg %p211
        %p700 = pneg %p208
        %p701 = pneg %p232
        %p702 = pneg %p229
        %p703 = pneg %p253
        %p704 = pneg %p250
        %p705 = pneg %p274
        %p706 = pneg %p271
        %p707 = pneg %p295
        %p708 = pneg %p292
        %p709 = pneg %p316
        %p710 = pneg %p313
        %p711 = pneg %p337
        %p712 = pneg %p334
        %p713 = pneg %p358
        %p714 = pneg %p355
        %p715 = pneg %p379
        %p716 = pneg %p376
        %p717 = pneg %p400
        %p718 = pneg %p397
        %p719 = pneg %p421
        %p720 = pneg %p418
        %p721 = pneg %p442
        %p722 = pneg %p439
        %p723 = pneg %p463
        %p724 = pneg %p460
        %p725 = pneg %p484
        %p726 = pneg %p481
        %p727 = pneg %p505
        %p728 = pneg %p502
        %p729 = pneg %p526
        %p730 = pneg %p523
        %p731 = pneg %p547
        %p732 = pneg %p544
        %p733 = pneg %p573
        %p734 = pneg %p570
        %s735 = sand.u32 %s560, 1
        %s736 = scalar_lea.sflag [#allocation3], %s735
        %s737 = sand.u32 %s560, 1
        %s738 = scalar_lea.vmem [#allocation2], %s737
        %p739 = scmp.lt.s32.totalorder %s38, 1
        %s740 = scalar_select %p739, %s38, 1
        %s741 = smul.addr %s740, 8
        %s742 = scalar_lea.vmem %s0, %s741
        %p743 = scmp.lt.s32.totalorder %s38, 1
        %s744 = scalar_select %p743, %s38, 1
        %s745 = scalar_lea.vmem %s1, %s744
        %v747 = vld [vmem:[%s742] sm:$0xff]
        %v748 = vld [vmem:[%s2] sm:$0x1]
        %v749 = vld [vmem:[%s3] sm:$0x1]
        %vm750 = vcmask 261120
        %v751 = vsel %vm750, %v747, 0.0
        %752 = vadd.xlane.f32.xlu0 %v751
        %v753 = vpop.xlane.xlu0 %752
        %v754 = vrcp.pop 32.0
        %v755 = vmul.f32 %v753, %v754
        %v756 = vsub.f32 %v747, %v755
        %v757 = vmul.f32 %v756, %v756
        %v758 = vsel %vm750, %v757, 0.0
        %759 = vadd.xlane.f32.xlu0 %v758
        %v760 = vpop.xlane.xlu0 %759
        %v761 = vmul.f32 %v760, %v754
        %v762 = vadd.f32 %v761, 1e-12
        %v763 = vrsqrt.pop %v762
        %v764 = vmul.f32 %v756, %v763
        %v766 = vlaneseq
        %v767 = vshrl.u32 %v766, 7
        %v768 = vsub.s32 0, %v767
        %v769 = vrot.slane %v748, %v768
        %v771 = vmul.f32 %v764, %v769
        %v773 = vlaneseq
        %v774 = vshrl.u32 %v773, 7
        %v775 = vsub.s32 0, %v774
        %v776 = vrot.slane %v749, %v775
        %v778 = vadd.f32 %v771, %v776
        %v779 = vld [vmem:[%s745] sm:$0x1]
        %v780 = vld [vmem:[%s4] sm:$0xf]
        %v781 = vld [vmem:[%s4 + $0x4] sm:$0xf]
        %v782 = vld [vmem:[%s4 + $0x8] sm:$0xf]
        %v783 = vld [vmem:[%s4 + $0xc] sm:$0xf]
        %v784 = vpack.c.bf16 %v778, %v778
        %v785 = vld [vmem:[%s5] sm:$0x1]
        %v787 = vlaneseq
        %v788 = vshrl.u32 %v787, 7
        %v789 = vsub.s32 0, %v788
        %v790 = vrot.slane %v785, %v789
        %v796 = vunpack.c.l.b16 %v780
        %v797 = vunpack.c.l.b16 %v781
        %v798 = vunpack.c.l.b16 %v782
        %v799 = vunpack.c.l.b16 %v783
        %v800 = vpack.c.b16 %v797, %v796
        %v801 = vpack.c.b16 %v799, %v798
        %v805 = vsel %vm750, %v784, 0
        %807 = vmatprep.subr.bf16.mxu0 0
        %808 = vmatpush1.bf16.msra.mxu0 %v800
        %809 = vmatprep.subr.bf16.mxu0 0
        %810 = vmatpush1.bf16.msra.mxu0 %v801
        %811 = vmatprep.subr.bf16.mxu0 0
        %812 = vmatpush1.bf16.msra.mxu0 0
        %813 = vmatprep.subr.bf16.mxu0 0
        %814 = vmatpush1.bf16.msra.mxu0 0
        %815 = vmatprep.subr.bf16.mxu0 0
        %816 = vmatpush1.bf16.msra.mxu0 0
        %817 = vmatprep.subr.bf16.mxu0 0
        %818 = vmatpush1.bf16.msra.mxu0 0
        %819 = vmatprep.subr.bf16.mxu0 0
        %820 = vmatpush1.bf16.msra.mxu0 0
        %821 = vmatprep.subr.bf16.mxu0 0
        %822 = vmatpush1.bf16.msra.mxu0 0
        %823 = vmatprep.subr.bf16.mxu0 0
        %824 = vmatpush1.bf16.msra.mxu0 0
        %825 = vmatprep.subr.bf16.mxu0 0
        %826 = vmatpush1.bf16.msra.mxu0 0
        %827 = vmatprep.subr.bf16.mxu0 0
        %828 = vmatpush1.bf16.msra.mxu0 0
        %829 = vmatprep.subr.bf16.mxu0 0
        %830 = vmatpush1.bf16.msra.mxu0 0
        %831 = vmatprep.subr.bf16.mxu0 0
        %832 = vmatpush1.bf16.msra.mxu0 0
        %833 = vmatprep.subr.bf16.mxu0 0
        %834 = vmatpush1.bf16.msra.mxu0 0
        %835 = vmatprep.subr.bf16.mxu0 0
        %836 = vmatpush1.bf16.msra.mxu0 0
        %837 = vmatprep.subr.bf16.mxu0 0
        %838 = vmatpush1.bf16.msra.mxu0 0
        %839 = vmatprep.mubr.bf16.mxu0 0
        %840 = vmatmul.mubr.bf16.gmra.mrb[0].mxu0 %v805
        %v841 = vpop.f32.mrb[0].mxu0
        %v842 = vadd.f32 %v790, %v841
        %v843 = vpop.f32.mrb[0].mxu0
        %v844 = vpop.f32.mrb[0].mxu0
        %v845 = vpop.f32.mrb[0].mxu0
        %846 = vdwg.mxu0
        %v847 = vld [vmem:[%s6] sm:$0xf]
        %v848 = vld [vmem:[%s6 + $0x4] sm:$0xf]
        %v849 = vld [vmem:[%s6 + $0x8] sm:$0xf]
        %v850 = vld [vmem:[%s6 + $0xc] sm:$0xf]
        %v851 = vld [vmem:[%s7] sm:$0x1]
        %v853 = vlaneseq
        %v854 = vshrl.u32 %v853, 7
        %v855 = vsub.s32 0, %v854
        %v856 = vrot.slane %v851, %v855
        %v862 = vunpack.c.l.b16 %v847
        %v863 = vunpack.c.l.b16 %v848
        %v864 = vunpack.c.l.b16 %v849
        %v865 = vunpack.c.l.b16 %v850
        %v866 = vpack.c.b16 %v863, %v862
        %v867 = vpack.c.b16 %v865, %v864
        %870 = vmatprep.subr.bf16.mxu0 0
        %871 = vmatpush1.bf16.msra.mxu0 %v866
        %872 = vmatprep.subr.bf16.mxu0 0
        %873 = vmatpush1.bf16.msra.mxu0 %v867
        %874 = vmatprep.subr.bf16.mxu0 0
        %875 = vmatpush1.bf16.msra.mxu0 0
        %876 = vmatprep.subr.bf16.mxu0 0
        %877 = vmatpush1.bf16.msra.mxu0 0
        %878 = vmatprep.subr.bf16.mxu0 0
        %879 = vmatpush1.bf16.msra.mxu0 0
        %880 = vmatprep.subr.bf16.mxu0 0
        %881 = vmatpush1.bf16.msra.mxu0 0
        %882 = vmatprep.subr.bf16.mxu0 0
        %883 = vmatpush1.bf16.msra.mxu0 0
        %884 = vmatprep.subr.bf16.mxu0 0
        %885 = vmatpush1.bf16.msra.mxu0 0
        %886 = vmatprep.subr.bf16.mxu0 0
        %887 = vmatpush1.bf16.msra.mxu0 0
        %888 = vmatprep.subr.bf16.mxu0 0
        %889 = vmatpush1.bf16.msra.mxu0 0
        %890 = vmatprep.subr.bf16.mxu0 0
        %891 = vmatpush1.bf16.msra.mxu0 0
        %892 = vmatprep.subr.bf16.mxu0 0
        %893 = vmatpush1.bf16.msra.mxu0 0
        %894 = vmatprep.subr.bf16.mxu0 0
        %895 = vmatpush1.bf16.msra.mxu0 0
        %896 = vmatprep.subr.bf16.mxu0 0
        %897 = vmatpush1.bf16.msra.mxu0 0
        %898 = vmatprep.subr.bf16.mxu0 0
        %899 = vmatpush1.bf16.msra.mxu0 0
        %900 = vmatprep.subr.bf16.mxu0 0
        %901 = vmatpush1.bf16.msra.mxu0 0
        %902 = vmatprep.mubr.bf16.mxu0 0
        %903 = vmatmul.mubr.bf16.gmra.mrb[0].mxu0 %v805
        %v904 = vpop.f32.mrb[0].mxu0
        %v905 = vadd.f32 %v856, %v904
        %v906 = vpop.f32.mrb[0].mxu0
        %v907 = vpop.f32.mrb[0].mxu0
        %v908 = vpop.f32.mrb[0].mxu0
        %909 = vdwg.mxu0
        %v910 = vld [vmem:[%s8] sm:$0xf]
        %v911 = vld [vmem:[%s8 + $0x4] sm:$0xf]
        %v912 = vld [vmem:[%s8 + $0x8] sm:$0xf]
        %v913 = vld [vmem:[%s8 + $0xc] sm:$0xf]
        %v914 = vld [vmem:[%s9] sm:$0x1]
        %v916 = vlaneseq
        %v917 = vshrl.u32 %v916, 7
        %v918 = vsub.s32 0, %v917
        %v919 = vrot.slane %v914, %v918
        %v925 = vunpack.c.l.b16 %v910
        %v926 = vunpack.c.l.b16 %v911
        %v927 = vunpack.c.l.b16 %v912
        %v928 = vunpack.c.l.b16 %v913
        %v929 = vpack.c.b16 %v926, %v925
        %v930 = vpack.c.b16 %v928, %v927
        %933 = vmatprep.subr.bf16.mxu0 0
        %934 = vmatpush1.bf16.msra.mxu0 %v929
        %935 = vmatprep.subr.bf16.mxu0 0
        %936 = vmatpush1.bf16.msra.mxu0 %v930
        %937 = vmatprep.subr.bf16.mxu0 0
        %938 = vmatpush1.bf16.msra.mxu0 0
        %939 = vmatprep.subr.bf16.mxu0 0
        %940 = vmatpush1.bf16.msra.mxu0 0
        %941 = vmatprep.subr.bf16.mxu0 0
        %942 = vmatpush1.bf16.msra.mxu0 0
        %943 = vmatprep.subr.bf16.mxu0 0
        %944 = vmatpush1.bf16.msra.mxu0 0
        %945 = vmatprep.subr.bf16.mxu0 0
        %946 = vmatpush1.bf16.msra.mxu0 0
        %947 = vmatprep.subr.bf16.mxu0 0
        %948 = vmatpush1.bf16.msra.mxu0 0
        %949 = vmatprep.subr.bf16.mxu0 0
        %950 = vmatpush1.bf16.msra.mxu0 0
        %951 = vmatprep.subr.bf16.mxu0 0
        %952 = vmatpush1.bf16.msra.mxu0 0
        %953 = vmatprep.subr.bf16.mxu0 0
        %954 = vmatpush1.bf16.msra.mxu0 0
        %955 = vmatprep.subr.bf16.mxu0 0
        %956 = vmatpush1.bf16.msra.mxu0 0
        %957 = vmatprep.subr.bf16.mxu0 0
        %958 = vmatpush1.bf16.msra.mxu0 0
        %959 = vmatprep.subr.bf16.mxu0 0
        %960 = vmatpush1.bf16.msra.mxu0 0
        %961 = vmatprep.subr.bf16.mxu0 0
        %962 = vmatpush1.bf16.msra.mxu0 0
        %963 = vmatprep.subr.bf16.mxu0 0
        %964 = vmatpush1.bf16.msra.mxu0 0
        %965 = vmatprep.mubr.bf16.mxu0 0
        %966 = vmatmul.mubr.bf16.gmra.mrb[0].mxu0 %v805
        %v967 = vpop.f32.mrb[0].mxu0
        %v968 = vadd.f32 %v919, %v967
        %v969 = vpop.f32.mrb[0].mxu0
        %v970 = vpop.f32.mrb[0].mxu0
        %v971 = vpop.f32.mrb[0].mxu0
        %972 = vdwg.mxu0
        %973 = vxpose.xlu0.b32.start [1/16] %v905, 128
        %974 = vxpose.xlu0.b32.cont [2/16] 0.0, 128
        %975 = vxpose.xlu0.b32.cont [3/16] 0.0, 128
        %976 = vxpose.xlu0.b32.cont [4/16] 0.0, 128
        %977 = vxpose.xlu0.b32.cont [5/16] 0.0, 128
        %978 = vxpose.xlu0.b32.cont [6/16] 0.0, 128
        %979 = vxpose.xlu0.b32.cont [7/16] 0.0, 128
        %980 = vxpose.xlu0.b32.cont [8/16] 0.0, 128
        %981 = vxpose.xlu0.b32.cont [9/16] 0.0, 128
        %982 = vxpose.xlu0.b32.cont [10/16] 0.0, 128
        %983 = vxpose.xlu0.b32.cont [11/16] 0.0, 128
        %984 = vxpose.xlu0.b32.cont [12/16] 0.0, 128
        %985 = vxpose.xlu0.b32.cont [13/16] 0.0, 128
        %986 = vxpose.xlu0.b32.cont [14/16] 0.0, 128
        %987 = vxpose.xlu0.b32.cont [15/16] 0.0, 128
        %988 = vxpose.xlu0.b32.end [16/16] 0.0, 128
        %v989 = vpop.trf.xlu0
        %v990 = vpop.trf.xlu0
        %v991 = vpop.trf.xlu0
        %v992 = vpop.trf.xlu0
        %v993 = vpop.trf.xlu0
        %v994 = vpop.trf.xlu0
        %v995 = vpop.trf.xlu0
        %v996 = vpop.trf.xlu0
        %v997 = vpop.trf.xlu0
        %v998 = vpop.trf.xlu0
        %v999 = vpop.trf.xlu0
        %v1000 = vpop.trf.xlu0
        %v1001 = vpop.trf.xlu0
        %v1002 = vpop.trf.xlu0
        %v1003 = vpop.trf.xlu0
        %v1004 = vpop.trf.xlu0
        %v1005 = vpack.c.bf16 %v842, %v842
        %v1006 = vpack.c.bf16 %v990, %v989
        %v1007 = vpack.c.bf16 %v992, %v991
        %v1008 = vpack.c.bf16 %v968, %v968
        %vm1009 = vcmask 64512
        %v1011 = vsel %vm1009, %v1005, 0
        %vm1013 = vcmask 1043456
        %v1015 = vsel %vm1013, %v1006, 0
        %1017 = vmatprep.subr.bf16.mxu0 0
        %1018 = vmatpush1.bf16.msra.mxu0 %v1015
        %1019 = vmatprep.subr.bf16.mxu0 0
        %1020 = vmatpush1.bf16.msra.mxu0 0
        %1021 = vmatprep.subr.bf16.mxu0 0
        %1022 = vmatpush1.bf16.msra.mxu0 0
        %1023 = vmatprep.subr.bf16.mxu0 0
        %1024 = vmatpush1.bf16.msra.mxu0 0
        %1025 = vmatprep.subr.bf16.mxu0 0
        %1026 = vmatpush1.bf16.msra.mxu0 0
        %1027 = vmatprep.subr.bf16.mxu0 0
        %1028 = vmatpush1.bf16.msra.mxu0 0
        %1029 = vmatprep.subr.bf16.mxu0 0
        %1030 = vmatpush1.bf16.msra.mxu0 0
        %1031 = vmatprep.subr.bf16.mxu0 0
        %1032 = vmatpush1.bf16.msra.mxu0 0
        %1033 = vmatprep.subr.bf16.mxu0 0
        %1034 = vmatpush1.bf16.msra.mxu0 0
        %1035 = vmatprep.subr.bf16.mxu0 0
        %1036 = vmatpush1.bf16.msra.mxu0 0
        %1037 = vmatprep.subr.bf16.mxu0 0
        %1038 = vmatpush1.bf16.msra.mxu0 0
        %1039 = vmatprep.subr.bf16.mxu0 0
        %1040 = vmatpush1.bf16.msra.mxu0 0
        %1041 = vmatprep.subr.bf16.mxu0 0
        %1042 = vmatpush1.bf16.msra.mxu0 0
        %1043 = vmatprep.subr.bf16.mxu0 0
        %1044 = vmatpush1.bf16.msra.mxu0 0
        %1045 = vmatprep.subr.bf16.mxu0 0
        %1046 = vmatpush1.bf16.msra.mxu0 0
        %1047 = vmatprep.subr.bf16.mxu0 0
        %1048 = vmatpush1.bf16.msra.mxu0 0
        %1049 = vmatprep.mubr.bf16.mxu0 0
        %1050 = vmatmul.mubr.bf16.gmra.mrb[0].mxu0 %v1011
        %v1051 = vpop.f32.mrb[0].mxu0
        %v1052 = vadd.f32 0.0, %v1051
        %v1053 = vpop.f32.mrb[0].mxu0
        %v1054 = vpop.f32.mrb[0].mxu0
        %v1055 = vpop.f32.mrb[0].mxu0
        %1056 = vdwg.mxu0
        %1058 = vrot.lane.b32.xlu0 %v1005, 120
        %v1059 = vpop.permute.xlu0 %1058
        %v1061 = vrot.slane %v1006, 4
        %v1063 = vsel %vm1009, %v1059, 0
        %v1066 = vsel %vm1013, %v1061, 0
        %1068 = vmatprep.subr.bf16.mxu0 0
        %1069 = vmatpush1.bf16.msra.mxu0 %v1066
        %1070 = vmatprep.subr.bf16.mxu0 0
        %1071 = vmatpush1.bf16.msra.mxu0 0
        %1072 = vmatprep.subr.bf16.mxu0 0
        %1073 = vmatpush1.bf16.msra.mxu0 0
        %1074 = vmatprep.subr.bf16.mxu0 0
        %1075 = vmatpush1.bf16.msra.mxu0 0
        %1076 = vmatprep.subr.bf16.mxu0 0
        %1077 = vmatpush1.bf16.msra.mxu0 0
        %1078 = vmatprep.subr.bf16.mxu0 0
        %1079 = vmatpush1.bf16.msra.mxu0 0
        %1080 = vmatprep.subr.bf16.mxu0 0
        %1081 = vmatpush1.bf16.msra.mxu0 0
        %1082 = vmatprep.subr.bf16.mxu0 0
        %1083 = vmatpush1.bf16.msra.mxu0 0
        %1084 = vmatprep.subr.bf16.mxu0 0
        %1085 = vmatpush1.bf16.msra.mxu0 0
        %1086 = vmatprep.subr.bf16.mxu0 0
        %1087 = vmatpush1.bf16.msra.mxu0 0
        %1088 = vmatprep.subr.bf16.mxu0 0
        %1089 = vmatpush1.bf16.msra.mxu0 0
        %1090 = vmatprep.subr.bf16.mxu0 0
        %1091 = vmatpush1.bf16.msra.mxu0 0
        %1092 = vmatprep.subr.bf16.mxu0 0
        %1093 = vmatpush1.bf16.msra.mxu0 0
        %1094 = vmatprep.subr.bf16.mxu0 0
        %1095 = vmatpush1.bf16.msra.mxu0 0
        %1096 = vmatprep.subr.bf16.mxu0 0
        %1097 = vmatpush1.bf16.msra.mxu0 0
        %1098 = vmatprep.subr.bf16.mxu0 0
        %1099 = vmatpush1.bf16.msra.mxu0 0
        %1100 = vmatprep.mubr.bf16.mxu0 0
        %1101 = vmatmul.mubr.bf16.gmra.mrb[0].mxu0 %v1063
        %v1102 = vpop.f32.mrb[0].mxu0
        %v1103 = vadd.f32 0.0, %v1102
        %v1104 = vpop.f32.mrb[0].mxu0
        %v1105 = vpop.f32.mrb[0].mxu0
        %v1106 = vpop.f32.mrb[0].mxu0
        %1107 = vdwg.mxu0
        %1108 = vrot.lane.b32.xlu0 %v1005, 112
        %v1109 = vpop.permute.xlu0 %1108
        %v1111 = vsel %vm1009, %v1109, 0
        %v1114 = vsel %vm1013, %v1007, 0
        %1116 = vmatprep.subr.bf16.mxu0 0
        %1117 = vmatpush1.bf16.msra.mxu0 %v1114
        %1118 = vmatprep.subr.bf16.mxu0 0
        %1119 = vmatpush1.bf16.msra.mxu0 0
        %1120 = vmatprep.subr.bf16.mxu0 0
        %1121 = vmatpush1.bf16.msra.mxu0 0
        %1122 = vmatprep.subr.bf16.mxu0 0
        %1123 = vmatpush1.bf16.msra.mxu0 0
        %1124 = vmatprep.subr.bf16.mxu0 0
        %1125 = vmatpush1.bf16.msra.mxu0 0
        %1126 = vmatprep.subr.bf16.mxu0 0
        %1127 = vmatpush1.bf16.msra.mxu0 0
        %1128 = vmatprep.subr.bf16.mxu0 0
        %1129 = vmatpush1.bf16.msra.mxu0 0
        %1130 = vmatprep.subr.bf16.mxu0 0
        %1131 = vmatpush1.bf16.msra.mxu0 0
        %1132 = vmatprep.subr.bf16.mxu0 0
        %1133 = vmatpush1.bf16.msra.mxu0 0
        %1134 = vmatprep.subr.bf16.mxu0 0
        %1135 = vmatpush1.bf16.msra.mxu0 0
        %1136 = vmatprep.subr.bf16.mxu0 0
        %1137 = vmatpush1.bf16.msra.mxu0 0
        %1138 = vmatprep.subr.bf16.mxu0 0
        %1139 = vmatpush1.bf16.msra.mxu0 0
        %1140 = vmatprep.subr.bf16.mxu0 0
        %1141 = vmatpush1.bf16.msra.mxu0 0
        %1142 = vmatprep.subr.bf16.mxu0 0
        %1143 = vmatpush1.bf16.msra.mxu0 0
        %1144 = vmatprep.subr.bf16.mxu0 0
        %1145 = vmatpush1.bf16.msra.mxu0 0
        %1146 = vmatprep.subr.bf16.mxu0 0
        %1147 = vmatpush1.bf16.msra.mxu0 0
        %1148 = vmatprep.mubr.bf16.mxu0 0
        %1149 = vmatmul.mubr.bf16.gmra.mrb[0].mxu0 %v1111
        %v1150 = vpop.f32.mrb[0].mxu0
        %v1151 = vadd.f32 0.0, %v1150
        %v1152 = vpop.f32.mrb[0].mxu0
        %v1153 = vpop.f32.mrb[0].mxu0
        %v1154 = vpop.f32.mrb[0].mxu0
        %1155 = vdwg.mxu0
        %1156 = vrot.lane.b32.xlu0 %v1005, 104
        %v1157 = vpop.permute.xlu0 %1156
        %v1159 = vrot.slane %v1007, 4
        %v1161 = vsel %vm1009, %v1157, 0
        %v1164 = vsel %vm1013, %v1159, 0
        %1166 = vmatprep.subr.bf16.mxu0 0
        %1167 = vmatpush1.bf16.msra.mxu0 %v1164
        %1168 = vmatprep.subr.bf16.mxu0 0
        %1169 = vmatpush1.bf16.msra.mxu0 0
        %1170 = vmatprep.subr.bf16.mxu0 0
        %1171 = vmatpush1.bf16.msra.mxu0 0
        %1172 = vmatprep.subr.bf16.mxu0 0
        %1173 = vmatpush1.bf16.msra.mxu0 0
        %1174 = vmatprep.subr.bf16.mxu0 0
        %1175 = vmatpush1.bf16.msra.mxu0 0
        %1176 = vmatprep.subr.bf16.mxu0 0
        %1177 = vmatpush1.bf16.msra.mxu0 0
        %1178 = vmatprep.subr.bf16.mxu0 0
        %1179 = vmatpush1.bf16.msra.mxu0 0
        %1180 = vmatprep.subr.bf16.mxu0 0
        %1181 = vmatpush1.bf16.msra.mxu0 0
        %1182 = vmatprep.subr.bf16.mxu0 0
        %1183 = vmatpush1.bf16.msra.mxu0 0
        %1184 = vmatprep.subr.bf16.mxu0 0
        %1185 = vmatpush1.bf16.msra.mxu0 0
        %1186 = vmatprep.subr.bf16.mxu0 0
        %1187 = vmatpush1.bf16.msra.mxu0 0
        %1188 = vmatprep.subr.bf16.mxu0 0
        %1189 = vmatpush1.bf16.msra.mxu0 0
        %1190 = vmatprep.subr.bf16.mxu0 0
        %1191 = vmatpush1.bf16.msra.mxu0 0
        %1192 = vmatprep.subr.bf16.mxu0 0
        %1193 = vmatpush1.bf16.msra.mxu0 0
        %1194 = vmatprep.subr.bf16.mxu0 0
        %1195 = vmatpush1.bf16.msra.mxu0 0
        %1196 = vmatprep.subr.bf16.mxu0 0
        %1197 = vmatpush1.bf16.msra.mxu0 0
        %1198 = vmatprep.mubr.bf16.mxu0 0
        %1199 = vmatmul.mubr.bf16.gmra.mrb[0].mxu0 %v1161
        %v1200 = vpop.f32.mrb[0].mxu0
        %v1201 = vadd.f32 0.0, %v1200
        %v1202 = vpop.f32.mrb[0].mxu0
        %v1203 = vpop.f32.mrb[0].mxu0
        %v1204 = vpop.f32.mrb[0].mxu0
        %1205 = vdwg.mxu0
        %v1206 = vmul.f32 %v1052, 0.35355338
        %v1207 = vmul.f32 %v1103, 0.35355338
        %v1208 = vmul.f32 %v1151, 0.35355338
        %v1209 = vmul.f32 %v1201, 0.35355338
        %v1211 = vlaneseq
        %v1212 = vshrl.u32 %v1211, 7
        %v1213 = vsub.s32 0, %v1212
        %v1214 = vrot.slane %v779, %v1213
        %v1216 = vadd.f32 %v1206, %v1214
        %v1217 = vadd.f32 %v1207, %v1214
        %v1218 = vadd.f32 %v1208, %v1214
        %v1219 = vadd.f32 %v1209, %v1214
        %v1220 = vsel %vm1009, %v1216, -inf
        %1221 = vmax.xlane.f32.xlu0 %v1220
        %v1222 = vpop.xlane.xlu0 %1221
        %v1223 = vsel %vm1009, %v1217, -inf
        %1224 = vmax.xlane.f32.xlu0 %v1223
        %v1225 = vpop.xlane.xlu0 %1224
        %v1226 = vsel %vm1009, %v1218, -inf
        %1227 = vmax.xlane.f32.xlu0 %v1226
        %v1228 = vpop.xlane.xlu0 %1227
        %v1229 = vsel %vm1009, %v1219, -inf
        %1230 = vmax.xlane.f32.xlu0 %v1229
        %v1231 = vpop.xlane.xlu0 %1230
        %v1232 = vsub.f32 %v1216, %v1222
        %v1233 = vsub.f32 %v1217, %v1225
        %v1234 = vsub.f32 %v1218, %v1228
        %v1235 = vsub.f32 %v1219, %v1231
        %v1236 = vmul.f32 %v1232, 1.442695
        %v1237 = vpow.pop %v1236
        %v1238 = vmul.f32 %v1233, 1.442695
        %v1239 = vpow.pop %v1238
        %v1240 = vmul.f32 %v1234, 1.442695
        %v1241 = vpow.pop %v1240
        %v1242 = vmul.f32 %v1235, 1.442695
        %v1243 = vpow.pop %v1242
        %v1244 = vsel %vm1009, %v1237, 0.0
        %1245 = vadd.xlane.f32.xlu0 %v1244
        %v1246 = vpop.xlane.xlu0 %1245
        %v1247 = vsel %vm1009, %v1239, 0.0
        %1248 = vadd.xlane.f32.xlu0 %v1247
        %v1249 = vpop.xlane.xlu0 %1248
        %v1250 = vsel %vm1009, %v1241, 0.0
        %1251 = vadd.xlane.f32.xlu0 %v1250
        %v1252 = vpop.xlane.xlu0 %1251
        %v1253 = vsel %vm1009, %v1243, 0.0
        %1254 = vadd.xlane.f32.xlu0 %v1253
        %v1255 = vpop.xlane.xlu0 %1254
        %v1256 = vrcp.pop %v1246
        %v1257 = vmul.f32 %v1237, %v1256
        %v1258 = vrcp.pop %v1249
        %v1259 = vmul.f32 %v1239, %v1258
        %v1260 = vrcp.pop %v1252
        %v1261 = vmul.f32 %v1241, %v1260
        %v1262 = vrcp.pop %v1255
        %v1263 = vmul.f32 %v1243, %v1262
        %v1264 = vpack.c.bf16 %v1259, %v1257
        %v1265 = vpack.c.bf16 %v1263, %v1261
        %v1267 = vsel %vm1009, %v1264, 0
        %v1270 = vsel %vm1013, %v1008, 0
        %1272 = vmatprep.subr.bf16.mxu0 0
        %1273 = vmatpush1.bf16.msra.mxu0 %v1270
        %1274 = vmatprep.subr.bf16.mxu0 0
        %1275 = vmatpush1.bf16.msra.mxu0 0
        %1276 = vmatprep.subr.bf16.mxu0 0
        %1277 = vmatpush1.bf16.msra.mxu0 0
        %1278 = vmatprep.subr.bf16.mxu0 0
        %1279 = vmatpush1.bf16.msra.mxu0 0
        %1280 = vmatprep.subr.bf16.mxu0 0
        %1281 = vmatpush1.bf16.msra.mxu0 0
        %1282 = vmatprep.subr.bf16.mxu0 0
        %1283 = vmatpush1.bf16.msra.mxu0 0
        %1284 = vmatprep.subr.bf16.mxu0 0
        %1285 = vmatpush1.bf16.msra.mxu0 0
        %1286 = vmatprep.subr.bf16.mxu0 0
        %1287 = vmatpush1.bf16.msra.mxu0 0
        %1288 = vmatprep.subr.bf16.mxu0 0
        %1289 = vmatpush1.bf16.msra.mxu0 0
        %1290 = vmatprep.subr.bf16.mxu0 0
        %1291 = vmatpush1.bf16.msra.mxu0 0
        %1292 = vmatprep.subr.bf16.mxu0 0
        %1293 = vmatpush1.bf16.msra.mxu0 0
        %1294 = vmatprep.subr.bf16.mxu0 0
        %1295 = vmatpush1.bf16.msra.mxu0 0
        %1296 = vmatprep.subr.bf16.mxu0 0
        %1297 = vmatpush1.bf16.msra.mxu0 0
        %1298 = vmatprep.subr.bf16.mxu0 0
        %1299 = vmatpush1.bf16.msra.mxu0 0
        %1300 = vmatprep.subr.bf16.mxu0 0
        %1301 = vmatpush1.bf16.msra.mxu0 0
        %1302 = vmatprep.subr.bf16.mxu0 0
        %1303 = vmatpush1.bf16.msra.mxu0 0
        %1304 = vmatprep.mubr.bf16.mxu0 0
        %1305 = vmatmul.mubr.bf16.gmra.mrb[0].mxu0 %v1267
        %v1306 = vpop.f32.mrb[0].mxu0
        %v1307 = vadd.f32 0.0, %v1306
        %v1308 = vpop.f32.mrb[0].mxu0
        %v1309 = vpop.f32.mrb[0].mxu0
        %v1310 = vpop.f32.mrb[0].mxu0
        %1311 = vdwg.mxu0
        %v1313 = vrot.slane %v1264, 4
        %1315 = vrot.lane.b32.xlu0 %v1008, 120
        %v1316 = vpop.permute.xlu0 %1315
        %v1318 = vsel %vm1009, %v1313, 0
        %v1321 = vsel %vm1013, %v1316, 0
        %1323 = vmatprep.subr.bf16.mxu0 0
        %1324 = vmatpush1.bf16.msra.mxu0 %v1321
        %1325 = vmatprep.subr.bf16.mxu0 0
        %1326 = vmatpush1.bf16.msra.mxu0 0
        %1327 = vmatprep.subr.bf16.mxu0 0
        %1328 = vmatpush1.bf16.msra.mxu0 0
        %1329 = vmatprep.subr.bf16.mxu0 0
        %1330 = vmatpush1.bf16.msra.mxu0 0
        %1331 = vmatprep.subr.bf16.mxu0 0
        %1332 = vmatpush1.bf16.msra.mxu0 0
        %1333 = vmatprep.subr.bf16.mxu0 0
        %1334 = vmatpush1.bf16.msra.mxu0 0
        %1335 = vmatprep.subr.bf16.mxu0 0
        %1336 = vmatpush1.bf16.msra.mxu0 0
        %1337 = vmatprep.subr.bf16.mxu0 0
        %1338 = vmatpush1.bf16.msra.mxu0 0
        %1339 = vmatprep.subr.bf16.mxu0 0
        %1340 = vmatpush1.bf16.msra.mxu0 0
        %1341 = vmatprep.subr.bf16.mxu0 0
        %1342 = vmatpush1.bf16.msra.mxu0 0
        %1343 = vmatprep.subr.bf16.mxu0 0
        %1344 = vmatpush1.bf16.msra.mxu0 0
        %1345 = vmatprep.subr.bf16.mxu0 0
        %1346 = vmatpush1.bf16.msra.mxu0 0
        %1347 = vmatprep.subr.bf16.mxu0 0
        %1348 = vmatpush1.bf16.msra.mxu0 0
        %1349 = vmatprep.subr.bf16.mxu0 0
        %1350 = vmatpush1.bf16.msra.mxu0 0
        %1351 = vmatprep.subr.bf16.mxu0 0
        %1352 = vmatpush1.bf16.msra.mxu0 0
        %1353 = vmatprep.subr.bf16.mxu0 0
        %1354 = vmatpush1.bf16.msra.mxu0 0
        %1355 = vmatprep.mubr.bf16.mxu0 0
        %1356 = vmatmul.mubr.bf16.gmra.mrb[0].mxu0 %v1318
        %v1357 = vpop.f32.mrb[0].mxu0
        %v1358 = vadd.f32 0.0, %v1357
        %v1359 = vpop.f32.mrb[0].mxu0
        %v1360 = vpop.f32.mrb[0].mxu0
        %v1361 = vpop.f32.mrb[0].mxu0
        %1362 = vdwg.mxu0
        %1363 = vrot.lane.b32.xlu0 %v1008, 112
        %v1364 = vpop.permute.xlu0 %1363
        %v1366 = vsel %vm1009, %v1265, 0
        %v1369 = vsel %vm1013, %v1364, 0
        %1371 = vmatprep.subr.bf16.mxu0 0
        %1372 = vmatpush1.bf16.msra.mxu0 %v1369
        %1373 = vmatprep.subr.bf16.mxu0 0
        %1374 = vmatpush1.bf16.msra.mxu0 0
        %1375 = vmatprep.subr.bf16.mxu0 0
        %1376 = vmatpush1.bf16.msra.mxu0 0
        %1377 = vmatprep.subr.bf16.mxu0 0
        %1378 = vmatpush1.bf16.msra.mxu0 0
        %1379 = vmatprep.subr.bf16.mxu0 0
        %1380 = vmatpush1.bf16.msra.mxu0 0
        %1381 = vmatprep.subr.bf16.mxu0 0
        %1382 = vmatpush1.bf16.msra.mxu0 0
        %1383 = vmatprep.subr.bf16.mxu0 0
        %1384 = vmatpush1.bf16.msra.mxu0 0
        %1385 = vmatprep.subr.bf16.mxu0 0
        %1386 = vmatpush1.bf16.msra.mxu0 0
        %1387 = vmatprep.subr.bf16.mxu0 0
        %1388 = vmatpush1.bf16.msra.mxu0 0
        %1389 = vmatprep.subr.bf16.mxu0 0
        %1390 = vmatpush1.bf16.msra.mxu0 0
        %1391 = vmatprep.subr.bf16.mxu0 0
        %1392 = vmatpush1.bf16.msra.mxu0 0
        %1393 = vmatprep.subr.bf16.mxu0 0
        %1394 = vmatpush1.bf16.msra.mxu0 0
        %1395 = vmatprep.subr.bf16.mxu0 0
        %1396 = vmatpush1.bf16.msra.mxu0 0
        %1397 = vmatprep.subr.bf16.mxu0 0
        %1398 = vmatpush1.bf16.msra.mxu0 0
        %1399 = vmatprep.subr.bf16.mxu0 0
        %1400 = vmatpush1.bf16.msra.mxu0 0
        %1401 = vmatprep.subr.bf16.mxu0 0
        %1402 = vmatpush1.bf16.msra.mxu0 0
        %1403 = vmatprep.mubr.bf16.mxu0 0
        %1404 = vmatmul.mubr.bf16.gmra.mrb[0].mxu0 %v1366
        %v1405 = vpop.f32.mrb[0].mxu0
        %v1406 = vadd.f32 0.0, %v1405
        %v1407 = vpop.f32.mrb[0].mxu0
        %v1408 = vpop.f32.mrb[0].mxu0
        %v1409 = vpop.f32.mrb[0].mxu0
        %1410 = vdwg.mxu0
        %v1412 = vrot.slane %v1265, 4
        %1413 = vrot.lane.b32.xlu0 %v1008, 104
        %v1414 = vpop.permute.xlu0 %1413
        %v1416 = vsel %vm1009, %v1412, 0
        %v1419 = vsel %vm1013, %v1414, 0
        %1421 = vmatprep.subr.bf16.mxu0 0
        %1422 = vmatpush1.bf16.msra.mxu0 %v1419
        %1423 = vmatprep.subr.bf16.mxu0 0
        %1424 = vmatpush1.bf16.msra.mxu0 0
        %1425 = vmatprep.subr.bf16.mxu0 0
        %1426 = vmatpush1.bf16.msra.mxu0 0
        %1427 = vmatprep.subr.bf16.mxu0 0
        %1428 = vmatpush1.bf16.msra.mxu0 0
        %1429 = vmatprep.subr.bf16.mxu0 0
        %1430 = vmatpush1.bf16.msra.mxu0 0
        %1431 = vmatprep.subr.bf16.mxu0 0
        %1432 = vmatpush1.bf16.msra.mxu0 0
        %1433 = vmatprep.subr.bf16.mxu0 0
        %1434 = vmatpush1.bf16.msra.mxu0 0
        %1435 = vmatprep.subr.bf16.mxu0 0
        %1436 = vmatpush1.bf16.msra.mxu0 0
        %1437 = vmatprep.subr.bf16.mxu0 0
        %1438 = vmatpush1.bf16.msra.mxu0 0
        %1439 = vmatprep.subr.bf16.mxu0 0
        %1440 = vmatpush1.bf16.msra.mxu0 0
        %1441 = vmatprep.subr.bf16.mxu0 0
        %1442 = vmatpush1.bf16.msra.mxu0 0
        %1443 = vmatprep.subr.bf16.mxu0 0
        %1444 = vmatpush1.bf16.msra.mxu0 0
        %1445 = vmatprep.subr.bf16.mxu0 0
        %1446 = vmatpush1.bf16.msra.mxu0 0
        %1447 = vmatprep.subr.bf16.mxu0 0
        %1448 = vmatpush1.bf16.msra.mxu0 0
        %1449 = vmatprep.subr.bf16.mxu0 0
        %1450 = vmatpush1.bf16.msra.mxu0 0
        %1451 = vmatprep.subr.bf16.mxu0 0
        %1452 = vmatpush1.bf16.msra.mxu0 0
        %1453 = vmatprep.mubr.bf16.mxu0 0
        %1454 = vmatmul.mubr.bf16.gmra.mrb[0].mxu0 %v1416
        %v1455 = vpop.f32.mrb[0].mxu0
        %v1456 = vadd.f32 0.0, %v1455
        %v1457 = vpop.f32.mrb[0].mxu0
        %v1458 = vpop.f32.mrb[0].mxu0
        %v1459 = vpop.f32.mrb[0].mxu0
        %1460 = vdwg.mxu0
        %1462 = vrot.lane.b32.xlu0 %v1358, 8
        %v1463 = vpop.permute.xlu0 %1462
        %1466 = vrot.lane.b32.xlu0 %v1406, 16
        %v1467 = vpop.permute.xlu0 %1466
        %1470 = vrot.lane.b32.xlu0 %v1456, 24
        %v1471 = vpop.permute.xlu0 %1470
        %v1473 = vsel %vm1009, %v1307, %v1463
        %vm1474 = vcmask 130048
        %v1475 = vsel %vm1474, %v1473, %v1467
        %vm1476 = vcmask 195584
        %v1477 = vsel %vm1476, %v1475, %v1471
        %v1478 = vld [vmem:[%s10] sm:$0xf]
        %v1479 = vld [vmem:[%s10 + $0x4] sm:$0xf]
        %v1480 = vld [vmem:[%s10 + $0x8] sm:$0xf]
        %v1481 = vld [vmem:[%s10 + $0xc] sm:$0xf]
        %v1482 = vpack.c.bf16 %v1477, %v1477
        %v1483 = vld [vmem:[%s11] sm:$0x1]
        %v1485 = vlaneseq
        %v1486 = vshrl.u32 %v1485, 7
        %v1487 = vsub.s32 0, %v1486
        %v1488 = vrot.slane %v1483, %v1487
        %v1494 = vunpack.c.l.b16 %v1478
        %v1495 = vunpack.c.l.b16 %v1479
        %v1496 = vunpack.c.l.b16 %v1480
        %v1497 = vunpack.c.l.b16 %v1481
        %v1498 = vpack.c.b16 %v1495, %v1494
        %v1499 = vpack.c.b16 %v1497, %v1496
        %v1503 = vsel %vm750, %v1482, 0
        %1505 = vmatprep.subr.bf16.mxu0 0
        %1506 = vmatpush1.bf16.msra.mxu0 %v1498
        %1507 = vmatprep.subr.bf16.mxu0 0
        %1508 = vmatpush1.bf16.msra.mxu0 %v1499
        %1509 = vmatprep.subr.bf16.mxu0 0
        %1510 = vmatpush1.bf16.msra.mxu0 0
        %1511 = vmatprep.subr.bf16.mxu0 0
        %1512 = vmatpush1.bf16.msra.mxu0 0
        %1513 = vmatprep.subr.bf16.mxu0 0
        %1514 = vmatpush1.bf16.msra.mxu0 0
        %1515 = vmatprep.subr.bf16.mxu0 0
        %1516 = vmatpush1.bf16.msra.mxu0 0
        %1517 = vmatprep.subr.bf16.mxu0 0
        %1518 = vmatpush1.bf16.msra.mxu0 0
        %1519 = vmatprep.subr.bf16.mxu0 0
        %1520 = vmatpush1.bf16.msra.mxu0 0
        %1521 = vmatprep.subr.bf16.mxu0 0
        %1522 = vmatpush1.bf16.msra.mxu0 0
        %1523 = vmatprep.subr.bf16.mxu0 0
        %1524 = vmatpush1.bf16.msra.mxu0 0
        %1525 = vmatprep.subr.bf16.mxu0 0
        %1526 = vmatpush1.bf16.msra.mxu0 0
        %1527 = vmatprep.subr.bf16.mxu0 0
        %1528 = vmatpush1.bf16.msra.mxu0 0
        %1529 = vmatprep.subr.bf16.mxu0 0
        %1530 = vmatpush1.bf16.msra.mxu0 0
        %1531 = vmatprep.subr.bf16.mxu0 0
        %1532 = vmatpush1.bf16.msra.mxu0 0
        %1533 = vmatprep.subr.bf16.mxu0 0
        %1534 = vmatpush1.bf16.msra.mxu0 0
        %1535 = vmatprep.subr.bf16.mxu0 0
        %1536 = vmatpush1.bf16.msra.mxu0 0
        %1537 = vmatprep.mubr.bf16.mxu0 0
        %1538 = vmatmul.mubr.bf16.gmra.mrb[0].mxu0 %v1503
        %v1539 = vpop.f32.mrb[0].mxu0
        %v1540 = vadd.f32 %v1488, %v1539
        %v1541 = vpop.f32.mrb[0].mxu0
        %v1542 = vpop.f32.mrb[0].mxu0
        %v1543 = vpop.f32.mrb[0].mxu0
        %1544 = vdwg.mxu0
        %v1545 = vadd.f32 %v778, %v1540
        %v1546 = vld [vmem:[%s12] sm:$0x1]
        %v1547 = vld [vmem:[%s13] sm:$0x1]
        %v1548 = vsel %vm750, %v1545, 0.0
        %1549 = vadd.xlane.f32.xlu0 %v1548
        %v1550 = vpop.xlane.xlu0 %1549
        %v1551 = vmul.f32 %v1550, %v754
        %v1552 = vsub.f32 %v1545, %v1551
        %v1553 = vmul.f32 %v1552, %v1552
        %v1554 = vsel %vm750, %v1553, 0.0
        %1555 = vadd.xlane.f32.xlu0 %v1554
        %v1556 = vpop.xlane.xlu0 %1555
        %v1557 = vmul.f32 %v1556, %v754
        %v1558 = vadd.f32 %v1557, 1e-12
        %v1559 = vrsqrt.pop %v1558
        %v1560 = vmul.f32 %v1552, %v1559
        %v1562 = vlaneseq
        %v1563 = vshrl.u32 %v1562, 7
        %v1564 = vsub.s32 0, %v1563
        %v1565 = vrot.slane %v1546, %v1564
        %v1567 = vmul.f32 %v1560, %v1565
        %v1569 = vlaneseq
        %v1570 = vshrl.u32 %v1569, 7
        %v1571 = vsub.s32 0, %v1570
        %v1572 = vrot.slane %v1547, %v1571
        %v1574 = vadd.f32 %v1567, %v1572
        %v1575 = vld [vmem:[%s14] sm:$0xf]
        %v1576 = vld [vmem:[%s14 + $0x4] sm:$0xf]
        %v1577 = vld [vmem:[%s14 + $0x8] sm:$0xf]
        %v1578 = vld [vmem:[%s14 + $0xc] sm:$0xf]
        %v1579 = vpack.c.bf16 %v1574, %v1574
        %v1580 = vld [vmem:[%s15] sm:$0x1]
        %v1582 = vlaneseq
        %v1583 = vshrl.u32 %v1582, 7
        %v1584 = vsub.s32 0, %v1583
        %v1585 = vrot.slane %v1580, %v1584
        %v1591 = vunpack.c.l.b16 %v1575
        %v1592 = vunpack.c.l.b16 %v1576
        %v1593 = vunpack.c.l.b16 %v1577
        %v1594 = vunpack.c.l.b16 %v1578
        %v1595 = vpack.c.b16 %v1592, %v1591
        %v1596 = vpack.c.b16 %v1594, %v1593
        %v1600 = vsel %vm750, %v1579, 0
        %1602 = vmatprep.subr.bf16.mxu0 0
        %1603 = vmatpush1.bf16.msra.mxu0 %v1595
        %1604 = vmatprep.subr.bf16.mxu0 0
        %1605 = vmatpush1.bf16.msra.mxu0 %v1596
        %1606 = vmatprep.subr.bf16.mxu0 0
        %1607 = vmatpush1.bf16.msra.mxu0 0
        %1608 = vmatprep.subr.bf16.mxu0 0
        %1609 = vmatpush1.bf16.msra.mxu0 0
        %1610 = vmatprep.subr.bf16.mxu0 0
        %1611 = vmatpush1.bf16.msra.mxu0 0
        %1612 = vmatprep.subr.bf16.mxu0 0
        %1613 = vmatpush1.bf16.msra.mxu0 0
        %1614 = vmatprep.subr.bf16.mxu0 0
        %1615 = vmatpush1.bf16.msra.mxu0 0
        %1616 = vmatprep.subr.bf16.mxu0 0
        %1617 = vmatpush1.bf16.msra.mxu0 0
        %1618 = vmatprep.subr.bf16.mxu0 0
        %1619 = vmatpush1.bf16.msra.mxu0 0
        %1620 = vmatprep.subr.bf16.mxu0 0
        %1621 = vmatpush1.bf16.msra.mxu0 0
        %1622 = vmatprep.subr.bf16.mxu0 0
        %1623 = vmatpush1.bf16.msra.mxu0 0
        %1624 = vmatprep.subr.bf16.mxu0 0
        %1625 = vmatpush1.bf16.msra.mxu0 0
        %1626 = vmatprep.subr.bf16.mxu0 0
        %1627 = vmatpush1.bf16.msra.mxu0 0
        %1628 = vmatprep.subr.bf16.mxu0 0
        %1629 = vmatpush1.bf16.msra.mxu0 0
        %1630 = vmatprep.subr.bf16.mxu0 0
        %1631 = vmatpush1.bf16.msra.mxu0 0
        %1632 = vmatprep.subr.bf16.mxu0 0
        %1633 = vmatpush1.bf16.msra.mxu0 0
        %1634 = vmatprep.mubr.bf16.mxu0 0
        %1635 = vmatmul.mubr.bf16.gmra.mrb[0].mxu0 %v1600
        %v1636 = vpop.f32.mrb[0].mxu0
        %v1637 = vadd.f32 %v1585, %v1636
        %v1638 = vpop.f32.mrb[0].mxu0
        %v1639 = vpop.f32.mrb[0].mxu0
        %v1640 = vpop.f32.mrb[0].mxu0
        %1641 = vdwg.mxu0
        %v1642 = vmul.f32 %v1637, 0.5
        %v1643 = vmul.f32 %v1637, 0.044715
        %v1644 = vmul.f32 %v1643, %v1637
        %v1645 = vmul.f32 %v1644, %v1637
        %v1646 = vadd.f32 %v1637, %v1645
        %v1647 = vmul.f32 %v1646, 0.7978846
        %v1648 = vtanh.pop %v1647
        %v1649 = vadd.f32 %v1648, 1.0
        %v1650 = vmul.f32 %v1642, %v1649
        %v1651 = vld [vmem:[%s16] sm:$0xf]
        %v1652 = vld [vmem:[%s16 + $0x4] sm:$0xf]
        %v1653 = vld [vmem:[%s16 + $0x8] sm:$0xf]
        %v1654 = vld [vmem:[%s16 + $0xc] sm:$0xf]
        %v1655 = vld [vmem:[%s16 + $0x10] sm:$0xf]
        %v1656 = vld [vmem:[%s16 + $0x14] sm:$0xf]
        %v1657 = vld [vmem:[%s16 + $0x18] sm:$0xf]
        %v1658 = vld [vmem:[%s16 + $0x1c] sm:$0xf]
        %v1659 = vpack.c.bf16 %v1650, %v1650
        %v1660 = vld [vmem:[%s17] sm:$0x1]
        %v1662 = vlaneseq
        %v1663 = vshrl.u32 %v1662, 7
        %v1664 = vsub.s32 0, %v1663
        %v1665 = vrot.slane %v1660, %v1664
        %v1675 = vunpack.c.l.b16 %v1651
        %v1676 = vunpack.c.l.b16 %v1652
        %v1677 = vunpack.c.l.b16 %v1653
        %v1678 = vunpack.c.l.b16 %v1654
        %v1679 = vunpack.c.l.b16 %v1655
        %v1680 = vunpack.c.l.b16 %v1656
        %v1681 = vunpack.c.l.b16 %v1657
        %v1682 = vunpack.c.l.b16 %v1658
        %v1683 = vpack.c.b16 %v1676, %v1675
        %v1684 = vpack.c.b16 %v1678, %v1677
        %v1685 = vpack.c.b16 %v1680, %v1679
        %v1686 = vpack.c.b16 %v1682, %v1681
        %vm1691 = vcmask 523264
        %v1693 = vsel %vm1691, %v1659, 0
        %1695 = vmatprep.subr.bf16.mxu0 0
        %1696 = vmatpush1.bf16.msra.mxu0 %v1683
        %1697 = vmatprep.subr.bf16.mxu0 0
        %1698 = vmatpush1.bf16.msra.mxu0 %v1684
        %1699 = vmatprep.subr.bf16.mxu0 0
        %1700 = vmatpush1.bf16.msra.mxu0 %v1685
        %1701 = vmatprep.subr.bf16.mxu0 0
        %1702 = vmatpush1.bf16.msra.mxu0 %v1686
        %1703 = vmatprep.subr.bf16.mxu0 0
        %1704 = vmatpush1.bf16.msra.mxu0 0
        %1705 = vmatprep.subr.bf16.mxu0 0
        %1706 = vmatpush1.bf16.msra.mxu0 0
        %1707 = vmatprep.subr.bf16.mxu0 0
        %1708 = vmatpush1.bf16.msra.mxu0 0
        %1709 = vmatprep.subr.bf16.mxu0 0
        %1710 = vmatpush1.bf16.msra.mxu0 0
        %1711 = vmatprep.subr.bf16.mxu0 0
        %1712 = vmatpush1.bf16.msra.mxu0 0
        %1713 = vmatprep.subr.bf16.mxu0 0
        %1714 = vmatpush1.bf16.msra.mxu0 0
        %1715 = vmatprep.subr.bf16.mxu0 0
        %1716 = vmatpush1.bf16.msra.mxu0 0
        %1717 = vmatprep.subr.bf16.mxu0 0
        %1718 = vmatpush1.bf16.msra.mxu0 0
        %1719 = vmatprep.subr.bf16.mxu0 0
        %1720 = vmatpush1.bf16.msra.mxu0 0
        %1721 = vmatprep.subr.bf16.mxu0 0
        %1722 = vmatpush1.bf16.msra.mxu0 0
        %1723 = vmatprep.subr.bf16.mxu0 0
        %1724 = vmatpush1.bf16.msra.mxu0 0
        %1725 = vmatprep.subr.bf16.mxu0 0
        %1726 = vmatpush1.bf16.msra.mxu0 0
        %1727 = vmatprep.mubr.bf16.mxu0 0
        %1728 = vmatmul.mubr.bf16.gmra.mrb[0].mxu0 %v1693
        %v1729 = vpop.f32.mrb[0].mxu0
        %v1730 = vadd.f32 %v1665, %v1729
        %v1731 = vpop.f32.mrb[0].mxu0
        %v1732 = vpop.f32.mrb[0].mxu0
        %v1733 = vpop.f32.mrb[0].mxu0
        %1734 = vdwg.mxu0
        %v1735 = vadd.f32 %v1574, %v1730
        %v1736 = vld [vmem:[%s18] sm:$0x1]
        %v1737 = vld [vmem:[%s19] sm:$0x1]
        %v1738 = vsel %vm750, %v1735, 0.0
        %1739 = vadd.xlane.f32.xlu0 %v1738
        %v1740 = vpop.xlane.xlu0 %1739
        %v1741 = vmul.f32 %v1740, %v754
        %v1742 = vsub.f32 %v1735, %v1741
        %v1743 = vmul.f32 %v1742, %v1742
        %v1744 = vsel %vm750, %v1743, 0.0
        %1745 = vadd.xlane.f32.xlu0 %v1744
        %v1746 = vpop.xlane.xlu0 %1745
        %v1747 = vmul.f32 %v1746, %v754
        %v1748 = vadd.f32 %v1747, 1e-12
        %v1749 = vrsqrt.pop %v1748
        %v1750 = vmul.f32 %v1742, %v1749
        %v1752 = vlaneseq
        %v1753 = vshrl.u32 %v1752, 7
        %v1754 = vsub.s32 0, %v1753
        %v1755 = vrot.slane %v1736, %v1754
        %v1757 = vmul.f32 %v1750, %v1755
        %v1759 = vlaneseq
        %v1760 = vshrl.u32 %v1759, 7
        %v1761 = vsub.s32 0, %v1760
        %v1762 = vrot.slane %v1737, %v1761
        %v1764 = vadd.f32 %v1757, %v1762
        %s1765 = scalar_lea.vmem %s4, 16
        %v1766 = vld [vmem:[%s1765] sm:$0xf]
        %v1767 = vld [vmem:[%s1765 + $0x4] sm:$0xf]
        %v1768 = vld [vmem:[%s1765 + $0x8] sm:$0xf]
        %v1769 = vld [vmem:[%s1765 + $0xc] sm:$0xf]
        %v1770 = vpack.c.bf16 %v1764, %v1764
        %s1771 = scalar_lea.vmem %s5, 1
        %v1772 = vld [vmem:[%s1771] sm:$0x1]
        %v1774 = vlaneseq
        %v1775 = vshrl.u32 %v1774, 7
        %v1776 = vsub.s32 0, %v1775
        %v1777 = vrot.slane %v1772, %v1776
        %v1783 = vunpack.c.l.b16 %v1766
        %v1784 = vunpack.c.l.b16 %v1767
        %v1785 = vunpack.c.l.b16 %v1768
        %v1786 = vunpack.c.l.b16 %v1769
        %v1787 = vpack.c.b16 %v1784, %v1783
        %v1788 = vpack.c.b16 %v1786, %v1785
        %v1792 = vsel %vm750, %v1770, 0
        %1794 = vmatprep.subr.bf16.mxu0 0
        %1795 = vmatpush1.bf16.msra.mxu0 %v1787
        %1796 = vmatprep.subr.bf16.mxu0 0
        %1797 = vmatpush1.bf16.msra.mxu0 %v1788
        %1798 = vmatprep.subr.bf16.mxu0 0
        %1799 = vmatpush1.bf16.msra.mxu0 0
        %1800 = vmatprep.subr.bf16.mxu0 0
        %1801 = vmatpush1.bf16.msra.mxu0 0
        %1802 = vmatprep.subr.bf16.mxu0 0
        %1803 = vmatpush1.bf16.msra.mxu0 0
        %1804 = vmatprep.subr.bf16.mxu0 0
        %1805 = vmatpush1.bf16.msra.mxu0 0
        %1806 = vmatprep.subr.bf16.mxu0 0
        %1807 = vmatpush1.bf16.msra.mxu0 0
        %1808 = vmatprep.subr.bf16.mxu0 0
        %1809 = vmatpush1.bf16.msra.mxu0 0
        %1810 = vmatprep.subr.bf16.mxu0 0
        %1811 = vmatpush1.bf16.msra.mxu0 0
        %1812 = vmatprep.subr.bf16.mxu0 0
        %1813 = vmatpush1.bf16.msra.mxu0 0
        %1814 = vmatprep.subr.bf16.mxu0 0
        %1815 = vmatpush1.bf16.msra.mxu0 0
        %1816 = vmatprep.subr.bf16.mxu0 0
        %1817 = vmatpush1.bf16.msra.mxu0 0
        %1818 = vmatprep.subr.bf16.mxu0 0
        %1819 = vmatpush1.bf16.msra.mxu0 0
        %1820 = vmatprep.subr.bf16.mxu0 0
        %1821 = vmatpush1.bf16.msra.mxu0 0
        %1822 = vmatprep.subr.bf16.mxu0 0
        %1823 = vmatpush1.bf16.msra.mxu0 0
        %1824 = vmatprep.subr.bf16.mxu0 0
        %1825 = vmatpush1.bf16.msra.mxu0 0
        %1826 = vmatprep.mubr.bf16.mxu0 0
        %1827 = vmatmul.mubr.bf16.gmra.mrb[0].mxu0 %v1792
        %v1828 = vpop.f32.mrb[0].mxu0
        %v1829 = vadd.f32 %v1777, %v1828
        %v1830 = vpop.f32.mrb[0].mxu0
        %v1831 = vpop.f32.mrb[0].mxu0
        %v1832 = vpop.f32.mrb[0].mxu0
        %1833 = vdwg.mxu0
        %s1834 = scalar_lea.vmem %s6, 16
        %v1835 = vld [vmem:[%s1834] sm:$0xf]
        %v1836 = vld [vmem:[%s1834 + $0x4] sm:$0xf]
        %v1837 = vld [vmem:[%s1834 + $0x8] sm:$0xf]
        %v1838 = vld [vmem:[%s1834 + $0xc] sm:$0xf]
        %s1839 = scalar_lea.vmem %s7, 1
        %v1840 = vld [vmem:[%s1839] sm:$0x1]
        %v1842 = vlaneseq
        %v1843 = vshrl.u32 %v1842, 7
        %v1844 = vsub.s32 0, %v1843
        %v1845 = vrot.slane %v1840, %v1844
        %v1851 = vunpack.c.l.b16 %v1835
        %v1852 = vunpack.c.l.b16 %v1836
        %v1853 = vunpack.c.l.b16 %v1837
        %v1854 = vunpack.c.l.b16 %v1838
        %v1855 = vpack.c.b16 %v1852, %v1851
        %v1856 = vpack.c.b16 %v1854, %v1853
        %1859 = vmatprep.subr.bf16.mxu0 0
        %1860 = vmatpush1.bf16.msra.mxu0 %v1855
        %1861 = vmatprep.subr.bf16.mxu0 0
        %1862 = vmatpush1.bf16.msra.mxu0 %v1856
        %1863 = vmatprep.subr.bf16.mxu0 0
        %1864 = vmatpush1.bf16.msra.mxu0 0
        %1865 = vmatprep.subr.bf16.mxu0 0
        %1866 = vmatpush1.bf16.msra.mxu0 0
        %1867 = vmatprep.subr.bf16.mxu0 0
        %1868 = vmatpush1.bf16.msra.mxu0 0
        %1869 = vmatprep.subr.bf16.mxu0 0
        %1870 = vmatpush1.bf16.msra.mxu0 0
        %1871 = vmatprep.subr.bf16.mxu0 0
        %1872 = vmatpush1.bf16.msra.mxu0 0
        %1873 = vmatprep.subr.bf16.mxu0 0
        %1874 = vmatpush1.bf16.msra.mxu0 0
        %1875 = vmatprep.subr.bf16.mxu0 0
        %1876 = vmatpush1.bf16.msra.mxu0 0
        %1877 = vmatprep.subr.bf16.mxu0 0
        %1878 = vmatpush1.bf16.msra.mxu0 0
        %1879 = vmatprep.subr.bf16.mxu0 0
        %1880 = vmatpush1.bf16.msra.mxu0 0
        %1881 = vmatprep.subr.bf16.mxu0 0
        %1882 = vmatpush1.bf16.msra.mxu0 0
        %1883 = vmatprep.subr.bf16.mxu0 0
        %1884 = vmatpush1.bf16.msra.mxu0 0
        %1885 = vmatprep.subr.bf16.mxu0 0
        %1886 = vmatpush1.bf16.msra.mxu0 0
        %1887 = vmatprep.subr.bf16.mxu0 0
        %1888 = vmatpush1.bf16.msra.mxu0 0
        %1889 = vmatprep.subr.bf16.mxu0 0
        %1890 = vmatpush1.bf16.msra.mxu0 0
        %1891 = vmatprep.mubr.bf16.mxu0 0
        %1892 = vmatmul.mubr.bf16.gmra.mrb[0].mxu0 %v1792
        %v1893 = vpop.f32.mrb[0].mxu0
        %v1894 = vadd.f32 %v1845, %v1893
        %v1895 = vpop.f32.mrb[0].mxu0
        %v1896 = vpop.f32.mrb[0].mxu0
        %v1897 = vpop.f32.mrb[0].mxu0
        %1898 = vdwg.mxu0
        %s1899 = scalar_lea.vmem %s8, 16
        %v1900 = vld [vmem:[%s1899] sm:$0xf]
        %v1901 = vld [vmem:[%s1899 + $0x4] sm:$0xf]
        %v1902 = vld [vmem:[%s1899 + $0x8] sm:$0xf]
        %v1903 = vld [vmem:[%s1899 + $0xc] sm:$0xf]
        %s1904 = scalar_lea.vmem %s9, 1
        %v1905 = vld [vmem:[%s1904] sm:$0x1]
        %v1907 = vlaneseq
        %v1908 = vshrl.u32 %v1907, 7
        %v1909 = vsub.s32 0, %v1908
        %v1910 = vrot.slane %v1905, %v1909
        %v1916 = vunpack.c.l.b16 %v1900
        %v1917 = vunpack.c.l.b16 %v1901
        %v1918 = vunpack.c.l.b16 %v1902
        %v1919 = vunpack.c.l.b16 %v1903
        %v1920 = vpack.c.b16 %v1917, %v1916
        %v1921 = vpack.c.b16 %v1919, %v1918
        %1924 = vmatprep.subr.bf16.mxu0 0
        %1925 = vmatpush1.bf16.msra.mxu0 %v1920
        %1926 = vmatprep.subr.bf16.mxu0 0
        %1927 = vmatpush1.bf16.msra.mxu0 %v1921
        %1928 = vmatprep.subr.bf16.mxu0 0
        %1929 = vmatpush1.bf16.msra.mxu0 0
        %1930 = vmatprep.subr.bf16.mxu0 0
        %1931 = vmatpush1.bf16.msra.mxu0 0
        %1932 = vmatprep.subr.bf16.mxu0 0
        %1933 = vmatpush1.bf16.msra.mxu0 0
        %1934 = vmatprep.subr.bf16.mxu0 0
        %1935 = vmatpush1.bf16.msra.mxu0 0
        %1936 = vmatprep.subr.bf16.mxu0 0
        %1937 = vmatpush1.bf16.msra.mxu0 0
        %1938 = vmatprep.subr.bf16.mxu0 0
        %1939 = vmatpush1.bf16.msra.mxu0 0
        %1940 = vmatprep.subr.bf16.mxu0 0
        %1941 = vmatpush1.bf16.msra.mxu0 0
        %1942 = vmatprep.subr.bf16.mxu0 0
        %1943 = vmatpush1.bf16.msra.mxu0 0
        %1944 = vmatprep.subr.bf16.mxu0 0
        %1945 = vmatpush1.bf16.msra.mxu0 0
        %1946 = vmatprep.subr.bf16.mxu0 0
        %1947 = vmatpush1.bf16.msra.mxu0 0
        %1948 = vmatprep.subr.bf16.mxu0 0
        %1949 = vmatpush1.bf16.msra.mxu0 0
        %1950 = vmatprep.subr.bf16.mxu0 0
        %1951 = vmatpush1.bf16.msra.mxu0 0
        %1952 = vmatprep.subr.bf16.mxu0 0
        %1953 = vmatpush1.bf16.msra.mxu0 0
        %1954 = vmatprep.subr.bf16.mxu0 0
        %1955 = vmatpush1.bf16.msra.mxu0 0
        %1956 = vmatprep.mubr.bf16.mxu0 0
        %1957 = vmatmul.mubr.bf16.gmra.mrb[0].mxu0 %v1792
        %v1958 = vpop.f32.mrb[0].mxu0
        %v1959 = vadd.f32 %v1910, %v1958
        %v1960 = vpop.f32.mrb[0].mxu0
        %v1961 = vpop.f32.mrb[0].mxu0
        %v1962 = vpop.f32.mrb[0].mxu0
        %1963 = vdwg.mxu0
        %1964 = vxpose.xlu0.b32.start [1/16] %v1894, 128
        %1965 = vxpose.xlu0.b32.cont [2/16] 0.0, 128
        %1966 = vxpose.xlu0.b32.cont [3/16] 0.0, 128
        %1967 = vxpose.xlu0.b32.cont [4/16] 0.0, 128
        %1968 = vxpose.xlu0.b32.cont [5/16] 0.0, 128
        %1969 = vxpose.xlu0.b32.cont [6/16] 0.0, 128
        %1970 = vxpose.xlu0.b32.cont [7/16] 0.0, 128
        %1971 = vxpose.xlu0.b32.cont [8/16] 0.0, 128
        %1972 = vxpose.xlu0.b32.cont [9/16] 0.0, 128
        %1973 = vxpose.xlu0.b32.cont [10/16] 0.0, 128
        %1974 = vxpose.xlu0.b32.cont [11/16] 0.0, 128
        %1975 = vxpose.xlu0.b32.cont [12/16] 0.0, 128
        %1976 = vxpose.xlu0.b32.cont [13/16] 0.0, 128
        %1977 = vxpose.xlu0.b32.cont [14/16] 0.0, 128
        %1978 = vxpose.xlu0.b32.cont [15/16] 0.0, 128
        %1979 = vxpose.xlu0.b32.end [16/16] 0.0, 128
        %v1980 = vpop.trf.xlu0
        %v1981 = vpop.trf.xlu0
        %v1982 = vpop.trf.xlu0
        %v1983 = vpop.trf.xlu0
        %v1984 = vpop.trf.xlu0
        %v1985 = vpop.trf.xlu0
        %v1986 = vpop.trf.xlu0
        %v1987 = vpop.trf.xlu0
        %v1988 = vpop.trf.xlu0
        %v1989 = vpop.trf.xlu0
        %v1990 = vpop.trf.xlu0
        %v1991 = vpop.trf.xlu0
        %v1992 = vpop.trf.xlu0
        %v1993 = vpop.trf.xlu0
        %v1994 = vpop.trf.xlu0
        %v1995 = vpop.trf.xlu0
        %v1996 = vpack.c.bf16 %v1829, %v1829
        %v1997 = vpack.c.bf16 %v1981, %v1980
        %v1998 = vpack.c.bf16 %v1983, %v1982
        %v1999 = vpack.c.bf16 %v1959, %v1959
        %v2001 = vsel %vm1009, %v1996, 0
        %v2004 = vsel %vm1013, %v1997, 0
        %2006 = vmatprep.subr.bf16.mxu0 0
        %2007 = vmatpush1.bf16.msra.mxu0 %v2004
        %2008 = vmatprep.subr.bf16.mxu0 0
        %2009 = vmatpush1.bf16.msra.mxu0 0
        %2010 = vmatprep.subr.bf16.mxu0 0
        %2011 = vmatpush1.bf16.msra.mxu0 0
        %2012 = vmatprep.subr.bf16.mxu0 0
        %2013 = vmatpush1.bf16.msra.mxu0 0
        %2014 = vmatprep.subr.bf16.mxu0 0
        %2015 = vmatpush1.bf16.msra.mxu0 0
        %2016 = vmatprep.subr.bf16.mxu0 0
        %2017 = vmatpush1.bf16.msra.mxu0 0
        %2018 = vmatprep.subr.bf16.mxu0 0
        %2019 = vmatpush1.bf16.msra.mxu0 0
        %2020 = vmatprep.subr.bf16.mxu0 0
        %2021 = vmatpush1.bf16.msra.mxu0 0
        %2022 = vmatprep.subr.bf16.mxu0 0
        %2023 = vmatpush1.bf16.msra.mxu0 0
        %2024 = vmatprep.subr.bf16.mxu0 0
        %2025 = vmatpush1.bf16.msra.mxu0 0
        %2026 = vmatprep.subr.bf16.mxu0 0
        %2027 = vmatpush1.bf16.msra.mxu0 0
        %2028 = vmatprep.subr.bf16.mxu0 0
        %2029 = vmatpush1.bf16.msra.mxu0 0
        %2030 = vmatprep.subr.bf16.mxu0 0
        %2031 = vmatpush1.bf16.msra.mxu0 0
        %2032 = vmatprep.subr.bf16.mxu0 0
        %2033 = vmatpush1.bf16.msra.mxu0 0
        %2034 = vmatprep.subr.bf16.mxu0 0
        %2035 = vmatpush1.bf16.msra.mxu0 0
        %2036 = vmatprep.subr.bf16.mxu0 0
        %2037 = vmatpush1.bf16.msra.mxu0 0
        %2038 = vmatprep.mubr.bf16.mxu0 0
        %2039 = vmatmul.mubr.bf16.gmra.mrb[0].mxu0 %v2001
        %v2040 = vpop.f32.mrb[0].mxu0
        %v2041 = vadd.f32 0.0, %v2040
        %v2042 = vpop.f32.mrb[0].mxu0
        %v2043 = vpop.f32.mrb[0].mxu0
        %v2044 = vpop.f32.mrb[0].mxu0
        %2045 = vdwg.mxu0
        %2047 = vrot.lane.b32.xlu0 %v1996, 120
        %v2048 = vpop.permute.xlu0 %2047
        %v2050 = vrot.slane %v1997, 4
        %v2052 = vsel %vm1009, %v2048, 0
        %v2055 = vsel %vm1013, %v2050, 0
        %2057 = vmatprep.subr.bf16.mxu0 0
        %2058 = vmatpush1.bf16.msra.mxu0 %v2055
        %2059 = vmatprep.subr.bf16.mxu0 0
        %2060 = vmatpush1.bf16.msra.mxu0 0
        %2061 = vmatprep.subr.bf16.mxu0 0
        %2062 = vmatpush1.bf16.msra.mxu0 0
        %2063 = vmatprep.subr.bf16.mxu0 0
        %2064 = vmatpush1.bf16.msra.mxu0 0
        %2065 = vmatprep.subr.bf16.mxu0 0
        %2066 = vmatpush1.bf16.msra.mxu0 0
        %2067 = vmatprep.subr.bf16.mxu0 0
        %2068 = vmatpush1.bf16.msra.mxu0 0
        %2069 = vmatprep.subr.bf16.mxu0 0
        %2070 = vmatpush1.bf16.msra.mxu0 0
        %2071 = vmatprep.subr.bf16.mxu0 0
        %2072 = vmatpush1.bf16.msra.mxu0 0
        %2073 = vmatprep.subr.bf16.mxu0 0
        %2074 = vmatpush1.bf16.msra.mxu0 0
        %2075 = vmatprep.subr.bf16.mxu0 0
        %2076 = vmatpush1.bf16.msra.mxu0 0
        %2077 = vmatprep.subr.bf16.mxu0 0
        %2078 = vmatpush1.bf16.msra.mxu0 0
        %2079 = vmatprep.subr.bf16.mxu0 0
        %2080 = vmatpush1.bf16.msra.mxu0 0
        %2081 = vmatprep.subr.bf16.mxu0 0
        %2082 = vmatpush1.bf16.msra.mxu0 0
        %2083 = vmatprep.subr.bf16.mxu0 0
        %2084 = vmatpush1.bf16.msra.mxu0 0
        %2085 = vmatprep.subr.bf16.mxu0 0
        %2086 = vmatpush1.bf16.msra.mxu0 0
        %2087 = vmatprep.subr.bf16.mxu0 0
        %2088 = vmatpush1.bf16.msra.mxu0 0
        %2089 = vmatprep.mubr.bf16.mxu0 0
        %2090 = vmatmul.mubr.bf16.gmra.mrb[0].mxu0 %v2052
        %v2091 = vpop.f32.mrb[0].mxu0
        %v2092 = vadd.f32 0.0, %v2091
        %v2093 = vpop.f32.mrb[0].mxu0
        %v2094 = vpop.f32.mrb[0].mxu0
        %v2095 = vpop.f32.mrb[0].mxu0
        %2096 = vdwg.mxu0
        %2097 = vrot.lane.b32.xlu0 %v1996, 112
        %v2098 = vpop.permute.xlu0 %2097
        %v2100 = vsel %vm1009, %v2098, 0
        %v2103 = vsel %vm1013, %v1998, 0
        %2105 = vmatprep.subr.bf16.mxu0 0
        %2106 = vmatpush1.bf16.msra.mxu0 %v2103
        %2107 = vmatprep.subr.bf16.mxu0 0
        %2108 = vmatpush1.bf16.msra.mxu0 0
        %2109 = vmatprep.subr.bf16.mxu0 0
        %2110 = vmatpush1.bf16.msra.mxu0 0
        %2111 = vmatprep.subr.bf16.mxu0 0
        %2112 = vmatpush1.bf16.msra.mxu0 0
        %2113 = vmatprep.subr.bf16.mxu0 0
        %2114 = vmatpush1.bf16.msra.mxu0 0
        %2115 = vmatprep.subr.bf16.mxu0 0
        %2116 = vmatpush1.bf16.msra.mxu0 0
        %2117 = vmatprep.subr.bf16.mxu0 0
        %2118 = vmatpush1.bf16.msra.mxu0 0
        %2119 = vmatprep.subr.bf16.mxu0 0
        %2120 = vmatpush1.bf16.msra.mxu0 0
        %2121 = vmatprep.subr.bf16.mxu0 0
        %2122 = vmatpush1.bf16.msra.mxu0 0
        %2123 = vmatprep.subr.bf16.mxu0 0
        %2124 = vmatpush1.bf16.msra.mxu0 0
        %2125 = vmatprep.subr.bf16.mxu0 0
        %2126 = vmatpush1.bf16.msra.mxu0 0
        %2127 = vmatprep.subr.bf16.mxu0 0
        %2128 = vmatpush1.bf16.msra.mxu0 0
        %2129 = vmatprep.subr.bf16.mxu0 0
        %2130 = vmatpush1.bf16.msra.mxu0 0
        %2131 = vmatprep.subr.bf16.mxu0 0
        %2132 = vmatpush1.bf16.msra.mxu0 0
        %2133 = vmatprep.subr.bf16.mxu0 0
        %2134 = vmatpush1.bf16.msra.mxu0 0
        %2135 = vmatprep.subr.bf16.mxu0 0
        %2136 = vmatpush1.bf16.msra.mxu0 0
        %2137 = vmatprep.mubr.bf16.mxu0 0
        %2138 = vmatmul.mubr.bf16.gmra.mrb[0].mxu0 %v2100
        %v2139 = vpop.f32.mrb[0].mxu0
        %v2140 = vadd.f32 0.0, %v2139
        %v2141 = vpop.f32.mrb[0].mxu0
        %v2142 = vpop.f32.mrb[0].mxu0
        %v2143 = vpop.f32.mrb[0].mxu0
        %2144 = vdwg.mxu0
        %2145 = vrot.lane.b32.xlu0 %v1996, 104
        %v2146 = vpop.permute.xlu0 %2145
        %v2148 = vrot.slane %v1998, 4
        %v2150 = vsel %vm1009, %v2146, 0
        %v2153 = vsel %vm1013, %v2148, 0
        %2155 = vmatprep.subr.bf16.mxu0 0
        %2156 = vmatpush1.bf16.msra.mxu0 %v2153
        %2157 = vmatprep.subr.bf16.mxu0 0
        %2158 = vmatpush1.bf16.msra.mxu0 0
        %2159 = vmatprep.subr.bf16.mxu0 0
        %2160 = vmatpush1.bf16.msra.mxu0 0
        %2161 = vmatprep.subr.bf16.mxu0 0
        %2162 = vmatpush1.bf16.msra.mxu0 0
        %2163 = vmatprep.subr.bf16.mxu0 0
        %2164 = vmatpush1.bf16.msra.mxu0 0
        %2165 = vmatprep.subr.bf16.mxu0 0
        %2166 = vmatpush1.bf16.msra.mxu0 0
        %2167 = vmatprep.subr.bf16.mxu0 0
        %2168 = vmatpush1.bf16.msra.mxu0 0
        %2169 = vmatprep.subr.bf16.mxu0 0
        %2170 = vmatpush1.bf16.msra.mxu0 0
        %2171 = vmatprep.subr.bf16.mxu0 0
        %2172 = vmatpush1.bf16.msra.mxu0 0
        %2173 = vmatprep.subr.bf16.mxu0 0
        %2174 = vmatpush1.bf16.msra.mxu0 0
        %2175 = vmatprep.subr.bf16.mxu0 0
        %2176 = vmatpush1.bf16.msra.mxu0 0
        %2177 = vmatprep.subr.bf16.mxu0 0
        %2178 = vmatpush1.bf16.msra.mxu0 0
        %2179 = vmatprep.subr.bf16.mxu0 0
        %2180 = vmatpush1.bf16.msra.mxu0 0
        %2181 = vmatprep.subr.bf16.mxu0 0
        %2182 = vmatpush1.bf16.msra.mxu0 0
        %2183 = vmatprep.subr.bf16.mxu0 0
        %2184 = vmatpush1.bf16.msra.mxu0 0
        %2185 = vmatprep.subr.bf16.mxu0 0
        %2186 = vmatpush1.bf16.msra.mxu0 0
        %2187 = vmatprep.mubr.bf16.mxu0 0
        %2188 = vmatmul.mubr.bf16.gmra.mrb[0].mxu0 %v2150
        %v2189 = vpop.f32.mrb[0].mxu0
        %v2190 = vadd.f32 0.0, %v2189
        %v2191 = vpop.f32.mrb[0].mxu0
        %v2192 = vpop.f32.mrb[0].mxu0
        %v2193 = vpop.f32.mrb[0].mxu0
        %2194 = vdwg.mxu0
        %v2195 = vmul.f32 %v2041, 0.35355338
        %v2196 = vmul.f32 %v2092, 0.35355338
        %v2197 = vmul.f32 %v2140, 0.35355338
        %v2198 = vmul.f32 %v2190, 0.35355338
        %v2199 = vadd.f32 %v2195, %v1214
        %v2200 = vadd.f32 %v2196, %v1214
        %v2201 = vadd.f32 %v2197, %v1214
        %v2202 = vadd.f32 %v2198, %v1214
        %v2203 = vsel %vm1009, %v2199, -inf
        %2204 = vmax.xlane.f32.xlu0 %v2203
        %v2205 = vpop.xlane.xlu0 %2204
        %v2206 = vsel %vm1009, %v2200, -inf
        %2207 = vmax.xlane.f32.xlu0 %v2206
        %v2208 = vpop.xlane.xlu0 %2207
        %v2209 = vsel %vm1009, %v2201, -inf
        %2210 = vmax.xlane.f32.xlu0 %v2209
        %v2211 = vpop.xlane.xlu0 %2210
        %v2212 = vsel %vm1009, %v2202, -inf
        %2213 = vmax.xlane.f32.xlu0 %v2212
        %v2214 = vpop.xlane.xlu0 %2213
        %v2215 = vsub.f32 %v2199, %v2205
        %v2216 = vsub.f32 %v2200, %v2208
        %v2217 = vsub.f32 %v2201, %v2211
        %v2218 = vsub.f32 %v2202, %v2214
        %v2219 = vmul.f32 %v2215, 1.442695
        %v2220 = vpow.pop %v2219
        %v2221 = vmul.f32 %v2216, 1.442695
        %v2222 = vpow.pop %v2221
        %v2223 = vmul.f32 %v2217, 1.442695
        %v2224 = vpow.pop %v2223
        %v2225 = vmul.f32 %v2218, 1.442695
        %v2226 = vpow.pop %v2225
        %v2227 = vsel %vm1009, %v2220, 0.0
        %2228 = vadd.xlane.f32.xlu0 %v2227
        %v2229 = vpop.xlane.xlu0 %2228
        %v2230 = vsel %vm1009, %v2222, 0.0
        %2231 = vadd.xlane.f32.xlu0 %v2230
        %v2232 = vpop.xlane.xlu0 %2231
        %v2233 = vsel %vm1009, %v2224, 0.0
        %2234 = vadd.xlane.f32.xlu0 %v2233
        %v2235 = vpop.xlane.xlu0 %2234
        %v2236 = vsel %vm1009, %v2226, 0.0
        %2237 = vadd.xlane.f32.xlu0 %v2236
        %v2238 = vpop.xlane.xlu0 %2237
        %v2239 = vrcp.pop %v2229
        %v2240 = vmul.f32 %v2220, %v2239
        %v2241 = vrcp.pop %v2232
        %v2242 = vmul.f32 %v2222, %v2241
        %v2243 = vrcp.pop %v2235
        %v2244 = vmul.f32 %v2224, %v2243
        %v2245 = vrcp.pop %v2238
        %v2246 = vmul.f32 %v2226, %v2245
        %v2247 = vpack.c.bf16 %v2242, %v2240
        %v2248 = vpack.c.bf16 %v2246, %v2244
        %v2250 = vsel %vm1009, %v2247, 0
        %v2253 = vsel %vm1013, %v1999, 0
        %2255 = vmatprep.subr.bf16.mxu0 0
        %2256 = vmatpush1.bf16.msra.mxu0 %v2253
        %2257 = vmatprep.subr.bf16.mxu0 0
        %2258 = vmatpush1.bf16.msra.mxu0 0
        %2259 = vmatprep.subr.bf16.mxu0 0
        %2260 = vmatpush1.bf16.msra.mxu0 0
        %2261 = vmatprep.subr.bf16.mxu0 0
        %2262 = vmatpush1.bf16.msra.mxu0 0
        %2263 = vmatprep.subr.bf16.mxu0 0
        %2264 = vmatpush1.bf16.msra.mxu0 0
        %2265 = vmatprep.subr.bf16.mxu0 0
        %2266 = vmatpush1.bf16.msra.mxu0 0
        %2267 = vmatprep.subr.bf16.mxu0 0
        %2268 = vmatpush1.bf16.msra.mxu0 0
        %2269 = vmatprep.subr.bf16.mxu0 0
        %2270 = vmatpush1.bf16.msra.mxu0 0
        %2271 = vmatprep.subr.bf16.mxu0 0
        %2272 = vmatpush1.bf16.msra.mxu0 0
        %2273 = vmatprep.subr.bf16.mxu0 0
        %2274 = vmatpush1.bf16.msra.mxu0 0
        %2275 = vmatprep.subr.bf16.mxu0 0
        %2276 = vmatpush1.bf16.msra.mxu0 0
        %2277 = vmatprep.subr.bf16.mxu0 0
        %2278 = vmatpush1.bf16.msra.mxu0 0
        %2279 = vmatprep.subr.bf16.mxu0 0
        %2280 = vmatpush1.bf16.msra.mxu0 0
        %2281 = vmatprep.subr.bf16.mxu0 0
        %2282 = vmatpush1.bf16.msra.mxu0 0
        %2283 = vmatprep.subr.bf16.mxu0 0
        %2284 = vmatpush1.bf16.msra.mxu0 0
        %2285 = vmatprep.subr.bf16.mxu0 0
        %2286 = vmatpush1.bf16.msra.mxu0 0
        %2287 = vmatprep.mubr.bf16.mxu0 0
        %2288 = vmatmul.mubr.bf16.gmra.mrb[0].mxu0 %v2250
        %v2289 = vpop.f32.mrb[0].mxu0
        %v2290 = vadd.f32 0.0, %v2289
        %v2291 = vpop.f32.mrb[0].mxu0
        %v2292 = vpop.f32.mrb[0].mxu0
        %v2293 = vpop.f32.mrb[0].mxu0
        %2294 = vdwg.mxu0
        %v2296 = vrot.slane %v2247, 4
        %2298 = vrot.lane.b32.xlu0 %v1999, 120
        %v2299 = vpop.permute.xlu0 %2298
        %v2301 = vsel %vm1009, %v2296, 0
        %v2304 = vsel %vm1013, %v2299, 0
        %2306 = vmatprep.subr.bf16.mxu0 0
        %2307 = vmatpush1.bf16.msra.mxu0 %v2304
        %2308 = vmatprep.subr.bf16.mxu0 0
        %2309 = vmatpush1.bf16.msra.mxu0 0
        %2310 = vmatprep.subr.bf16.mxu0 0
        %2311 = vmatpush1.bf16.msra.mxu0 0
        %2312 = vmatprep.subr.bf16.mxu0 0
        %2313 = vmatpush1.bf16.msra.mxu0 0
        %2314 = vmatprep.subr.bf16.mxu0 0
        %2315 = vmatpush1.bf16.msra.mxu0 0
        %2316 = vmatprep.subr.bf16.mxu0 0
        %2317 = vmatpush1.bf16.msra.mxu0 0
        %2318 = vmatprep.subr.bf16.mxu0 0
        %2319 = vmatpush1.bf16.msra.mxu0 0
        %2320 = vmatprep.subr.bf16.mxu0 0
        %2321 = vmatpush1.bf16.msra.mxu0 0
        %2322 = vmatprep.subr.bf16.mxu0 0
        %2323 = vmatpush1.bf16.msra.mxu0 0
        %2324 = vmatprep.subr.bf16.mxu0 0
        %2325 = vmatpush1.bf16.msra.mxu0 0
        %2326 = vmatprep.subr.bf16.mxu0 0
        %2327 = vmatpush1.bf16.msra.mxu0 0
        %2328 = vmatprep.subr.bf16.mxu0 0
        %2329 = vmatpush1.bf16.msra.mxu0 0
        %2330 = vmatprep.subr.bf16.mxu0 0
        %2331 = vmatpush1.bf16.msra.mxu0 0
        %2332 = vmatprep.subr.bf16.mxu0 0
        %2333 = vmatpush1.bf16.msra.mxu0 0
        %2334 = vmatprep.subr.bf16.mxu0 0
        %2335 = vmatpush1.bf16.msra.mxu0 0
        %2336 = vmatprep.subr.bf16.mxu0 0
        %2337 = vmatpush1.bf16.msra.mxu0 0
        %2338 = vmatprep.mubr.bf16.mxu0 0
        %2339 = vmatmul.mubr.bf16.gmra.mrb[0].mxu0 %v2301
        %v2340 = vpop.f32.mrb[0].mxu0
        %v2341 = vadd.f32 0.0, %v2340
        %v2342 = vpop.f32.mrb[0].mxu0
        %v2343 = vpop.f32.mrb[0].mxu0
        %v2344 = vpop.f32.mrb[0].mxu0
        %2345 = vdwg.mxu0
        %2346 = vrot.lane.b32.xlu0 %v1999, 112
        %v2347 = vpop.permute.xlu0 %2346
        %v2349 = vsel %vm1009, %v2248, 0
        %v2352 = vsel %vm1013, %v2347, 0
        %2354 = vmatprep.subr.bf16.mxu0 0
        %2355 = vmatpush1.bf16.msra.mxu0 %v2352
        %2356 = vmatprep.subr.bf16.mxu0 0
        %2357 = vmatpush1.bf16.msra.mxu0 0
        %2358 = vmatprep.subr.bf16.mxu0 0
        %2359 = vmatpush1.bf16.msra.mxu0 0
        %2360 = vmatprep.subr.bf16.mxu0 0
        %2361 = vmatpush1.bf16.msra.mxu0 0
        %2362 = vmatprep.subr.bf16.mxu0 0
        %2363 = vmatpush1.bf16.msra.mxu0 0
        %2364 = vmatprep.subr.bf16.mxu0 0
        %2365 = vmatpush1.bf16.msra.mxu0 0
        %2366 = vmatprep.subr.bf16.mxu0 0
        %2367 = vmatpush1.bf16.msra.mxu0 0
        %2368 = vmatprep.subr.bf16.mxu0 0
        %2369 = vmatpush1.bf16.msra.mxu0 0
        %2370 = vmatprep.subr.bf16.mxu0 0
        %2371 = vmatpush1.bf16.msra.mxu0 0
        %2372 = vmatprep.subr.bf16.mxu0 0
        %2373 = vmatpush1.bf16.msra.mxu0 0
        %2374 = vmatprep.subr.bf16.mxu0 0
        %2375 = vmatpush1.bf16.msra.mxu0 0
        %2376 = vmatprep.subr.bf16.mxu0 0
        %2377 = vmatpush1.bf16.msra.mxu0 0
        %2378 = vmatprep.subr.bf16.mxu0 0
        %2379 = vmatpush1.bf16.msra.mxu0 0
        %2380 = vmatprep.subr.bf16.mxu0 0
        %2381 = vmatpush1.bf16.msra.mxu0 0
        %2382 = vmatprep.subr.bf16.mxu0 0
        %2383 = vmatpush1.bf16.msra.mxu0 0
        %2384 = vmatprep.subr.bf16.mxu0 0
        %2385 = vmatpush1.bf16.msra.mxu0 0
        %2386 = vmatprep.mubr.bf16.mxu0 0
        %2387 = vmatmul.mubr.bf16.gmra.mrb[0].mxu0 %v2349
        %v2388 = vpop.f32.mrb[0].mxu0
        %v2389 = vadd.f32 0.0, %v2388
        %v2390 = vpop.f32.mrb[0].mxu0
        %v2391 = vpop.f32.mrb[0].mxu0
        %v2392 = vpop.f32.mrb[0].mxu0
        %2393 = vdwg.mxu0
        %v2395 = vrot.slane %v2248, 4
        %2396 = vrot.lane.b32.xlu0 %v1999, 104
        %v2397 = vpop.permute.xlu0 %2396
        %v2399 = vsel %vm1009, %v2395, 0
        %v2402 = vsel %vm1013, %v2397, 0
        %2404 = vmatprep.subr.bf16.mxu0 0
        %2405 = vmatpush1.bf16.msra.mxu0 %v2402
        %2406 = vmatprep.subr.bf16.mxu0 0
        %2407 = vmatpush1.bf16.msra.mxu0 0
        %2408 = vmatprep.subr.bf16.mxu0 0
        %2409 = vmatpush1.bf16.msra.mxu0 0
        %2410 = vmatprep.subr.bf16.mxu0 0
        %2411 = vmatpush1.bf16.msra.mxu0 0
        %2412 = vmatprep.subr.bf16.mxu0 0
        %2413 = vmatpush1.bf16.msra.mxu0 0
        %2414 = vmatprep.subr.bf16.mxu0 0
        %2415 = vmatpush1.bf16.msra.mxu0 0
        %2416 = vmatprep.subr.bf16.mxu0 0
        %2417 = vmatpush1.bf16.msra.mxu0 0
        %2418 = vmatprep.subr.bf16.mxu0 0
        %2419 = vmatpush1.bf16.msra.mxu0 0
        %2420 = vmatprep.subr.bf16.mxu0 0
        %2421 = vmatpush1.bf16.msra.mxu0 0
        %2422 = vmatprep.subr.bf16.mxu0 0
        %2423 = vmatpush1.bf16.msra.mxu0 0
        %2424 = vmatprep.subr.bf16.mxu0 0
        %2425 = vmatpush1.bf16.msra.mxu0 0
        %2426 = vmatprep.subr.bf16.mxu0 0
        %2427 = vmatpush1.bf16.msra.mxu0 0
        %2428 = vmatprep.subr.bf16.mxu0 0
        %2429 = vmatpush1.bf16.msra.mxu0 0
        %2430 = vmatprep.subr.bf16.mxu0 0
        %2431 = vmatpush1.bf16.msra.mxu0 0
        %2432 = vmatprep.subr.bf16.mxu0 0
        %2433 = vmatpush1.bf16.msra.mxu0 0
        %2434 = vmatprep.subr.bf16.mxu0 0
        %2435 = vmatpush1.bf16.msra.mxu0 0
        %2436 = vmatprep.mubr.bf16.mxu0 0
        %2437 = vmatmul.mubr.bf16.gmra.mrb[0].mxu0 %v2399
        %v2438 = vpop.f32.mrb[0].mxu0
        %v2439 = vadd.f32 0.0, %v2438
        %v2440 = vpop.f32.mrb[0].mxu0
        %v2441 = vpop.f32.mrb[0].mxu0
        %v2442 = vpop.f32.mrb[0].mxu0
        %2443 = vdwg.mxu0
        %2445 = vrot.lane.b32.xlu0 %v2341, 8
        %v2446 = vpop.permute.xlu0 %2445
        %2449 = vrot.lane.b32.xlu0 %v2389, 16
        %v2450 = vpop.permute.xlu0 %2449
        %2453 = vrot.lane.b32.xlu0 %v2439, 24
        %v2454 = vpop.permute.xlu0 %2453
        %v2456 = vsel %vm1009, %v2290, %v2446
        %v2457 = vsel %vm1474, %v2456, %v2450
        %v2458 = vsel %vm1476, %v2457, %v2454
        %s2459 = scalar_lea.vmem %s10, 16
        %v2460 = vld [vmem:[%s2459] sm:$0xf]
        %v2461 = vld [vmem:[%s2459 + $0x4] sm:$0xf]
        %v2462 = vld [vmem:[%s2459 + $0x8] sm:$0xf]
        %v2463 = vld [vmem:[%s2459 + $0xc] sm:$0xf]
        %v2464 = vpack.c.bf16 %v2458, %v2458
        %s2465 = scalar_lea.vmem %s11, 1
        %v2466 = vld [vmem:[%s2465] sm:$0x1]
        %v2468 = vlaneseq
        %v2469 = vshrl.u32 %v2468, 7
        %v2470 = vsub.s32 0, %v2469
        %v2471 = vrot.slane %v2466, %v2470
        %v2477 = vunpack.c.l.b16 %v2460
        %v2478 = vunpack.c.l.b16 %v2461
        %v2479 = vunpack.c.l.b16 %v2462
        %v2480 = vunpack.c.l.b16 %v2463
        %v2481 = vpack.c.b16 %v2478, %v2477
        %v2482 = vpack.c.b16 %v2480, %v2479
        %v2486 = vsel %vm750, %v2464, 0
        %2488 = vmatprep.subr.bf16.mxu0 0
        %2489 = vmatpush1.bf16.msra.mxu0 %v2481
        %2490 = vmatprep.subr.bf16.mxu0 0
        %2491 = vmatpush1.bf16.msra.mxu0 %v2482
        %2492 = vmatprep.subr.bf16.mxu0 0
        %2493 = vmatpush1.bf16.msra.mxu0 0
        %2494 = vmatprep.subr.bf16.mxu0 0
        %2495 = vmatpush1.bf16.msra.mxu0 0
        %2496 = vmatprep.subr.bf16.mxu0 0
        %2497 = vmatpush1.bf16.msra.mxu0 0
        %2498 = vmatprep.subr.bf16.mxu0 0
        %2499 = vmatpush1.bf16.msra.mxu0 0
        %2500 = vmatprep.subr.bf16.mxu0 0
        %2501 = vmatpush1.bf16.msra.mxu0 0
        %2502 = vmatprep.subr.bf16.mxu0 0
        %2503 = vmatpush1.bf16.msra.mxu0 0
        %2504 = vmatprep.subr.bf16.mxu0 0
        %2505 = vmatpush1.bf16.msra.mxu0 0
        %2506 = vmatprep.subr.bf16.mxu0 0
        %2507 = vmatpush1.bf16.msra.mxu0 0
        %2508 = vmatprep.subr.bf16.mxu0 0
        %2509 = vmatpush1.bf16.msra.mxu0 0
        %2510 = vmatprep.subr.bf16.mxu0 0
        %2511 = vmatpush1.bf16.msra.mxu0 0
        %2512 = vmatprep.subr.bf16.mxu0 0
        %2513 = vmatpush1.bf16.msra.mxu0 0
        %2514 = vmatprep.subr.bf16.mxu0 0
        %2515 = vmatpush1.bf16.msra.mxu0 0
        %2516 = vmatprep.subr.bf16.mxu0 0
        %2517 = vmatpush1.bf16.msra.mxu0 0
        %2518 = vmatprep.subr.bf16.mxu0 0
        %2519 = vmatpush1.bf16.msra.mxu0 0
        %2520 = vmatprep.mubr.bf16.mxu0 0
        %2521 = vmatmul.mubr.bf16.gmra.mrb[0].mxu0 %v2486
        %v2522 = vpop.f32.mrb[0].mxu0
        %v2523 = vadd.f32 %v2471, %v2522
        %v2524 = vpop.f32.mrb[0].mxu0
        %v2525 = vpop.f32.mrb[0].mxu0
        %v2526 = vpop.f32.mrb[0].mxu0
        %2527 = vdwg.mxu0
        %v2528 = vadd.f32 %v1764, %v2523
        %s2529 = scalar_lea.vmem %s12, 1
        %v2530 = vld [vmem:[%s2529] sm:$0x1]
        %s2531 = scalar_lea.vmem %s13, 1
        %v2532 = vld [vmem:[%s2531] sm:$0x1]
        %v2533 = vsel %vm750, %v2528, 0.0
        %2534 = vadd.xlane.f32.xlu0 %v2533
        %v2535 = vpop.xlane.xlu0 %2534
        %v2536 = vmul.f32 %v2535, %v754
        %v2537 = vsub.f32 %v2528, %v2536
        %v2538 = vmul.f32 %v2537, %v2537
        %v2539 = vsel %vm750, %v2538, 0.0
        %2540 = vadd.xlane.f32.xlu0 %v2539
        %v2541 = vpop.xlane.xlu0 %2540
        %v2542 = vmul.f32 %v2541, %v754
        %v2543 = vadd.f32 %v2542, 1e-12
        %v2544 = vrsqrt.pop %v2543
        %v2545 = vmul.f32 %v2537, %v2544
        %v2547 = vlaneseq
        %v2548 = vshrl.u32 %v2547, 7
        %v2549 = vsub.s32 0, %v2548
        %v2550 = vrot.slane %v2530, %v2549
        %v2552 = vmul.f32 %v2545, %v2550
        %v2554 = vlaneseq
        %v2555 = vshrl.u32 %v2554, 7
        %v2556 = vsub.s32 0, %v2555
        %v2557 = vrot.slane %v2532, %v2556
        %v2559 = vadd.f32 %v2552, %v2557
        %s2560 = scalar_lea.vmem %s14, 16
        %v2561 = vld [vmem:[%s2560] sm:$0xf]
        %v2562 = vld [vmem:[%s2560 + $0x4] sm:$0xf]
        %v2563 = vld [vmem:[%s2560 + $0x8] sm:$0xf]
        %v2564 = vld [vmem:[%s2560 + $0xc] sm:$0xf]
        %v2565 = vpack.c.bf16 %v2559, %v2559
        %s2566 = scalar_lea.vmem %s15, 1
        %v2567 = vld [vmem:[%s2566] sm:$0x1]
        %v2569 = vlaneseq
        %v2570 = vshrl.u32 %v2569, 7
        %v2571 = vsub.s32 0, %v2570
        %v2572 = vrot.slane %v2567, %v2571
        %v2578 = vunpack.c.l.b16 %v2561
        %v2579 = vunpack.c.l.b16 %v2562
        %v2580 = vunpack.c.l.b16 %v2563
        %v2581 = vunpack.c.l.b16 %v2564
        %v2582 = vpack.c.b16 %v2579, %v2578
        %v2583 = vpack.c.b16 %v2581, %v2580
        %v2587 = vsel %vm750, %v2565, 0
        %2589 = vmatprep.subr.bf16.mxu0 0
        %2590 = vmatpush1.bf16.msra.mxu0 %v2582
        %2591 = vmatprep.subr.bf16.mxu0 0
        %2592 = vmatpush1.bf16.msra.mxu0 %v2583
        %2593 = vmatprep.subr.bf16.mxu0 0
        %2594 = vmatpush1.bf16.msra.mxu0 0
        %2595 = vmatprep.subr.bf16.mxu0 0
        %2596 = vmatpush1.bf16.msra.mxu0 0
        %2597 = vmatprep.subr.bf16.mxu0 0
        %2598 = vmatpush1.bf16.msra.mxu0 0
        %2599 = vmatprep.subr.bf16.mxu0 0
        %2600 = vmatpush1.bf16.msra.mxu0 0
        %2601 = vmatprep.subr.bf16.mxu0 0
        %2602 = vmatpush1.bf16.msra.mxu0 0
        %2603 = vmatprep.subr.bf16.mxu0 0
        %2604 = vmatpush1.bf16.msra.mxu0 0
        %2605 = vmatprep.subr.bf16.mxu0 0
        %2606 = vmatpush1.bf16.msra.mxu0 0
        %2607 = vmatprep.subr.bf16.mxu0 0
        %2608 = vmatpush1.bf16.msra.mxu0 0
        %2609 = vmatprep.subr.bf16.mxu0 0
        %2610 = vmatpush1.bf16.msra.mxu0 0
        %2611 = vmatprep.subr.bf16.mxu0 0
        %2612 = vmatpush1.bf16.msra.mxu0 0
        %2613 = vmatprep.subr.bf16.mxu0 0
        %2614 = vmatpush1.bf16.msra.mxu0 0
        %2615 = vmatprep.subr.bf16.mxu0 0
        %2616 = vmatpush1.bf16.msra.mxu0 0
        %2617 = vmatprep.subr.bf16.mxu0 0
        %2618 = vmatpush1.bf16.msra.mxu0 0
        %2619 = vmatprep.subr.bf16.mxu0 0
        %2620 = vmatpush1.bf16.msra.mxu0 0
        %2621 = vmatprep.mubr.bf16.mxu0 0
        %2622 = vmatmul.mubr.bf16.gmra.mrb[0].mxu0 %v2587
        %v2623 = vpop.f32.mrb[0].mxu0
        %v2624 = vadd.f32 %v2572, %v2623
        %v2625 = vpop.f32.mrb[0].mxu0
        %v2626 = vpop.f32.mrb[0].mxu0
        %v2627 = vpop.f32.mrb[0].mxu0
        %2628 = vdwg.mxu0
        %v2629 = vmul.f32 %v2624, 0.5
        %v2630 = vmul.f32 %v2624, 0.044715
        %v2631 = vmul.f32 %v2630, %v2624
        %v2632 = vmul.f32 %v2631, %v2624
        %v2633 = vadd.f32 %v2624, %v2632
        %v2634 = vmul.f32 %v2633, 0.7978846
        %v2635 = vtanh.pop %v2634
        %v2636 = vadd.f32 %v2635, 1.0
        %v2637 = vmul.f32 %v2629, %v2636
        %s2638 = scalar_lea.vmem %s16, 32
        %v2639 = vld [vmem:[%s2638] sm:$0xf]
        %v2640 = vld [vmem:[%s2638 + $0x4] sm:$0xf]
        %v2641 = vld [vmem:[%s2638 + $0x8] sm:$0xf]
        %v2642 = vld [vmem:[%s2638 + $0xc] sm:$0xf]
        %v2643 = vld [vmem:[%s2638 + $0x10] sm:$0xf]
        %v2644 = vld [vmem:[%s2638 + $0x14] sm:$0xf]
        %v2645 = vld [vmem:[%s2638 + $0x18] sm:$0xf]
        %v2646 = vld [vmem:[%s2638 + $0x1c] sm:$0xf]
        %v2647 = vpack.c.bf16 %v2637, %v2637
        %s2648 = scalar_lea.vmem %s17, 1
        %v2649 = vld [vmem:[%s2648] sm:$0x1]
        %v2651 = vlaneseq
        %v2652 = vshrl.u32 %v2651, 7
        %v2653 = vsub.s32 0, %v2652
        %v2654 = vrot.slane %v2649, %v2653
        %v2664 = vunpack.c.l.b16 %v2639
        %v2665 = vunpack.c.l.b16 %v2640
        %v2666 = vunpack.c.l.b16 %v2641
        %v2667 = vunpack.c.l.b16 %v2642
        %v2668 = vunpack.c.l.b16 %v2643
        %v2669 = vunpack.c.l.b16 %v2644
        %v2670 = vunpack.c.l.b16 %v2645
        %v2671 = vunpack.c.l.b16 %v2646
        %v2672 = vpack.c.b16 %v2665, %v2664
        %v2673 = vpack.c.b16 %v2667, %v2666
        %v2674 = vpack.c.b16 %v2669, %v2668
        %v2675 = vpack.c.b16 %v2671, %v2670
        %v2681 = vsel %vm1691, %v2647, 0
        %2683 = vmatprep.subr.bf16.mxu0 0
        %2684 = vmatpush1.bf16.msra.mxu0 %v2672
        %2685 = vmatprep.subr.bf16.mxu0 0
        %2686 = vmatpush1.bf16.msra.mxu0 %v2673
        %2687 = vmatprep.subr.bf16.mxu0 0
        %2688 = vmatpush1.bf16.msra.mxu0 %v2674
        %2689 = vmatprep.subr.bf16.mxu0 0
        %2690 = vmatpush1.bf16.msra.mxu0 %v2675
        %2691 = vmatprep.subr.bf16.mxu0 0
        %2692 = vmatpush1.bf16.msra.mxu0 0
        %2693 = vmatprep.subr.bf16.mxu0 0
        %2694 = vmatpush1.bf16.msra.mxu0 0
        %2695 = vmatprep.subr.bf16.mxu0 0
        %2696 = vmatpush1.bf16.msra.mxu0 0
        %2697 = vmatprep.subr.bf16.mxu0 0
        %2698 = vmatpush1.bf16.msra.mxu0 0
        %2699 = vmatprep.subr.bf16.mxu0 0
        %2700 = vmatpush1.bf16.msra.mxu0 0
        %2701 = vmatprep.subr.bf16.mxu0 0
        %2702 = vmatpush1.bf16.msra.mxu0 0
        %2703 = vmatprep.subr.bf16.mxu0 0
        %2704 = vmatpush1.bf16.msra.mxu0 0
        %2705 = vmatprep.subr.bf16.mxu0 0
        %2706 = vmatpush1.bf16.msra.mxu0 0
        %2707 = vmatprep.subr.bf16.mxu0 0
        %2708 = vmatpush1.bf16.msra.mxu0 0
        %2709 = vmatprep.subr.bf16.mxu0 0
        %2710 = vmatpush1.bf16.msra.mxu0 0
        %2711 = vmatprep.subr.bf16.mxu0 0
        %2712 = vmatpush1.bf16.msra.mxu0 0
        %2713 = vmatprep.subr.bf16.mxu0 0
        %2714 = vmatpush1.bf16.msra.mxu0 0
        %2715 = vmatprep.mubr.bf16.mxu0 0
        %2716 = vmatmul.mubr.bf16.gmra.mrb[0].mxu0 %v2681
        %v2717 = vpop.f32.mrb[0].mxu0
        %v2718 = vadd.f32 %v2654, %v2717
        %v2719 = vpop.f32.mrb[0].mxu0
        %v2720 = vpop.f32.mrb[0].mxu0
        %v2721 = vpop.f32.mrb[0].mxu0
        %2722 = vdwg.mxu0
        %v2723 = vadd.f32 %v2559, %v2718
        %s2724 = scalar_lea.vmem %s18, 1
        %v2725 = vld [vmem:[%s2724] sm:$0x1]
        %s2726 = scalar_lea.vmem %s19, 1
        %v2727 = vld [vmem:[%s2726] sm:$0x1]
        %v2728 = vsel %vm750, %v2723, 0.0
        %2729 = vadd.xlane.f32.xlu0 %v2728
        %v2730 = vpop.xlane.xlu0 %2729
        %v2731 = vmul.f32 %v2730, %v754
        %v2732 = vsub.f32 %v2723, %v2731
        %v2733 = vmul.f32 %v2732, %v2732
        %v2734 = vsel %vm750, %v2733, 0.0
        %2735 = vadd.xlane.f32.xlu0 %v2734
        %v2736 = vpop.xlane.xlu0 %2735
        %v2737 = vmul.f32 %v2736, %v754
        %v2738 = vadd.f32 %v2737, 1e-12
        %v2739 = vrsqrt.pop %v2738
        %v2740 = vmul.f32 %v2732, %v2739
        %v2742 = vlaneseq
        %v2743 = vshrl.u32 %v2742, 7
        %v2744 = vsub.s32 0, %v2743
        %v2745 = vrot.slane %v2725, %v2744
        %v2747 = vmul.f32 %v2740, %v2745
        %v2749 = vlaneseq
        %v2750 = vshrl.u32 %v2749, 7
        %v2751 = vsub.s32 0, %v2750
        %v2752 = vrot.slane %v2727, %v2751
        %v2754 = vadd.f32 %v2747, %v2752
        %v2755 = vld [vmem:[%s20] sm:$0xf]
        %v2756 = vld [vmem:[%s20 + $0x4] sm:$0xf]
        %v2757 = vld [vmem:[%s20 + $0x8] sm:$0xf]
        %v2758 = vld [vmem:[%s20 + $0xc] sm:$0xf]
        %v2759 = vpack.c.bf16 %v2754, %v2754
        %v2760 = vld [vmem:[%s21] sm:$0x1]
        %v2765 = vunpack.c.l.b16 %v2755
        %v2766 = vunpack.c.l.b16 %v2756
        %v2767 = vunpack.c.l.b16 %v2757
        %v2768 = vunpack.c.l.b16 %v2758
        %v2769 = vpack.c.b16 %v2766, %v2765
        %v2770 = vpack.c.b16 %v2768, %v2767
        %v2774 = vsel %vm750, %v2759, 0
        %2776 = vmatprep.subr.bf16.mxu0 0
        %2777 = vmatpush1.bf16.msra.mxu0 %v2769
        %2778 = vmatprep.subr.bf16.mxu0 0
        %2779 = vmatpush1.bf16.msra.mxu0 %v2770
        %2780 = vmatprep.subr.bf16.mxu0 0
        %2781 = vmatpush1.bf16.msra.mxu0 0
        %2782 = vmatprep.subr.bf16.mxu0 0
        %2783 = vmatpush1.bf16.msra.mxu0 0
        %2784 = vmatprep.subr.bf16.mxu0 0
        %2785 = vmatpush1.bf16.msra.mxu0 0
        %2786 = vmatprep.subr.bf16.mxu0 0
        %2787 = vmatpush1.bf16.msra.mxu0 0
        %2788 = vmatprep.subr.bf16.mxu0 0
        %2789 = vmatpush1.bf16.msra.mxu0 0
        %2790 = vmatprep.subr.bf16.mxu0 0
        %2791 = vmatpush1.bf16.msra.mxu0 0
        %2792 = vmatprep.subr.bf16.mxu0 0
        %2793 = vmatpush1.bf16.msra.mxu0 0
        %2794 = vmatprep.subr.bf16.mxu0 0
        %2795 = vmatpush1.bf16.msra.mxu0 0
        %2796 = vmatprep.subr.bf16.mxu0 0
        %2797 = vmatpush1.bf16.msra.mxu0 0
        %2798 = vmatprep.subr.bf16.mxu0 0
        %2799 = vmatpush1.bf16.msra.mxu0 0
        %2800 = vmatprep.subr.bf16.mxu0 0
        %2801 = vmatpush1.bf16.msra.mxu0 0
        %2802 = vmatprep.subr.bf16.mxu0 0
        %2803 = vmatpush1.bf16.msra.mxu0 0
        %2804 = vmatprep.subr.bf16.mxu0 0
        %2805 = vmatpush1.bf16.msra.mxu0 0
        %2806 = vmatprep.subr.bf16.mxu0 0
        %2807 = vmatpush1.bf16.msra.mxu0 0
        %2808 = vmatprep.mubr.bf16.mxu0 0
        %2809 = vmatmul.mubr.bf16.gmra.mrb[0].mxu0 %v2774
        %v2810 = vpop.f32.mrb[0].mxu0
        %v2811 = vadd.f32 %v2760, %v2810
        %v2812 = vpop.f32.mrb[0].mxu0
        %v2813 = vpop.f32.mrb[0].mxu0
        %v2814 = vpop.f32.mrb[0].mxu0
        %2815 = vdwg.mxu0
        %v2816 = vmax.f32 %v2811, 0.0
        %v2817 = vld [vmem:[%s22] sm:$0xf]
        %v2818 = vld [vmem:[%s22 + $0x4] sm:$0xf]
        %v2819 = vpack.c.bf16 %v2816, %v2816
        %v2820 = vld [vmem:[%s23] sm:$0x1]
        %v2823 = vunpack.c.l.b16 %v2817
        %v2824 = vunpack.c.l.b16 %v2818
        %v2825 = vpack.c.b16 %v2824, %v2823
        %v2828 = vsel %vm1474, %v2819, 0
        %2830 = vmatprep.subr.bf16.mxu0 0
        %2831 = vmatpush1.bf16.msra.mxu0 %v2825
        %2832 = vmatprep.subr.bf16.mxu0 0
        %2833 = vmatpush1.bf16.msra.mxu0 0
        %2834 = vmatprep.subr.bf16.mxu0 0
        %2835 = vmatpush1.bf16.msra.mxu0 0
        %2836 = vmatprep.subr.bf16.mxu0 0
        %2837 = vmatpush1.bf16.msra.mxu0 0
        %2838 = vmatprep.subr.bf16.mxu0 0
        %2839 = vmatpush1.bf16.msra.mxu0 0
        %2840 = vmatprep.subr.bf16.mxu0 0
        %2841 = vmatpush1.bf16.msra.mxu0 0
        %2842 = vmatprep.subr.bf16.mxu0 0
        %2843 = vmatpush1.bf16.msra.mxu0 0
        %2844 = vmatprep.subr.bf16.mxu0 0
        %2845 = vmatpush1.bf16.msra.mxu0 0
        %2846 = vmatprep.subr.bf16.mxu0 0
        %2847 = vmatpush1.bf16.msra.mxu0 0
        %2848 = vmatprep.subr.bf16.mxu0 0
        %2849 = vmatpush1.bf16.msra.mxu0 0
        %2850 = vmatprep.subr.bf16.mxu0 0
        %2851 = vmatpush1.bf16.msra.mxu0 0
        %2852 = vmatprep.subr.bf16.mxu0 0
        %2853 = vmatpush1.bf16.msra.mxu0 0
        %2854 = vmatprep.subr.bf16.mxu0 0
        %2855 = vmatpush1.bf16.msra.mxu0 0
        %2856 = vmatprep.subr.bf16.mxu0 0
        %2857 = vmatpush1.bf16.msra.mxu0 0
        %2858 = vmatprep.subr.bf16.mxu0 0
        %2859 = vmatpush1.bf16.msra.mxu0 0
        %2860 = vmatprep.subr.bf16.mxu0 0
        %2861 = vmatpush1.bf16.msra.mxu0 0
        %2862 = vmatprep.mubr.bf16.mxu0 0
        %2863 = vmatmul.mubr.bf16.gmra.mrb[0].mxu0 %v2828
        %v2864 = vpop.f32.mrb[0].mxu0
        %v2865 = vadd.f32 %v2820, %v2864
        %v2866 = vpop.f32.mrb[0].mxu0
        %v2867 = vpop.f32.mrb[0].mxu0
        %v2868 = vpop.f32.mrb[0].mxu0
        %2869 = vdwg.mxu0
        %v2870 = vsub.f32 0.0, %v2865
        %v2871 = vmul.f32 %v2870, 1.442695
        %v2872 = vpow.pop %v2871
        %v2873 = vadd.f32 %v2872, 1.0
        %v2874 = vrcp.pop %v2873
        %v2875 = vmul.f32 1.0, %v2874
        %vm2876 = vcmask 16384
        %2877 = vst.msk [vmem:[%s738] sm:$0x1] %vm2876, %v2875
        %s2878 = sand.u32 %s560, 1
        %s2879 = scalar_lea.sflag [#allocation3], %s2878
        %s2880 = sand.u32 %s560, 1
        %s2881 = scalar_lea.vmem [#allocation2], %s2880
        // Predicated region
        $region117: #{forward.1} parent=115 // pred_check
          %p2882 = pneg %p570
        $region118: #{forward.1} parent=115 // pred_check_branch
          %2884 = sbr.rel (%p2882) target = $region120
        $region119: #{forward.1} parent=115 // pred_region
          %s2886 = ssub.s32 16, 16
          %2887 = vsyncadd %s2879, %s2886
          %s2888 = smul.addr %s38, 16
          %s2889 = scalar_lea.hbm %s24, %s2888
          %s2891 = sshll.u32 %s2881, 4
          %s2892 = int_to_ptr.vmem [resolvable:$true] %s2891
          %2894 = dma.vmem_to_hbm [thread:$0]  %s2892, 16, %s2889, %s2879
        $region120: #{forward.1} parent=115 // pred_fallthru
          _
      $region116: #{forward.1} parent=5 // pred_fallthru
        _
      %p2895 = scmp.le.s32.totalorder 2, %s33
      // Predicated region
      $region121: #{forward.1} parent=5 // pred_check
        %p2896 = pneg %p2895
      $region122: #{forward.1} parent=5 // pred_check_branch
        %2898 = sbr.rel (%p2896) target = $region124
      $region123: #{forward.1} parent=5 // pred_region
        %s2899 = ssub.s32 %s33, 2
        // Predicated region
        $region125: #{forward.1} parent=123 // pred_check
          %p2900 = pneg %p576
        $region126: #{forward.1} parent=123 // pred_check_branch
          %2902 = sbr.rel (%p2900) target = $region128
        $region127: #{forward.1} parent=123 // pred_region
          %s2903 = sand.u32 %s561, 1
          %s2904 = scalar_lea.sflag [#allocation3], %s2903
          %s2905 = sand.u32 %s561, 1
          %s2906 = scalar_lea.vmem [#allocation2], %s2905
          %2907 = dma.done %s2904, 16
        $region128: #{forward.1} parent=123 // pred_fallthru
          _
      $region124: #{forward.1} parent=5 // pred_fallthru
        _
    $region6: #{forward.1} parent=1 // loop_footer
      %s37 = sadd.s32 1, %s33
    $region7: #{forward.1} parent=1 // loop_footer_branch
      %32 = sbr.rel target = $region3
    $region8: #{forward.1} parent=1 // loop_exit
      _
    %2908 = vsyncpa [#allocation3], 1
    %s2909 = scalar_lea.sflag [#allocation3], 1
    %2910 = vsyncpa %s2909, 1

</llo_original>
